<compile_context>
chip_gen: v7x
topology: tpu7x:2x2x1
jax: 0.10.0
libtpu: 0.0.40
codegen_flags: <defaults>
</compile_context>

<pallas_src>
import jax
import jax.numpy as jnp
import numpy as np
from jax import lax
from jax.experimental import pallas as pl
from jax.experimental.pallas import tpu as pltpu


# ----------------------------------------------------------------------------
# Fused kernel: gate * conv  ->  2-layer LSTM   (input is time-major (N,B,C))
# ----------------------------------------------------------------------------
def _fused_kernel(xt_ref, fc1_ref, fc2_ref, c1w_ref, c1b_ref, c2w_ref, c2b_ref,
                  wih0_ref, whh0_ref, b0_ref, w1_ref, b1_ref, out_ref):
    N, B, C = xt_ref.shape
    H = whh0_ref.shape[0]
    BN = N * B
    bf16 = jnp.bfloat16

    x3 = xt_ref[...]                                      # (N, B, C) f32

    # -------- squeeze-excite gate: GAP over N -> FC -> ReLU -> FC -> sigmoid
    pooled = jnp.mean(x3, axis=0)                         # (B, C)
    g = jnp.maximum(
        jnp.dot(pooled, fc1_ref[...], preferred_element_type=jnp.float32), 0.0)
    gate = jax.nn.sigmoid(
        jnp.dot(g, fc2_ref[...], preferred_element_type=jnp.float32))  # (B, C)

    # -------- conv branch on time-major flattened (BN, C) rows (row = t*B+b)
    z = x3.reshape(BN, C)
    row = lax.broadcasted_iota(jnp.int32, (BN, C), 0)
    is_first = row < B                                    # t == 0   (left pad)
    is_last = row >= BN - B                               # t == N-1 (right pad)

    def conv3(v, w_ref, b_ref):
        # y[t] = x[t-1] @ w0 + x[t] @ w1 + x[t+1] @ w2 + b   (zero padding)
        v_prev = jnp.where(is_first, 0.0, pltpu.roll(v, shift=B, axis=0))
        v_next = jnp.where(is_last, 0.0, pltpu.roll(v, shift=BN - B, axis=0))
        acc = (jnp.dot(v_prev.astype(bf16), w_ref[0],
                       preferred_element_type=jnp.float32)
               + jnp.dot(v.astype(bf16), w_ref[1],
                         preferred_element_type=jnp.float32)
               + jnp.dot(v_next.astype(bf16), w_ref[2],
                         preferred_element_type=jnp.float32))
        return acc + b_ref[...]

    y = jnp.maximum(conv3(z, c1w_ref, c1b_ref), 0.0)
    y = jax.nn.sigmoid(conv3(y, c2w_ref, c2b_ref))        # (BN, C) f32

    # Per-batch gate applied to the time-major rows: one broadcast + reshape.
    gate_rows = jnp.broadcast_to(gate[None, :, :], (N, B, C)).reshape(BN, C)
    gated = gate_rows * y                                 # (BN, C) f32

    # -------- 2-layer LSTM, hidden = H, batch_first output (B, N, H)
    # Hoisted layer-0 input projection: one big (BN, C) @ (C, 4H) bf16 matmul
    # off the serial recurrence path.
    xp = (jnp.dot(gated.astype(bf16), wih0_ref[...],
                  preferred_element_type=jnp.float32)
          + b0_ref[...])                                  # (BN, 4H) f32

    whh0 = whh0_ref[...]                                  # (H, 4H)  bf16
    w1 = w1_ref[...]                                      # (2H, 4H) bf16  [wih1; whh1]
    b1 = b1_ref[...]                                      # (1, 4H)  f32

    def gates(gv):                                        # f32 elementwise
        i = jax.nn.sigmoid(gv[:, 0 * H:1 * H])
        f = jax.nn.sigmoid(gv[:, 1 * H:2 * H])
        gg = jnp.tanh(gv[:, 2 * H:3 * H])
        o = jax.nn.sigmoid(gv[:, 3 * H:4 * H])
        return i, f, gg, o

    zero = jnp.zeros((B, H), jnp.float32)
    h0, c0, h1, c1 = zero, zero, zero, zero

    # TODO(synk): nn.LSTM inter-layer dropout (p=0.1) is train-only; eval
    # semantics (no dropout) are implemented here.
    for t in range(N):                                    # fully unrolled
        xt = xp[t * B:(t + 1) * B, :]                     # static slice (B, 4H)

        # layer 0: one bf16 h @ W_hh push on the critical path
        g0 = xt + jnp.dot(h0.astype(bf16), whh0,
                          preferred_element_type=jnp.float32)
        i0, f0, gg0, o0 = gates(g0)
        c0 = f0 * c0 + i0 * gg0
        h0 = o0 * jnp.tanh(c0)

        # layer 1: fused [h0, h1] @ [wih1; whh1] -> one push instead of two
        h01 = jnp.concatenate([h0, h1], axis=1).astype(bf16)   # (B, 2H)
        g1 = jnp.dot(h01, w1, preferred_element_type=jnp.float32) + b1
        i1, f1, gg1, o1 = gates(g1)
        c1 = f1 * c1 + i1 * gg1
        h1 = o1 * jnp.tanh(c1)

        out_ref[:, t, :] = h1                             # one (B,128) store/step


# ----------------------------------------------------------------------------
# Wrapper: one fused call, everything resident in VMEM.
# ----------------------------------------------------------------------------
def channel_attention_forward(x, p):
    B, N, C = x.shape
    H = p["whh0"].shape[0]
    x_t = jnp.transpose(x, (1, 0, 2))                     # (N, B, C) layout plumbing
    vmem = pl.BlockSpec(memory_space=pltpu.MemorySpace.VMEM)
    return pl.pallas_call(
        _fused_kernel,
        out_shape=jax.ShapeDtypeStruct((B, N, H), jnp.float32),
        in_specs=[vmem] * 12,
        out_specs=vmem,
    )(x_t, p["fc1_w"], p["fc2_w"], p["c1_w"], p["c1_b"], p["c2_w"], p["c2_b"],
      p["wih0"], p["whh0"], p["b0"], p["w1"], p["b1"])


# ----------------------------------------------------------------------------
# Deterministic synthetic parameters (shapes follow the PyTorch __init__)
# ----------------------------------------------------------------------------
def init_params(key, C, H=128, reduction=16):
    Cr = max(C // reduction, 1)
    ks = jax.random.split(key, 12)
    scale = 0.1

    def rnd(k, shape, dtype=jnp.float32):
        return (scale * jax.random.normal(k, shape, jnp.float32)).astype(dtype)

    bf16 = jnp.bfloat16
    return dict(
        # fc weights stored transposed (in, out), no bias (matches nn.Linear(bias=False))
        fc1_w=rnd(ks[0], (C, Cr)),
        fc2_w=rnd(ks[1], (Cr, C)),
        # conv weights stored as (kernel_tap, C_in, C_out) in bf16; biases (1, C) f32
        c1_w=rnd(ks[2], (3, C, C), bf16),
        c1_b=rnd(ks[3], (1, C)),
        c2_w=rnd(ks[4], (3, C, C), bf16),
        c2_b=rnd(ks[5], (1, C)),
        # LSTM weights transposed (in, 4H) in bf16; biases = b_ih + b_hh as (1, 4H) f32
        wih0=rnd(ks[6], (C, 4 * H), bf16),
        whh0=rnd(ks[7], (H, 4 * H), bf16),
        b0=rnd(ks[8], (1, 4 * H)),
        w1=rnd(ks[9], (2 * H, 4 * H), bf16),   # fused [wih1; whh1]
        b1=rnd(ks[10], (1, 4 * H)),
    )


# ----------------------------------------------------------------------------
# Pure-JAX f32 reference (same parameters; bf16 weights cast up)
# ----------------------------------------------------------------------------
def reference_forward(x, p):
    B, N, C = x.shape
    H = p["whh0"].shape[0]
    f32 = lambda a: a.astype(jnp.float32)

    pooled = jnp.mean(x, axis=1)                               # (B, C)
    h = jax.nn.relu(pooled @ p["fc1_w"])
    gate = jax.nn.sigmoid(h @ p["fc2_w"])                      # (B, C)

    def conv3(z, w, b):
        w = f32(w)
        zp = jnp.pad(z, ((0, 0), (1, 1), (0, 0)))
        return (jnp.einsum("bnc,cd->bnd", zp[:, :-2], w[0])
                + jnp.einsum("bnc,cd->bnd", zp[:, 1:-1], w[1])
                + jnp.einsum("bnc,cd->bnd", zp[:, 2:], w[2]) + b)

    y = jax.nn.relu(conv3(x, p["c1_w"], p["c1_b"]))
    y = jax.nn.sigmoid(conv3(y, p["c2_w"], p["c2_b"]))
    gated = gate[:, None, :] * y

    wih0, whh0, b0 = f32(p["wih0"]), f32(p["whh0"]), p["b0"]
    w1, b1 = f32(p["w1"]), p["b1"]
    wih1, whh1 = w1[:H], w1[H:]

    def cell(xt, hh, cc, wih, whh, bias):
        g = xt @ wih + hh @ whh + bias
        i, f, gg, o = jnp.split(g, 4, axis=-1)
        cc = jax.nn.sigmoid(f) * cc + jax.nn.sigmoid(i) * jnp.tanh(gg)
        hh = jax.nn.sigmoid(o) * jnp.tanh(cc)
        return hh, cc

    h0 = c0 = h1 = c1 = jnp.zeros((B, H), jnp.float32)
    outs = []
    for t in range(N):
        h0, c0 = cell(gated[:, t, :], h0, c0, wih0, whh0, b0)
        h1, c1 = cell(h0, h1, c1, wih1, whh1, b1)
        outs.append(h1)
    return jnp.stack(outs, axis=1)                             # (B, N, H)


if __name__ == "__main__":
    B, N, C, H = 2, 8, 32, 128
    key = jax.random.PRNGKey(0)
    kx, kp = jax.random.split(key)
    x = jax.random.normal(kx, (B, N, C), jnp.float32)
    params = init_params(kp, C, H)

    out = channel_attention_forward(x, params)
    out = jax.block_until_ready(out)
    assert out.shape == (B, N, H)

    ref = reference_forward(x, params)
    # bf16 MXU operands in the kernel (f32 accumulation) -> loosened tolerance.
    np.testing.assert_allclose(np.asarray(out), np.asarray(ref),
                               atol=1e-2, rtol=1e-2)
    print("KERNEL_OK")
</pallas_src>

<mosaic_0001>
module attributes {stable_mosaic.version = 11 : i64} {
  func.func @_fused_kernel(%arg0: memref<8x2x32xf32, #tpu.memory_space<vmem>>, %arg1: memref<32x2xf32, #tpu.memory_space<vmem>>, %arg2: memref<2x32xf32, #tpu.memory_space<vmem>>, %arg3: memref<3x32x32xbf16, #tpu.memory_space<vmem>>, %arg4: memref<1x32xf32, #tpu.memory_space<vmem>>, %arg5: memref<3x32x32xbf16, #tpu.memory_space<vmem>>, %arg6: memref<1x32xf32, #tpu.memory_space<vmem>>, %arg7: memref<32x512xbf16, #tpu.memory_space<vmem>>, %arg8: memref<128x512xbf16, #tpu.memory_space<vmem>>, %arg9: memref<1x512xf32, #tpu.memory_space<vmem>>, %arg10: memref<256x512xbf16, #tpu.memory_space<vmem>>, %arg11: memref<1x512xf32, #tpu.memory_space<vmem>>, %arg12: memref<2x8x128xf32, #tpu.memory_space<vmem>>) attributes {dimension_semantics = [], scalar_prefetch = 0 : i64, scratch_operands = 0 : i64, tpu.core_type = #tpu.core_type<tc>} {
    %c0 = arith.constant 0 : index
    %c0_0 = arith.constant 0 : index
    %c0_1 = arith.constant 0 : index
    %0 = vector.load %arg0[%c0, %c0_0, %c0_1] : memref<8x2x32xf32, #tpu.memory_space<vmem>>, vector<8x2x32xf32>
    %cst = arith.constant dense<0.000000e+00> : vector<2x32xf32>
    %1 = vector.multi_reduction <add>, %0, %cst [0] : vector<8x2x32xf32> to vector<2x32xf32>
    %cst_2 = arith.constant 8.000000e+00 : f32
    %2 = vector.broadcast %cst_2 : f32 to vector<2x32xf32>
    %3 = arith.divf %1, %2 : vector<2x32xf32>
    %c0_3 = arith.constant 0 : index
    %c0_4 = arith.constant 0 : index
    %4 = vector.load %arg1[%c0_3, %c0_4] : memref<32x2xf32, #tpu.memory_space<vmem>>, vector<32x2xf32>
    %cst_5 = arith.constant dense<0.000000e+00> : vector<2x2xf32>
    %5 = tpu.matmul %3, %4, %cst_5 {dimension_numbers = #tpu.dot_dimension_numbers<[1], [0], [0], [1], [0, 0, 1, 1], [], []>} : vector<2x32xf32>, vector<32x2xf32>, vector<2x2xf32> -> vector<2x2xf32>
    %cst_6 = arith.constant 0.000000e+00 : f32
    %6 = vector.broadcast %cst_6 : f32 to vector<2x2xf32>
    %7 = arith.maximumf %5, %6 : vector<2x2xf32>
    %c0_7 = arith.constant 0 : index
    %c0_8 = arith.constant 0 : index
    %8 = vector.load %arg2[%c0_7, %c0_8] : memref<2x32xf32, #tpu.memory_space<vmem>>, vector<2x32xf32>
    %cst_9 = arith.constant dense<0.000000e+00> : vector<2x32xf32>
    %9 = tpu.matmul %7, %8, %cst_9 {dimension_numbers = #tpu.dot_dimension_numbers<[1], [0], [0], [1], [0, 0, 1, 1], [], []>} : vector<2x2xf32>, vector<2x32xf32>, vector<2x32xf32> -> vector<2x32xf32>
    %10 = arith.negf %9 : vector<2x32xf32>
    %11 = math.exp %10 : vector<2x32xf32>
    %cst_10 = arith.constant 1.000000e+00 : f32
    %12 = vector.broadcast %cst_10 : f32 to vector<2x32xf32>
    %13 = arith.addf %12, %11 : vector<2x32xf32>
    %14 = arith.divf %12, %13 : vector<2x32xf32>
    %15 = vector.shape_cast %0 : vector<8x2x32xf32> to vector<16x32xf32>
    %16 = tpu.iota {dimensions = array<i32: 0>} : vector<16x32xi32>
    %c2_i32 = arith.constant 2 : i32
    %17 = vector.broadcast %c2_i32 : i32 to vector<16x32xi32>
    %18 = arith.cmpi slt, %16, %17 : vector<16x32xi32>
    %c14_i32 = arith.constant 14 : i32
    %19 = vector.broadcast %c14_i32 : i32 to vector<16x32xi32>
    %20 = arith.cmpi sge, %16, %19 : vector<16x32xi32>
    %c2_i32_11 = arith.constant 2 : i32
    %21 = tpu.dynamic_rotate %15 by %c2_i32_11 dim 0 : vector<16x32xf32>, i32 -> vector<16x32xf32>
    %cst_12 = arith.constant 0.000000e+00 : f32
    %22 = vector.broadcast %cst_12 : f32 to vector<16x32xf32>
    %23 = arith.select %18, %22, %21 : vector<16x32xi1>, vector<16x32xf32>
    %c14_i32_13 = arith.constant 14 : i32
    %24 = tpu.dynamic_rotate %15 by %c14_i32_13 dim 0 : vector<16x32xf32>, i32 -> vector<16x32xf32>
    %cst_14 = arith.constant 0.000000e+00 : f32
    %25 = vector.broadcast %cst_14 : f32 to vector<16x32xf32>
    %26 = arith.select %20, %25, %24 : vector<16x32xi1>, vector<16x32xf32>
    %27 = arith.truncf %23 : vector<16x32xf32> to vector<16x32xbf16>
    %c0_15 = arith.constant 0 : index
    %c0_16 = arith.constant 0 : index
    %c0_17 = arith.constant 0 : index
    %28 = vector.load %arg3[%c0_15, %c0_16, %c0_17] : memref<3x32x32xbf16, #tpu.memory_space<vmem>>, vector<1x32x32xbf16>
    %29 = vector.shape_cast %28 : vector<1x32x32xbf16> to vector<32x32xbf16>
    %cst_18 = arith.constant dense<0.000000e+00> : vector<16x32xf32>
    %30 = tpu.matmul %27, %29, %cst_18 {dimension_numbers = #tpu.dot_dimension_numbers<[1], [0], [0], [1], [0, 0, 1, 1], [], []>} : vector<16x32xbf16>, vector<32x32xbf16>, vector<16x32xf32> -> vector<16x32xf32>
    %31 = arith.truncf %15 : vector<16x32xf32> to vector<16x32xbf16>
    %c1 = arith.constant 1 : index
    %c0_19 = arith.constant 0 : index
    %c0_20 = arith.constant 0 : index
    %32 = vector.load %arg3[%c1, %c0_19, %c0_20] : memref<3x32x32xbf16, #tpu.memory_space<vmem>>, vector<1x32x32xbf16>
    %33 = vector.shape_cast %32 : vector<1x32x32xbf16> to vector<32x32xbf16>
    %cst_21 = arith.constant dense<0.000000e+00> : vector<16x32xf32>
    %34 = tpu.matmul %31, %33, %cst_21 {dimension_numbers = #tpu.dot_dimension_numbers<[1], [0], [0], [1], [0, 0, 1, 1], [], []>} : vector<16x32xbf16>, vector<32x32xbf16>, vector<16x32xf32> -> vector<16x32xf32>
    %35 = arith.addf %30, %34 : vector<16x32xf32>
    %36 = arith.truncf %26 : vector<16x32xf32> to vector<16x32xbf16>
    %c2 = arith.constant 2 : index
    %c0_22 = arith.constant 0 : index
    %c0_23 = arith.constant 0 : index
    %37 = vector.load %arg3[%c2, %c0_22, %c0_23] : memref<3x32x32xbf16, #tpu.memory_space<vmem>>, vector<1x32x32xbf16>
    %38 = vector.shape_cast %37 : vector<1x32x32xbf16> to vector<32x32xbf16>
    %cst_24 = arith.constant dense<0.000000e+00> : vector<16x32xf32>
    %39 = tpu.matmul %36, %38, %cst_24 {dimension_numbers = #tpu.dot_dimension_numbers<[1], [0], [0], [1], [0, 0, 1, 1], [], []>} : vector<16x32xbf16>, vector<32x32xbf16>, vector<16x32xf32> -> vector<16x32xf32>
    %40 = arith.addf %35, %39 : vector<16x32xf32>
    %c0_25 = arith.constant 0 : index
    %c0_26 = arith.constant 0 : index
    %41 = vector.load %arg4[%c0_25, %c0_26] : memref<1x32xf32, #tpu.memory_space<vmem>>, vector<1x32xf32>
    %42 = vector.broadcast %41 : vector<1x32xf32> to vector<16x32xf32>
    %43 = arith.addf %40, %42 : vector<16x32xf32>
    %cst_27 = arith.constant 0.000000e+00 : f32
    %44 = vector.broadcast %cst_27 : f32 to vector<16x32xf32>
    %45 = arith.maximumf %43, %44 : vector<16x32xf32>
    %c2_i32_28 = arith.constant 2 : i32
    %46 = tpu.dynamic_rotate %45 by %c2_i32_28 dim 0 : vector<16x32xf32>, i32 -> vector<16x32xf32>
    %cst_29 = arith.constant 0.000000e+00 : f32
    %47 = vector.broadcast %cst_29 : f32 to vector<16x32xf32>
    %48 = arith.select %18, %47, %46 : vector<16x32xi1>, vector<16x32xf32>
    %c14_i32_30 = arith.constant 14 : i32
    %49 = tpu.dynamic_rotate %45 by %c14_i32_30 dim 0 : vector<16x32xf32>, i32 -> vector<16x32xf32>
    %cst_31 = arith.constant 0.000000e+00 : f32
    %50 = vector.broadcast %cst_31 : f32 to vector<16x32xf32>
    %51 = arith.select %20, %50, %49 : vector<16x32xi1>, vector<16x32xf32>
    %52 = arith.truncf %48 : vector<16x32xf32> to vector<16x32xbf16>
    %c0_32 = arith.constant 0 : index
    %c0_33 = arith.constant 0 : index
    %c0_34 = arith.constant 0 : index
    %53 = vector.load %arg5[%c0_32, %c0_33, %c0_34] : memref<3x32x32xbf16, #tpu.memory_space<vmem>>, vector<1x32x32xbf16>
    %54 = vector.shape_cast %53 : vector<1x32x32xbf16> to vector<32x32xbf16>
    %cst_35 = arith.constant dense<0.000000e+00> : vector<16x32xf32>
    %55 = tpu.matmul %52, %54, %cst_35 {dimension_numbers = #tpu.dot_dimension_numbers<[1], [0], [0], [1], [0, 0, 1, 1], [], []>} : vector<16x32xbf16>, vector<32x32xbf16>, vector<16x32xf32> -> vector<16x32xf32>
    %56 = arith.truncf %45 : vector<16x32xf32> to vector<16x32xbf16>
    %c1_36 = arith.constant 1 : index
    %c0_37 = arith.constant 0 : index
    %c0_38 = arith.constant 0 : index
    %57 = vector.load %arg5[%c1_36, %c0_37, %c0_38] : memref<3x32x32xbf16, #tpu.memory_space<vmem>>, vector<1x32x32xbf16>
    %58 = vector.shape_cast %57 : vector<1x32x32xbf16> to vector<32x32xbf16>
    %cst_39 = arith.constant dense<0.000000e+00> : vector<16x32xf32>
    %59 = tpu.matmul %56, %58, %cst_39 {dimension_numbers = #tpu.dot_dimension_numbers<[1], [0], [0], [1], [0, 0, 1, 1], [], []>} : vector<16x32xbf16>, vector<32x32xbf16>, vector<16x32xf32> -> vector<16x32xf32>
    %60 = arith.addf %55, %59 : vector<16x32xf32>
    %61 = arith.truncf %51 : vector<16x32xf32> to vector<16x32xbf16>
    %c2_40 = arith.constant 2 : index
    %c0_41 = arith.constant 0 : index
    %c0_42 = arith.constant 0 : index
    %62 = vector.load %arg5[%c2_40, %c0_41, %c0_42] : memref<3x32x32xbf16, #tpu.memory_space<vmem>>, vector<1x32x32xbf16>
    %63 = vector.shape_cast %62 : vector<1x32x32xbf16> to vector<32x32xbf16>
    %cst_43 = arith.constant dense<0.000000e+00> : vector<16x32xf32>
    %64 = tpu.matmul %61, %63, %cst_43 {dimension_numbers = #tpu.dot_dimension_numbers<[1], [0], [0], [1], [0, 0, 1, 1], [], []>} : vector<16x32xbf16>, vector<32x32xbf16>, vector<16x32xf32> -> vector<16x32xf32>
    %65 = arith.addf %60, %64 : vector<16x32xf32>
    %c0_44 = arith.constant 0 : index
    %c0_45 = arith.constant 0 : index
    %66 = vector.load %arg6[%c0_44, %c0_45] : memref<1x32xf32, #tpu.memory_space<vmem>>, vector<1x32xf32>
    %67 = vector.broadcast %66 : vector<1x32xf32> to vector<16x32xf32>
    %68 = arith.addf %65, %67 : vector<16x32xf32>
    %69 = arith.negf %68 : vector<16x32xf32>
    %70 = math.exp %69 : vector<16x32xf32>
    %cst_46 = arith.constant 1.000000e+00 : f32
    %71 = vector.broadcast %cst_46 : f32 to vector<16x32xf32>
    %72 = arith.addf %71, %70 : vector<16x32xf32>
    %73 = arith.divf %71, %72 : vector<16x32xf32>
    %74 = vector.shape_cast %14 : vector<2x32xf32> to vector<1x2x32xf32>
    %75 = vector.shape_cast %74 : vector<1x2x32xf32> to vector<1x2x32xf32>
    %76 = vector.broadcast %75 : vector<1x2x32xf32> to vector<8x2x32xf32>
    %77 = vector.shape_cast %76 : vector<8x2x32xf32> to vector<16x32xf32>
    %78 = arith.mulf %77, %73 : vector<16x32xf32>
    %79 = arith.truncf %78 : vector<16x32xf32> to vector<16x32xbf16>
    %c0_47 = arith.constant 0 : index
    %c0_48 = arith.constant 0 : index
    %80 = vector.load %arg7[%c0_47, %c0_48] : memref<32x512xbf16, #tpu.memory_space<vmem>>, vector<32x512xbf16>
    %cst_49 = arith.constant dense<0.000000e+00> : vector<16x512xf32>
    %81 = tpu.matmul %79, %80, %cst_49 {dimension_numbers = #tpu.dot_dimension_numbers<[1], [0], [0], [1], [0, 0, 1, 1], [], []>} : vector<16x32xbf16>, vector<32x512xbf16>, vector<16x512xf32> -> vector<16x512xf32>
    %c0_50 = arith.constant 0 : index
    %c0_51 = arith.constant 0 : index
    %82 = vector.load %arg9[%c0_50, %c0_51] : memref<1x512xf32, #tpu.memory_space<vmem>>, vector<1x512xf32>
    %83 = vector.broadcast %82 : vector<1x512xf32> to vector<16x512xf32>
    %84 = arith.addf %81, %83 : vector<16x512xf32>
    %c0_52 = arith.constant 0 : index
    %c0_53 = arith.constant 0 : index
    %85 = vector.load %arg8[%c0_52, %c0_53] : memref<128x512xbf16, #tpu.memory_space<vmem>>, vector<128x512xbf16>
    %c0_54 = arith.constant 0 : index
    %c0_55 = arith.constant 0 : index
    %86 = vector.load %arg10[%c0_54, %c0_55] : memref<256x512xbf16, #tpu.memory_space<vmem>>, vector<256x512xbf16>
    %c0_56 = arith.constant 0 : index
    %c0_57 = arith.constant 0 : index
    %87 = vector.load %arg11[%c0_56, %c0_57] : memref<1x512xf32, #tpu.memory_space<vmem>>, vector<1x512xf32>
    %cst_58 = arith.constant 0.000000e+00 : f32
    %88 = vector.broadcast %cst_58 : f32 to vector<2x128xf32>
    %89 = vector.extract_strided_slice %84 {offsets = [0, 0], sizes = [2, 512], strides = [1, 1]} : vector<16x512xf32> to vector<2x512xf32>
    %90 = arith.truncf %88 : vector<2x128xf32> to vector<2x128xbf16>
    %cst_59 = arith.constant dense<0.000000e+00> : vector<2x512xf32>
    %91 = tpu.matmul %90, %85, %cst_59 {dimension_numbers = #tpu.dot_dimension_numbers<[1], [0], [0], [1], [0, 0, 1, 1], [], []>} : vector<2x128xbf16>, vector<128x512xbf16>, vector<2x512xf32> -> vector<2x512xf32>
    %92 = arith.addf %89, %91 : vector<2x512xf32>
    %93 = vector.extract_strided_slice %92 {offsets = [0, 0], sizes = [2, 128], strides = [1, 1]} : vector<2x512xf32> to vector<2x128xf32>
    %94 = arith.negf %93 : vector<2x128xf32>
    %95 = math.exp %94 : vector<2x128xf32>
    %cst_60 = arith.constant 1.000000e+00 : f32
    %96 = vector.broadcast %cst_60 : f32 to vector<2x128xf32>
    %97 = arith.addf %96, %95 : vector<2x128xf32>
    %98 = arith.divf %96, %97 : vector<2x128xf32>
    %99 = vector.extract_strided_slice %92 {offsets = [0, 128], sizes = [2, 128], strides = [1, 1]} : vector<2x512xf32> to vector<2x128xf32>
    %100 = arith.negf %99 : vector<2x128xf32>
    %101 = math.exp %100 : vector<2x128xf32>
    %cst_61 = arith.constant 1.000000e+00 : f32
    %102 = vector.broadcast %cst_61 : f32 to vector<2x128xf32>
    %103 = arith.addf %102, %101 : vector<2x128xf32>
    %104 = arith.divf %102, %103 : vector<2x128xf32>
    %105 = vector.extract_strided_slice %92 {offsets = [0, 256], sizes = [2, 128], strides = [1, 1]} : vector<2x512xf32> to vector<2x128xf32>
    %106 = math.tanh %105 : vector<2x128xf32>
    %107 = vector.extract_strided_slice %92 {offsets = [0, 384], sizes = [2, 128], strides = [1, 1]} : vector<2x512xf32> to vector<2x128xf32>
    %108 = arith.negf %107 : vector<2x128xf32>
    %109 = math.exp %108 : vector<2x128xf32>
    %cst_62 = arith.constant 1.000000e+00 : f32
    %110 = vector.broadcast %cst_62 : f32 to vector<2x128xf32>
    %111 = arith.addf %110, %109 : vector<2x128xf32>
    %112 = arith.divf %110, %111 : vector<2x128xf32>
    %113 = arith.mulf %104, %88 : vector<2x128xf32>
    %114 = arith.mulf %98, %106 : vector<2x128xf32>
    %115 = arith.addf %113, %114 : vector<2x128xf32>
    %116 = math.tanh %115 : vector<2x128xf32>
    %117 = arith.mulf %112, %116 : vector<2x128xf32>
    %118 = tpu.concatenate %117, %88 in 1 : vector<2x128xf32>, vector<2x128xf32> -> vector<2x256xf32>
    %119 = arith.truncf %118 : vector<2x256xf32> to vector<2x256xbf16>
    %cst_63 = arith.constant dense<0.000000e+00> : vector<2x512xf32>
    %120 = tpu.matmul %119, %86, %cst_63 {dimension_numbers = #tpu.dot_dimension_numbers<[1], [0], [0], [1], [0, 0, 1, 1], [], []>} : vector<2x256xbf16>, vector<256x512xbf16>, vector<2x512xf32> -> vector<2x512xf32>
    %121 = vector.broadcast %87 : vector<1x512xf32> to vector<2x512xf32>
    %122 = arith.addf %120, %121 : vector<2x512xf32>
    %123 = vector.extract_strided_slice %122 {offsets = [0, 0], sizes = [2, 128], strides = [1, 1]} : vector<2x512xf32> to vector<2x128xf32>
    %124 = arith.negf %123 : vector<2x128xf32>
    %125 = math.exp %124 : vector<2x128xf32>
    %cst_64 = arith.constant 1.000000e+00 : f32
    %126 = vector.broadcast %cst_64 : f32 to vector<2x128xf32>
    %127 = arith.addf %126, %125 : vector<2x128xf32>
    %128 = arith.divf %126, %127 : vector<2x128xf32>
    %129 = vector.extract_strided_slice %122 {offsets = [0, 128], sizes = [2, 128], strides = [1, 1]} : vector<2x512xf32> to vector<2x128xf32>
    %130 = arith.negf %129 : vector<2x128xf32>
    %131 = math.exp %130 : vector<2x128xf32>
    %cst_65 = arith.constant 1.000000e+00 : f32
    %132 = vector.broadcast %cst_65 : f32 to vector<2x128xf32>
    %133 = arith.addf %132, %131 : vector<2x128xf32>
    %134 = arith.divf %132, %133 : vector<2x128xf32>
    %135 = vector.extract_strided_slice %122 {offsets = [0, 256], sizes = [2, 128], strides = [1, 1]} : vector<2x512xf32> to vector<2x128xf32>
    %136 = math.tanh %135 : vector<2x128xf32>
    %137 = vector.extract_strided_slice %122 {offsets = [0, 384], sizes = [2, 128], strides = [1, 1]} : vector<2x512xf32> to vector<2x128xf32>
    %138 = arith.negf %137 : vector<2x128xf32>
    %139 = math.exp %138 : vector<2x128xf32>
    %cst_66 = arith.constant 1.000000e+00 : f32
    %140 = vector.broadcast %cst_66 : f32 to vector<2x128xf32>
    %141 = arith.addf %140, %139 : vector<2x128xf32>
    %142 = arith.divf %140, %141 : vector<2x128xf32>
    %143 = arith.mulf %134, %88 : vector<2x128xf32>
    %144 = arith.mulf %128, %136 : vector<2x128xf32>
    %145 = arith.addf %143, %144 : vector<2x128xf32>
    %146 = math.tanh %145 : vector<2x128xf32>
    %147 = arith.mulf %142, %146 : vector<2x128xf32>
    %c0_67 = arith.constant 0 : index
    %c0_68 = arith.constant 0 : index
    %c0_69 = arith.constant 0 : index
    %148 = vector.load %arg12[%c0_67, %c0_68, %c0_69] : memref<2x8x128xf32, #tpu.memory_space<vmem>>, vector<2x1x128xf32>
    %149 = vector.shape_cast %148 : vector<2x1x128xf32> to vector<2x128xf32>
    %150 = vector.shape_cast %147 : vector<2x128xf32> to vector<2x1x128xf32>
    tpu.vector_store %arg12[%c0_67, %c0_68, %c0_69], %150 {strides = array<i32>} : memref<2x8x128xf32, #tpu.memory_space<vmem>>, vector<2x1x128xf32>,
    %151 = vector.extract_strided_slice %84 {offsets = [2, 0], sizes = [2, 512], strides = [1, 1]} : vector<16x512xf32> to vector<2x512xf32>
    %152 = arith.truncf %117 : vector<2x128xf32> to vector<2x128xbf16>
    %cst_70 = arith.constant dense<0.000000e+00> : vector<2x512xf32>
    %153 = tpu.matmul %152, %85, %cst_70 {dimension_numbers = #tpu.dot_dimension_numbers<[1], [0], [0], [1], [0, 0, 1, 1], [], []>} : vector<2x128xbf16>, vector<128x512xbf16>, vector<2x512xf32> -> vector<2x512xf32>
    %154 = arith.addf %151, %153 : vector<2x512xf32>
    %155 = vector.extract_strided_slice %154 {offsets = [0, 0], sizes = [2, 128], strides = [1, 1]} : vector<2x512xf32> to vector<2x128xf32>
    %156 = arith.negf %155 : vector<2x128xf32>
    %157 = math.exp %156 : vector<2x128xf32>
    %cst_71 = arith.constant 1.000000e+00 : f32
    %158 = vector.broadcast %cst_71 : f32 to vector<2x128xf32>
    %159 = arith.addf %158, %157 : vector<2x128xf32>
    %160 = arith.divf %158, %159 : vector<2x128xf32>
    %161 = vector.extract_strided_slice %154 {offsets = [0, 128], sizes = [2, 128], strides = [1, 1]} : vector<2x512xf32> to vector<2x128xf32>
    %162 = arith.negf %161 : vector<2x128xf32>
    %163 = math.exp %162 : vector<2x128xf32>
    %cst_72 = arith.constant 1.000000e+00 : f32
    %164 = vector.broadcast %cst_72 : f32 to vector<2x128xf32>
    %165 = arith.addf %164, %163 : vector<2x128xf32>
    %166 = arith.divf %164, %165 : vector<2x128xf32>
    %167 = vector.extract_strided_slice %154 {offsets = [0, 256], sizes = [2, 128], strides = [1, 1]} : vector<2x512xf32> to vector<2x128xf32>
    %168 = math.tanh %167 : vector<2x128xf32>
    %169 = vector.extract_strided_slice %154 {offsets = [0, 384], sizes = [2, 128], strides = [1, 1]} : vector<2x512xf32> to vector<2x128xf32>
    %170 = arith.negf %169 : vector<2x128xf32>
    %171 = math.exp %170 : vector<2x128xf32>
    %cst_73 = arith.constant 1.000000e+00 : f32
    %172 = vector.broadcast %cst_73 : f32 to vector<2x128xf32>
    %173 = arith.addf %172, %171 : vector<2x128xf32>
    %174 = arith.divf %172, %173 : vector<2x128xf32>
    %175 = arith.mulf %166, %115 : vector<2x128xf32>
    %176 = arith.mulf %160, %168 : vector<2x128xf32>
    %177 = arith.addf %175, %176 : vector<2x128xf32>
    %178 = math.tanh %177 : vector<2x128xf32>
    %179 = arith.mulf %174, %178 : vector<2x128xf32>
    %180 = tpu.concatenate %179, %147 in 1 : vector<2x128xf32>, vector<2x128xf32> -> vector<2x256xf32>
    %181 = arith.truncf %180 : vector<2x256xf32> to vector<2x256xbf16>
    %cst_74 = arith.constant dense<0.000000e+00> : vector<2x512xf32>
    %182 = tpu.matmul %181, %86, %cst_74 {dimension_numbers = #tpu.dot_dimension_numbers<[1], [0], [0], [1], [0, 0, 1, 1], [], []>} : vector<2x256xbf16>, vector<256x512xbf16>, vector<2x512xf32> -> vector<2x512xf32>
    %183 = vector.broadcast %87 : vector<1x512xf32> to vector<2x512xf32>
    %184 = arith.addf %182, %183 : vector<2x512xf32>
    %185 = vector.extract_strided_slice %184 {offsets = [0, 0], sizes = [2, 128], strides = [1, 1]} : vector<2x512xf32> to vector<2x128xf32>
    %186 = arith.negf %185 : vector<2x128xf32>
    %187 = math.exp %186 : vector<2x128xf32>
    %cst_75 = arith.constant 1.000000e+00 : f32
    %188 = vector.broadcast %cst_75 : f32 to vector<2x128xf32>
    %189 = arith.addf %188, %187 : vector<2x128xf32>
    %190 = arith.divf %188, %189 : vector<2x128xf32>
    %191 = vector.extract_strided_slice %184 {offsets = [0, 128], sizes = [2, 128], strides = [1, 1]} : vector<2x512xf32> to vector<2x128xf32>
    %192 = arith.negf %191 : vector<2x128xf32>
    %193 = math.exp %192 : vector<2x128xf32>
    %cst_76 = arith.constant 1.000000e+00 : f32
    %194 = vector.broadcast %cst_76 : f32 to vector<2x128xf32>
    %195 = arith.addf %194, %193 : vector<2x128xf32>
    %196 = arith.divf %194, %195 : vector<2x128xf32>
    %197 = vector.extract_strided_slice %184 {offsets = [0, 256], sizes = [2, 128], strides = [1, 1]} : vector<2x512xf32> to vector<2x128xf32>
    %198 = math.tanh %197 : vector<2x128xf32>
    %199 = vector.extract_strided_slice %184 {offsets = [0, 384], sizes = [2, 128], strides = [1, 1]} : vector<2x512xf32> to vector<2x128xf32>
    %200 = arith.negf %199 : vector<2x128xf32>
    %201 = math.exp %200 : vector<2x128xf32>
    %cst_77 = arith.constant 1.000000e+00 : f32
    %202 = vector.broadcast %cst_77 : f32 to vector<2x128xf32>
    %203 = arith.addf %202, %201 : vector<2x128xf32>
    %204 = arith.divf %202, %203 : vector<2x128xf32>
    %205 = arith.mulf %196, %145 : vector<2x128xf32>
    %206 = arith.mulf %190, %198 : vector<2x128xf32>
    %207 = arith.addf %205, %206 : vector<2x128xf32>
    %208 = math.tanh %207 : vector<2x128xf32>
    %209 = arith.mulf %204, %208 : vector<2x128xf32>
    %c0_78 = arith.constant 0 : index
    %c1_79 = arith.constant 1 : index
    %c0_80 = arith.constant 0 : index
    %210 = vector.load %arg12[%c0_78, %c1_79, %c0_80] : memref<2x8x128xf32, #tpu.memory_space<vmem>>, vector<2x1x128xf32>
    %211 = vector.shape_cast %210 : vector<2x1x128xf32> to vector<2x128xf32>
    %212 = vector.shape_cast %209 : vector<2x128xf32> to vector<2x1x128xf32>
    tpu.vector_store %arg12[%c0_78, %c1_79, %c0_80], %212 {strides = array<i32>} : memref<2x8x128xf32, #tpu.memory_space<vmem>>, vector<2x1x128xf32>,
    %213 = vector.extract_strided_slice %84 {offsets = [4, 0], sizes = [2, 512], strides = [1, 1]} : vector<16x512xf32> to vector<2x512xf32>
    %214 = arith.truncf %179 : vector<2x128xf32> to vector<2x128xbf16>
    %cst_81 = arith.constant dense<0.000000e+00> : vector<2x512xf32>
    %215 = tpu.matmul %214, %85, %cst_81 {dimension_numbers = #tpu.dot_dimension_numbers<[1], [0], [0], [1], [0, 0, 1, 1], [], []>} : vector<2x128xbf16>, vector<128x512xbf16>, vector<2x512xf32> -> vector<2x512xf32>
    %216 = arith.addf %213, %215 : vector<2x512xf32>
    %217 = vector.extract_strided_slice %216 {offsets = [0, 0], sizes = [2, 128], strides = [1, 1]} : vector<2x512xf32> to vector<2x128xf32>
    %218 = arith.negf %217 : vector<2x128xf32>
    %219 = math.exp %218 : vector<2x128xf32>
    %cst_82 = arith.constant 1.000000e+00 : f32
    %220 = vector.broadcast %cst_82 : f32 to vector<2x128xf32>
    %221 = arith.addf %220, %219 : vector<2x128xf32>
    %222 = arith.divf %220, %221 : vector<2x128xf32>
    %223 = vector.extract_strided_slice %216 {offsets = [0, 128], sizes = [2, 128], strides = [1, 1]} : vector<2x512xf32> to vector<2x128xf32>
    %224 = arith.negf %223 : vector<2x128xf32>
    %225 = math.exp %224 : vector<2x128xf32>
    %cst_83 = arith.constant 1.000000e+00 : f32
    %226 = vector.broadcast %cst_83 : f32 to vector<2x128xf32>
    %227 = arith.addf %226, %225 : vector<2x128xf32>
    %228 = arith.divf %226, %227 : vector<2x128xf32>
    %229 = vector.extract_strided_slice %216 {offsets = [0, 256], sizes = [2, 128], strides = [1, 1]} : vector<2x512xf32> to vector<2x128xf32>
    %230 = math.tanh %229 : vector<2x128xf32>
    %231 = vector.extract_strided_slice %216 {offsets = [0, 384], sizes = [2, 128], strides = [1, 1]} : vector<2x512xf32> to vector<2x128xf32>
    %232 = arith.negf %231 : vector<2x128xf32>
    %233 = math.exp %232 : vector<2x128xf32>
    %cst_84 = arith.constant 1.000000e+00 : f32
    %234 = vector.broadcast %cst_84 : f32 to vector<2x128xf32>
    %235 = arith.addf %234, %233 : vector<2x128xf32>
    %236 = arith.divf %234, %235 : vector<2x128xf32>
    %237 = arith.mulf %228, %177 : vector<2x128xf32>
    %238 = arith.mulf %222, %230 : vector<2x128xf32>
    %239 = arith.addf %237, %238 : vector<2x128xf32>
    %240 = math.tanh %239 : vector<2x128xf32>
    %241 = arith.mulf %236, %240 : vector<2x128xf32>
    %242 = tpu.concatenate %241, %209 in 1 : vector<2x128xf32>, vector<2x128xf32> -> vector<2x256xf32>
    %243 = arith.truncf %242 : vector<2x256xf32> to vector<2x256xbf16>
    %cst_85 = arith.constant dense<0.000000e+00> : vector<2x512xf32>
    %244 = tpu.matmul %243, %86, %cst_85 {dimension_numbers = #tpu.dot_dimension_numbers<[1], [0], [0], [1], [0, 0, 1, 1], [], []>} : vector<2x256xbf16>, vector<256x512xbf16>, vector<2x512xf32> -> vector<2x512xf32>
    %245 = vector.broadcast %87 : vector<1x512xf32> to vector<2x512xf32>
    %246 = arith.addf %244, %245 : vector<2x512xf32>
    %247 = vector.extract_strided_slice %246 {offsets = [0, 0], sizes = [2, 128], strides = [1, 1]} : vector<2x512xf32> to vector<2x128xf32>
    %248 = arith.negf %247 : vector<2x128xf32>
    %249 = math.exp %248 : vector<2x128xf32>
    %cst_86 = arith.constant 1.000000e+00 : f32
    %250 = vector.broadcast %cst_86 : f32 to vector<2x128xf32>
    %251 = arith.addf %250, %249 : vector<2x128xf32>
    %252 = arith.divf %250, %251 : vector<2x128xf32>
    %253 = vector.extract_strided_slice %246 {offsets = [0, 128], sizes = [2, 128], strides = [1, 1]} : vector<2x512xf32> to vector<2x128xf32>
    %254 = arith.negf %253 : vector<2x128xf32>
    %255 = math.exp %254 : vector<2x128xf32>
    %cst_87 = arith.constant 1.000000e+00 : f32
    %256 = vector.broadcast %cst_87 : f32 to vector<2x128xf32>
    %257 = arith.addf %256, %255 : vector<2x128xf32>
    %258 = arith.divf %256, %257 : vector<2x128xf32>
    %259 = vector.extract_strided_slice %246 {offsets = [0, 256], sizes = [2, 128], strides = [1, 1]} : vector<2x512xf32> to vector<2x128xf32>
    %260 = math.tanh %259 : vector<2x128xf32>
    %261 = vector.extract_strided_slice %246 {offsets = [0, 384], sizes = [2, 128], strides = [1, 1]} : vector<2x512xf32> to vector<2x128xf32>
    %262 = arith.negf %261 : vector<2x128xf32>
    %263 = math.exp %262 : vector<2x128xf32>
    %cst_88 = arith.constant 1.000000e+00 : f32
    %264 = vector.broadcast %cst_88 : f32 to vector<2x128xf32>
    %265 = arith.addf %264, %263 : vector<2x128xf32>
    %266 = arith.divf %264, %265 : vector<2x128xf32>
    %267 = arith.mulf %258, %207 : vector<2x128xf32>
    %268 = arith.mulf %252, %260 : vector<2x128xf32>
    %269 = arith.addf %267, %268 : vector<2x128xf32>
    %270 = math.tanh %269 : vector<2x128xf32>
    %271 = arith.mulf %266, %270 : vector<2x128xf32>
    %c0_89 = arith.constant 0 : index
    %c2_90 = arith.constant 2 : index
    %c0_91 = arith.constant 0 : index
    %272 = vector.load %arg12[%c0_89, %c2_90, %c0_91] : memref<2x8x128xf32, #tpu.memory_space<vmem>>, vector<2x1x128xf32>
    %273 = vector.shape_cast %272 : vector<2x1x128xf32> to vector<2x128xf32>
    %274 = vector.shape_cast %271 : vector<2x128xf32> to vector<2x1x128xf32>
    tpu.vector_store %arg12[%c0_89, %c2_90, %c0_91], %274 {strides = array<i32>} : memref<2x8x128xf32, #tpu.memory_space<vmem>>, vector<2x1x128xf32>,
    %275 = vector.extract_strided_slice %84 {offsets = [6, 0], sizes = [2, 512], strides = [1, 1]} : vector<16x512xf32> to vector<2x512xf32>
    %276 = arith.truncf %241 : vector<2x128xf32> to vector<2x128xbf16>
    %cst_92 = arith.constant dense<0.000000e+00> : vector<2x512xf32>
    %277 = tpu.matmul %276, %85, %cst_92 {dimension_numbers = #tpu.dot_dimension_numbers<[1], [0], [0], [1], [0, 0, 1, 1], [], []>} : vector<2x128xbf16>, vector<128x512xbf16>, vector<2x512xf32> -> vector<2x512xf32>
    %278 = arith.addf %275, %277 : vector<2x512xf32>
    %279 = vector.extract_strided_slice %278 {offsets = [0, 0], sizes = [2, 128], strides = [1, 1]} : vector<2x512xf32> to vector<2x128xf32>
    %280 = arith.negf %279 : vector<2x128xf32>
    %281 = math.exp %280 : vector<2x128xf32>
    %cst_93 = arith.constant 1.000000e+00 : f32
    %282 = vector.broadcast %cst_93 : f32 to vector<2x128xf32>
    %283 = arith.addf %282, %281 : vector<2x128xf32>
    %284 = arith.divf %282, %283 : vector<2x128xf32>
    %285 = vector.extract_strided_slice %278 {offsets = [0, 128], sizes = [2, 128], strides = [1, 1]} : vector<2x512xf32> to vector<2x128xf32>
    %286 = arith.negf %285 : vector<2x128xf32>
    %287 = math.exp %286 : vector<2x128xf32>
    %cst_94 = arith.constant 1.000000e+00 : f32
    %288 = vector.broadcast %cst_94 : f32 to vector<2x128xf32>
    %289 = arith.addf %288, %287 : vector<2x128xf32>
    %290 = arith.divf %288, %289 : vector<2x128xf32>
    %291 = vector.extract_strided_slice %278 {offsets = [0, 256], sizes = [2, 128], strides = [1, 1]} : vector<2x512xf32> to vector<2x128xf32>
    %292 = math.tanh %291 : vector<2x128xf32>
    %293 = vector.extract_strided_slice %278 {offsets = [0, 384], sizes = [2, 128], strides = [1, 1]} : vector<2x512xf32> to vector<2x128xf32>
    %294 = arith.negf %293 : vector<2x128xf32>
    %295 = math.exp %294 : vector<2x128xf32>
    %cst_95 = arith.constant 1.000000e+00 : f32
    %296 = vector.broadcast %cst_95 : f32 to vector<2x128xf32>
    %297 = arith.addf %296, %295 : vector<2x128xf32>
    %298 = arith.divf %296, %297 : vector<2x128xf32>
    %299 = arith.mulf %290, %239 : vector<2x128xf32>
    %300 = arith.mulf %284, %292 : vector<2x128xf32>
    %301 = arith.addf %299, %300 : vector<2x128xf32>
    %302 = math.tanh %301 : vector<2x128xf32>
    %303 = arith.mulf %298, %302 : vector<2x128xf32>
    %304 = tpu.concatenate %303, %271 in 1 : vector<2x128xf32>, vector<2x128xf32> -> vector<2x256xf32>
    %305 = arith.truncf %304 : vector<2x256xf32> to vector<2x256xbf16>
    %cst_96 = arith.constant dense<0.000000e+00> : vector<2x512xf32>
    %306 = tpu.matmul %305, %86, %cst_96 {dimension_numbers = #tpu.dot_dimension_numbers<[1], [0], [0], [1], [0, 0, 1, 1], [], []>} : vector<2x256xbf16>, vector<256x512xbf16>, vector<2x512xf32> -> vector<2x512xf32>
    %307 = vector.broadcast %87 : vector<1x512xf32> to vector<2x512xf32>
    %308 = arith.addf %306, %307 : vector<2x512xf32>
    %309 = vector.extract_strided_slice %308 {offsets = [0, 0], sizes = [2, 128], strides = [1, 1]} : vector<2x512xf32> to vector<2x128xf32>
    %310 = arith.negf %309 : vector<2x128xf32>
    %311 = math.exp %310 : vector<2x128xf32>
    %cst_97 = arith.constant 1.000000e+00 : f32
    %312 = vector.broadcast %cst_97 : f32 to vector<2x128xf32>
    %313 = arith.addf %312, %311 : vector<2x128xf32>
    %314 = arith.divf %312, %313 : vector<2x128xf32>
    %315 = vector.extract_strided_slice %308 {offsets = [0, 128], sizes = [2, 128], strides = [1, 1]} : vector<2x512xf32> to vector<2x128xf32>
    %316 = arith.negf %315 : vector<2x128xf32>
    %317 = math.exp %316 : vector<2x128xf32>
    %cst_98 = arith.constant 1.000000e+00 : f32
    %318 = vector.broadcast %cst_98 : f32 to vector<2x128xf32>
    %319 = arith.addf %318, %317 : vector<2x128xf32>
    %320 = arith.divf %318, %319 : vector<2x128xf32>
    %321 = vector.extract_strided_slice %308 {offsets = [0, 256], sizes = [2, 128], strides = [1, 1]} : vector<2x512xf32> to vector<2x128xf32>
    %322 = math.tanh %321 : vector<2x128xf32>
    %323 = vector.extract_strided_slice %308 {offsets = [0, 384], sizes = [2, 128], strides = [1, 1]} : vector<2x512xf32> to vector<2x128xf32>
    %324 = arith.negf %323 : vector<2x128xf32>
    %325 = math.exp %324 : vector<2x128xf32>
    %cst_99 = arith.constant 1.000000e+00 : f32
    %326 = vector.broadcast %cst_99 : f32 to vector<2x128xf32>
    %327 = arith.addf %326, %325 : vector<2x128xf32>
    %328 = arith.divf %326, %327 : vector<2x128xf32>
    %329 = arith.mulf %320, %269 : vector<2x128xf32>
    %330 = arith.mulf %314, %322 : vector<2x128xf32>
    %331 = arith.addf %329, %330 : vector<2x128xf32>
    %332 = math.tanh %331 : vector<2x128xf32>
    %333 = arith.mulf %328, %332 : vector<2x128xf32>
    %c0_100 = arith.constant 0 : index
    %c3 = arith.constant 3 : index
    %c0_101 = arith.constant 0 : index
    %334 = vector.load %arg12[%c0_100, %c3, %c0_101] : memref<2x8x128xf32, #tpu.memory_space<vmem>>, vector<2x1x128xf32>
    %335 = vector.shape_cast %334 : vector<2x1x128xf32> to vector<2x128xf32>
    %336 = vector.shape_cast %333 : vector<2x128xf32> to vector<2x1x128xf32>
    tpu.vector_store %arg12[%c0_100, %c3, %c0_101], %336 {strides = array<i32>} : memref<2x8x128xf32, #tpu.memory_space<vmem>>, vector<2x1x128xf32>,
    %337 = vector.extract_strided_slice %84 {offsets = [8, 0], sizes = [2, 512], strides = [1, 1]} : vector<16x512xf32> to vector<2x512xf32>
    %338 = arith.truncf %303 : vector<2x128xf32> to vector<2x128xbf16>
    %cst_102 = arith.constant dense<0.000000e+00> : vector<2x512xf32>
    %339 = tpu.matmul %338, %85, %cst_102 {dimension_numbers = #tpu.dot_dimension_numbers<[1], [0], [0], [1], [0, 0, 1, 1], [], []>} : vector<2x128xbf16>, vector<128x512xbf16>, vector<2x512xf32> -> vector<2x512xf32>
    %340 = arith.addf %337, %339 : vector<2x512xf32>
    %341 = vector.extract_strided_slice %340 {offsets = [0, 0], sizes = [2, 128], strides = [1, 1]} : vector<2x512xf32> to vector<2x128xf32>
    %342 = arith.negf %341 : vector<2x128xf32>
    %343 = math.exp %342 : vector<2x128xf32>
    %cst_103 = arith.constant 1.000000e+00 : f32
    %344 = vector.broadcast %cst_103 : f32 to vector<2x128xf32>
    %345 = arith.addf %344, %343 : vector<2x128xf32>
    %346 = arith.divf %344, %345 : vector<2x128xf32>
    %347 = vector.extract_strided_slice %340 {offsets = [0, 128], sizes = [2, 128], strides = [1, 1]} : vector<2x512xf32> to vector<2x128xf32>
    %348 = arith.negf %347 : vector<2x128xf32>
    %349 = math.exp %348 : vector<2x128xf32>
    %cst_104 = arith.constant 1.000000e+00 : f32
    %350 = vector.broadcast %cst_104 : f32 to vector<2x128xf32>
    %351 = arith.addf %350, %349 : vector<2x128xf32>
    %352 = arith.divf %350, %351 : vector<2x128xf32>
    %353 = vector.extract_strided_slice %340 {offsets = [0, 256], sizes = [2, 128], strides = [1, 1]} : vector<2x512xf32> to vector<2x128xf32>
    %354 = math.tanh %353 : vector<2x128xf32>
    %355 = vector.extract_strided_slice %340 {offsets = [0, 384], sizes = [2, 128], strides = [1, 1]} : vector<2x512xf32> to vector<2x128xf32>
    %356 = arith.negf %355 : vector<2x128xf32>
    %357 = math.exp %356 : vector<2x128xf32>
    %cst_105 = arith.constant 1.000000e+00 : f32
    %358 = vector.broadcast %cst_105 : f32 to vector<2x128xf32>
    %359 = arith.addf %358, %357 : vector<2x128xf32>
    %360 = arith.divf %358, %359 : vector<2x128xf32>
    %361 = arith.mulf %352, %301 : vector<2x128xf32>
    %362 = arith.mulf %346, %354 : vector<2x128xf32>
    %363 = arith.addf %361, %362 : vector<2x128xf32>
    %364 = math.tanh %363 : vector<2x128xf32>
    %365 = arith.mulf %360, %364 : vector<2x128xf32>
    %366 = tpu.concatenate %365, %333 in 1 : vector<2x128xf32>, vector<2x128xf32> -> vector<2x256xf32>
    %367 = arith.truncf %366 : vector<2x256xf32> to vector<2x256xbf16>
    %cst_106 = arith.constant dense<0.000000e+00> : vector<2x512xf32>
    %368 = tpu.matmul %367, %86, %cst_106 {dimension_numbers = #tpu.dot_dimension_numbers<[1], [0], [0], [1], [0, 0, 1, 1], [], []>} : vector<2x256xbf16>, vector<256x512xbf16>, vector<2x512xf32> -> vector<2x512xf32>
    %369 = vector.broadcast %87 : vector<1x512xf32> to vector<2x512xf32>
    %370 = arith.addf %368, %369 : vector<2x512xf32>
    %371 = vector.extract_strided_slice %370 {offsets = [0, 0], sizes = [2, 128], strides = [1, 1]} : vector<2x512xf32> to vector<2x128xf32>
    %372 = arith.negf %371 : vector<2x128xf32>
    %373 = math.exp %372 : vector<2x128xf32>
    %cst_107 = arith.constant 1.000000e+00 : f32
    %374 = vector.broadcast %cst_107 : f32 to vector<2x128xf32>
    %375 = arith.addf %374, %373 : vector<2x128xf32>
    %376 = arith.divf %374, %375 : vector<2x128xf32>
    %377 = vector.extract_strided_slice %370 {offsets = [0, 128], sizes = [2, 128], strides = [1, 1]} : vector<2x512xf32> to vector<2x128xf32>
    %378 = arith.negf %377 : vector<2x128xf32>
    %379 = math.exp %378 : vector<2x128xf32>
    %cst_108 = arith.constant 1.000000e+00 : f32
    %380 = vector.broadcast %cst_108 : f32 to vector<2x128xf32>
    %381 = arith.addf %380, %379 : vector<2x128xf32>
    %382 = arith.divf %380, %381 : vector<2x128xf32>
    %383 = vector.extract_strided_slice %370 {offsets = [0, 256], sizes = [2, 128], strides = [1, 1]} : vector<2x512xf32> to vector<2x128xf32>
    %384 = math.tanh %383 : vector<2x128xf32>
    %385 = vector.extract_strided_slice %370 {offsets = [0, 384], sizes = [2, 128], strides = [1, 1]} : vector<2x512xf32> to vector<2x128xf32>
    %386 = arith.negf %385 : vector<2x128xf32>
    %387 = math.exp %386 : vector<2x128xf32>
    %cst_109 = arith.constant 1.000000e+00 : f32
    %388 = vector.broadcast %cst_109 : f32 to vector<2x128xf32>
    %389 = arith.addf %388, %387 : vector<2x128xf32>
    %390 = arith.divf %388, %389 : vector<2x128xf32>
    %391 = arith.mulf %382, %331 : vector<2x128xf32>
    %392 = arith.mulf %376, %384 : vector<2x128xf32>
    %393 = arith.addf %391, %392 : vector<2x128xf32>
    %394 = math.tanh %393 : vector<2x128xf32>
    %395 = arith.mulf %390, %394 : vector<2x128xf32>
    %c0_110 = arith.constant 0 : index
    %c4 = arith.constant 4 : index
    %c0_111 = arith.constant 0 : index
    %396 = vector.load %arg12[%c0_110, %c4, %c0_111] : memref<2x8x128xf32, #tpu.memory_space<vmem>>, vector<2x1x128xf32>
    %397 = vector.shape_cast %396 : vector<2x1x128xf32> to vector<2x128xf32>
    %398 = vector.shape_cast %395 : vector<2x128xf32> to vector<2x1x128xf32>
    tpu.vector_store %arg12[%c0_110, %c4, %c0_111], %398 {strides = array<i32>} : memref<2x8x128xf32, #tpu.memory_space<vmem>>, vector<2x1x128xf32>,
    %399 = vector.extract_strided_slice %84 {offsets = [10, 0], sizes = [2, 512], strides = [1, 1]} : vector<16x512xf32> to vector<2x512xf32>
    %400 = arith.truncf %365 : vector<2x128xf32> to vector<2x128xbf16>
    %cst_112 = arith.constant dense<0.000000e+00> : vector<2x512xf32>
    %401 = tpu.matmul %400, %85, %cst_112 {dimension_numbers = #tpu.dot_dimension_numbers<[1], [0], [0], [1], [0, 0, 1, 1], [], []>} : vector<2x128xbf16>, vector<128x512xbf16>, vector<2x512xf32> -> vector<2x512xf32>
    %402 = arith.addf %399, %401 : vector<2x512xf32>
    %403 = vector.extract_strided_slice %402 {offsets = [0, 0], sizes = [2, 128], strides = [1, 1]} : vector<2x512xf32> to vector<2x128xf32>
    %404 = arith.negf %403 : vector<2x128xf32>
    %405 = math.exp %404 : vector<2x128xf32>
    %cst_113 = arith.constant 1.000000e+00 : f32
    %406 = vector.broadcast %cst_113 : f32 to vector<2x128xf32>
    %407 = arith.addf %406, %405 : vector<2x128xf32>
    %408 = arith.divf %406, %407 : vector<2x128xf32>
    %409 = vector.extract_strided_slice %402 {offsets = [0, 128], sizes = [2, 128], strides = [1, 1]} : vector<2x512xf32> to vector<2x128xf32>
    %410 = arith.negf %409 : vector<2x128xf32>
    %411 = math.exp %410 : vector<2x128xf32>
    %cst_114 = arith.constant 1.000000e+00 : f32
    %412 = vector.broadcast %cst_114 : f32 to vector<2x128xf32>
    %413 = arith.addf %412, %411 : vector<2x128xf32>
    %414 = arith.divf %412, %413 : vector<2x128xf32>
    %415 = vector.extract_strided_slice %402 {offsets = [0, 256], sizes = [2, 128], strides = [1, 1]} : vector<2x512xf32> to vector<2x128xf32>
    %416 = math.tanh %415 : vector<2x128xf32>
    %417 = vector.extract_strided_slice %402 {offsets = [0, 384], sizes = [2, 128], strides = [1, 1]} : vector<2x512xf32> to vector<2x128xf32>
    %418 = arith.negf %417 : vector<2x128xf32>
    %419 = math.exp %418 : vector<2x128xf32>
    %cst_115 = arith.constant 1.000000e+00 : f32
    %420 = vector.broadcast %cst_115 : f32 to vector<2x128xf32>
    %421 = arith.addf %420, %419 : vector<2x128xf32>
    %422 = arith.divf %420, %421 : vector<2x128xf32>
    %423 = arith.mulf %414, %363 : vector<2x128xf32>
    %424 = arith.mulf %408, %416 : vector<2x128xf32>
    %425 = arith.addf %423, %424 : vector<2x128xf32>
    %426 = math.tanh %425 : vector<2x128xf32>
    %427 = arith.mulf %422, %426 : vector<2x128xf32>
    %428 = tpu.concatenate %427, %395 in 1 : vector<2x128xf32>, vector<2x128xf32> -> vector<2x256xf32>
    %429 = arith.truncf %428 : vector<2x256xf32> to vector<2x256xbf16>
    %cst_116 = arith.constant dense<0.000000e+00> : vector<2x512xf32>
    %430 = tpu.matmul %429, %86, %cst_116 {dimension_numbers = #tpu.dot_dimension_numbers<[1], [0], [0], [1], [0, 0, 1, 1], [], []>} : vector<2x256xbf16>, vector<256x512xbf16>, vector<2x512xf32> -> vector<2x512xf32>
    %431 = vector.broadcast %87 : vector<1x512xf32> to vector<2x512xf32>
    %432 = arith.addf %430, %431 : vector<2x512xf32>
    %433 = vector.extract_strided_slice %432 {offsets = [0, 0], sizes = [2, 128], strides = [1, 1]} : vector<2x512xf32> to vector<2x128xf32>
    %434 = arith.negf %433 : vector<2x128xf32>
    %435 = math.exp %434 : vector<2x128xf32>
    %cst_117 = arith.constant 1.000000e+00 : f32
    %436 = vector.broadcast %cst_117 : f32 to vector<2x128xf32>
    %437 = arith.addf %436, %435 : vector<2x128xf32>
    %438 = arith.divf %436, %437 : vector<2x128xf32>
    %439 = vector.extract_strided_slice %432 {offsets = [0, 128], sizes = [2, 128], strides = [1, 1]} : vector<2x512xf32> to vector<2x128xf32>
    %440 = arith.negf %439 : vector<2x128xf32>
    %441 = math.exp %440 : vector<2x128xf32>
    %cst_118 = arith.constant 1.000000e+00 : f32
    %442 = vector.broadcast %cst_118 : f32 to vector<2x128xf32>
    %443 = arith.addf %442, %441 : vector<2x128xf32>
    %444 = arith.divf %442, %443 : vector<2x128xf32>
    %445 = vector.extract_strided_slice %432 {offsets = [0, 256], sizes = [2, 128], strides = [1, 1]} : vector<2x512xf32> to vector<2x128xf32>
    %446 = math.tanh %445 : vector<2x128xf32>
    %447 = vector.extract_strided_slice %432 {offsets = [0, 384], sizes = [2, 128], strides = [1, 1]} : vector<2x512xf32> to vector<2x128xf32>
    %448 = arith.negf %447 : vector<2x128xf32>
    %449 = math.exp %448 : vector<2x128xf32>
    %cst_119 = arith.constant 1.000000e+00 : f32
    %450 = vector.broadcast %cst_119 : f32 to vector<2x128xf32>
    %451 = arith.addf %450, %449 : vector<2x128xf32>
    %452 = arith.divf %450, %451 : vector<2x128xf32>
    %453 = arith.mulf %444, %393 : vector<2x128xf32>
    %454 = arith.mulf %438, %446 : vector<2x128xf32>
    %455 = arith.addf %453, %454 : vector<2x128xf32>
    %456 = math.tanh %455 : vector<2x128xf32>
    %457 = arith.mulf %452, %456 : vector<2x128xf32>
    %c0_120 = arith.constant 0 : index
    %c5 = arith.constant 5 : index
    %c0_121 = arith.constant 0 : index
    %458 = vector.load %arg12[%c0_120, %c5, %c0_121] : memref<2x8x128xf32, #tpu.memory_space<vmem>>, vector<2x1x128xf32>
    %459 = vector.shape_cast %458 : vector<2x1x128xf32> to vector<2x128xf32>
    %460 = vector.shape_cast %457 : vector<2x128xf32> to vector<2x1x128xf32>
    tpu.vector_store %arg12[%c0_120, %c5, %c0_121], %460 {strides = array<i32>} : memref<2x8x128xf32, #tpu.memory_space<vmem>>, vector<2x1x128xf32>,
    %461 = vector.extract_strided_slice %84 {offsets = [12, 0], sizes = [2, 512], strides = [1, 1]} : vector<16x512xf32> to vector<2x512xf32>
    %462 = arith.truncf %427 : vector<2x128xf32> to vector<2x128xbf16>
    %cst_122 = arith.constant dense<0.000000e+00> : vector<2x512xf32>
    %463 = tpu.matmul %462, %85, %cst_122 {dimension_numbers = #tpu.dot_dimension_numbers<[1], [0], [0], [1], [0, 0, 1, 1], [], []>} : vector<2x128xbf16>, vector<128x512xbf16>, vector<2x512xf32> -> vector<2x512xf32>
    %464 = arith.addf %461, %463 : vector<2x512xf32>
    %465 = vector.extract_strided_slice %464 {offsets = [0, 0], sizes = [2, 128], strides = [1, 1]} : vector<2x512xf32> to vector<2x128xf32>
    %466 = arith.negf %465 : vector<2x128xf32>
    %467 = math.exp %466 : vector<2x128xf32>
    %cst_123 = arith.constant 1.000000e+00 : f32
    %468 = vector.broadcast %cst_123 : f32 to vector<2x128xf32>
    %469 = arith.addf %468, %467 : vector<2x128xf32>
    %470 = arith.divf %468, %469 : vector<2x128xf32>
    %471 = vector.extract_strided_slice %464 {offsets = [0, 128], sizes = [2, 128], strides = [1, 1]} : vector<2x512xf32> to vector<2x128xf32>
    %472 = arith.negf %471 : vector<2x128xf32>
    %473 = math.exp %472 : vector<2x128xf32>
    %cst_124 = arith.constant 1.000000e+00 : f32
    %474 = vector.broadcast %cst_124 : f32 to vector<2x128xf32>
    %475 = arith.addf %474, %473 : vector<2x128xf32>
    %476 = arith.divf %474, %475 : vector<2x128xf32>
    %477 = vector.extract_strided_slice %464 {offsets = [0, 256], sizes = [2, 128], strides = [1, 1]} : vector<2x512xf32> to vector<2x128xf32>
    %478 = math.tanh %477 : vector<2x128xf32>
    %479 = vector.extract_strided_slice %464 {offsets = [0, 384], sizes = [2, 128], strides = [1, 1]} : vector<2x512xf32> to vector<2x128xf32>
    %480 = arith.negf %479 : vector<2x128xf32>
    %481 = math.exp %480 : vector<2x128xf32>
    %cst_125 = arith.constant 1.000000e+00 : f32
    %482 = vector.broadcast %cst_125 : f32 to vector<2x128xf32>
    %483 = arith.addf %482, %481 : vector<2x128xf32>
    %484 = arith.divf %482, %483 : vector<2x128xf32>
    %485 = arith.mulf %476, %425 : vector<2x128xf32>
    %486 = arith.mulf %470, %478 : vector<2x128xf32>
    %487 = arith.addf %485, %486 : vector<2x128xf32>
    %488 = math.tanh %487 : vector<2x128xf32>
    %489 = arith.mulf %484, %488 : vector<2x128xf32>
    %490 = tpu.concatenate %489, %457 in 1 : vector<2x128xf32>, vector<2x128xf32> -> vector<2x256xf32>
    %491 = arith.truncf %490 : vector<2x256xf32> to vector<2x256xbf16>
    %cst_126 = arith.constant dense<0.000000e+00> : vector<2x512xf32>
    %492 = tpu.matmul %491, %86, %cst_126 {dimension_numbers = #tpu.dot_dimension_numbers<[1], [0], [0], [1], [0, 0, 1, 1], [], []>} : vector<2x256xbf16>, vector<256x512xbf16>, vector<2x512xf32> -> vector<2x512xf32>
    %493 = vector.broadcast %87 : vector<1x512xf32> to vector<2x512xf32>
    %494 = arith.addf %492, %493 : vector<2x512xf32>
    %495 = vector.extract_strided_slice %494 {offsets = [0, 0], sizes = [2, 128], strides = [1, 1]} : vector<2x512xf32> to vector<2x128xf32>
    %496 = arith.negf %495 : vector<2x128xf32>
    %497 = math.exp %496 : vector<2x128xf32>
    %cst_127 = arith.constant 1.000000e+00 : f32
    %498 = vector.broadcast %cst_127 : f32 to vector<2x128xf32>
    %499 = arith.addf %498, %497 : vector<2x128xf32>
    %500 = arith.divf %498, %499 : vector<2x128xf32>
    %501 = vector.extract_strided_slice %494 {offsets = [0, 128], sizes = [2, 128], strides = [1, 1]} : vector<2x512xf32> to vector<2x128xf32>
    %502 = arith.negf %501 : vector<2x128xf32>
    %503 = math.exp %502 : vector<2x128xf32>
    %cst_128 = arith.constant 1.000000e+00 : f32
    %504 = vector.broadcast %cst_128 : f32 to vector<2x128xf32>
    %505 = arith.addf %504, %503 : vector<2x128xf32>
    %506 = arith.divf %504, %505 : vector<2x128xf32>
    %507 = vector.extract_strided_slice %494 {offsets = [0, 256], sizes = [2, 128], strides = [1, 1]} : vector<2x512xf32> to vector<2x128xf32>
    %508 = math.tanh %507 : vector<2x128xf32>
    %509 = vector.extract_strided_slice %494 {offsets = [0, 384], sizes = [2, 128], strides = [1, 1]} : vector<2x512xf32> to vector<2x128xf32>
    %510 = arith.negf %509 : vector<2x128xf32>
    %511 = math.exp %510 : vector<2x128xf32>
    %cst_129 = arith.constant 1.000000e+00 : f32
    %512 = vector.broadcast %cst_129 : f32 to vector<2x128xf32>
    %513 = arith.addf %512, %511 : vector<2x128xf32>
    %514 = arith.divf %512, %513 : vector<2x128xf32>
    %515 = arith.mulf %506, %455 : vector<2x128xf32>
    %516 = arith.mulf %500, %508 : vector<2x128xf32>
    %517 = arith.addf %515, %516 : vector<2x128xf32>
    %518 = math.tanh %517 : vector<2x128xf32>
    %519 = arith.mulf %514, %518 : vector<2x128xf32>
    %c0_130 = arith.constant 0 : index
    %c6 = arith.constant 6 : index
    %c0_131 = arith.constant 0 : index
    %520 = vector.load %arg12[%c0_130, %c6, %c0_131] : memref<2x8x128xf32, #tpu.memory_space<vmem>>, vector<2x1x128xf32>
    %521 = vector.shape_cast %520 : vector<2x1x128xf32> to vector<2x128xf32>
    %522 = vector.shape_cast %519 : vector<2x128xf32> to vector<2x1x128xf32>
    tpu.vector_store %arg12[%c0_130, %c6, %c0_131], %522 {strides = array<i32>} : memref<2x8x128xf32, #tpu.memory_space<vmem>>, vector<2x1x128xf32>,
    %523 = vector.extract_strided_slice %84 {offsets = [14, 0], sizes = [2, 512], strides = [1, 1]} : vector<16x512xf32> to vector<2x512xf32>
    %524 = arith.truncf %489 : vector<2x128xf32> to vector<2x128xbf16>
    %cst_132 = arith.constant dense<0.000000e+00> : vector<2x512xf32>
    %525 = tpu.matmul %524, %85, %cst_132 {dimension_numbers = #tpu.dot_dimension_numbers<[1], [0], [0], [1], [0, 0, 1, 1], [], []>} : vector<2x128xbf16>, vector<128x512xbf16>, vector<2x512xf32> -> vector<2x512xf32>
    %526 = arith.addf %523, %525 : vector<2x512xf32>
    %527 = vector.extract_strided_slice %526 {offsets = [0, 0], sizes = [2, 128], strides = [1, 1]} : vector<2x512xf32> to vector<2x128xf32>
    %528 = arith.negf %527 : vector<2x128xf32>
    %529 = math.exp %528 : vector<2x128xf32>
    %cst_133 = arith.constant 1.000000e+00 : f32
    %530 = vector.broadcast %cst_133 : f32 to vector<2x128xf32>
    %531 = arith.addf %530, %529 : vector<2x128xf32>
    %532 = arith.divf %530, %531 : vector<2x128xf32>
    %533 = vector.extract_strided_slice %526 {offsets = [0, 128], sizes = [2, 128], strides = [1, 1]} : vector<2x512xf32> to vector<2x128xf32>
    %534 = arith.negf %533 : vector<2x128xf32>
    %535 = math.exp %534 : vector<2x128xf32>
    %cst_134 = arith.constant 1.000000e+00 : f32
    %536 = vector.broadcast %cst_134 : f32 to vector<2x128xf32>
    %537 = arith.addf %536, %535 : vector<2x128xf32>
    %538 = arith.divf %536, %537 : vector<2x128xf32>
    %539 = vector.extract_strided_slice %526 {offsets = [0, 256], sizes = [2, 128], strides = [1, 1]} : vector<2x512xf32> to vector<2x128xf32>
    %540 = math.tanh %539 : vector<2x128xf32>
    %541 = vector.extract_strided_slice %526 {offsets = [0, 384], sizes = [2, 128], strides = [1, 1]} : vector<2x512xf32> to vector<2x128xf32>
    %542 = arith.negf %541 : vector<2x128xf32>
    %543 = math.exp %542 : vector<2x128xf32>
    %cst_135 = arith.constant 1.000000e+00 : f32
    %544 = vector.broadcast %cst_135 : f32 to vector<2x128xf32>
    %545 = arith.addf %544, %543 : vector<2x128xf32>
    %546 = arith.divf %544, %545 : vector<2x128xf32>
    %547 = arith.mulf %538, %487 : vector<2x128xf32>
    %548 = arith.mulf %532, %540 : vector<2x128xf32>
    %549 = arith.addf %547, %548 : vector<2x128xf32>
    %550 = math.tanh %549 : vector<2x128xf32>
    %551 = arith.mulf %546, %550 : vector<2x128xf32>
    %552 = tpu.concatenate %551, %519 in 1 : vector<2x128xf32>, vector<2x128xf32> -> vector<2x256xf32>
    %553 = arith.truncf %552 : vector<2x256xf32> to vector<2x256xbf16>
    %cst_136 = arith.constant dense<0.000000e+00> : vector<2x512xf32>
    %554 = tpu.matmul %553, %86, %cst_136 {dimension_numbers = #tpu.dot_dimension_numbers<[1], [0], [0], [1], [0, 0, 1, 1], [], []>} : vector<2x256xbf16>, vector<256x512xbf16>, vector<2x512xf32> -> vector<2x512xf32>
    %555 = vector.broadcast %87 : vector<1x512xf32> to vector<2x512xf32>
    %556 = arith.addf %554, %555 : vector<2x512xf32>
    %557 = vector.extract_strided_slice %556 {offsets = [0, 0], sizes = [2, 128], strides = [1, 1]} : vector<2x512xf32> to vector<2x128xf32>
    %558 = arith.negf %557 : vector<2x128xf32>
    %559 = math.exp %558 : vector<2x128xf32>
    %cst_137 = arith.constant 1.000000e+00 : f32
    %560 = vector.broadcast %cst_137 : f32 to vector<2x128xf32>
    %561 = arith.addf %560, %559 : vector<2x128xf32>
    %562 = arith.divf %560, %561 : vector<2x128xf32>
    %563 = vector.extract_strided_slice %556 {offsets = [0, 128], sizes = [2, 128], strides = [1, 1]} : vector<2x512xf32> to vector<2x128xf32>
    %564 = arith.negf %563 : vector<2x128xf32>
    %565 = math.exp %564 : vector<2x128xf32>
    %cst_138 = arith.constant 1.000000e+00 : f32
    %566 = vector.broadcast %cst_138 : f32 to vector<2x128xf32>
    %567 = arith.addf %566, %565 : vector<2x128xf32>
    %568 = arith.divf %566, %567 : vector<2x128xf32>
    %569 = vector.extract_strided_slice %556 {offsets = [0, 256], sizes = [2, 128], strides = [1, 1]} : vector<2x512xf32> to vector<2x128xf32>
    %570 = math.tanh %569 : vector<2x128xf32>
    %571 = vector.extract_strided_slice %556 {offsets = [0, 384], sizes = [2, 128], strides = [1, 1]} : vector<2x512xf32> to vector<2x128xf32>
    %572 = arith.negf %571 : vector<2x128xf32>
    %573 = math.exp %572 : vector<2x128xf32>
    %cst_139 = arith.constant 1.000000e+00 : f32
    %574 = vector.broadcast %cst_139 : f32 to vector<2x128xf32>
    %575 = arith.addf %574, %573 : vector<2x128xf32>
    %576 = arith.divf %574, %575 : vector<2x128xf32>
    %577 = arith.mulf %568, %517 : vector<2x128xf32>
    %578 = arith.mulf %562, %570 : vector<2x128xf32>
    %579 = arith.addf %577, %578 : vector<2x128xf32>
    %580 = math.tanh %579 : vector<2x128xf32>
    %581 = arith.mulf %576, %580 : vector<2x128xf32>
    %c0_140 = arith.constant 0 : index
    %c7 = arith.constant 7 : index
    %c0_141 = arith.constant 0 : index
    %582 = vector.load %arg12[%c0_140, %c7, %c0_141] : memref<2x8x128xf32, #tpu.memory_space<vmem>>, vector<2x1x128xf32>
    %583 = vector.shape_cast %582 : vector<2x1x128xf32> to vector<2x128xf32>
    %584 = vector.shape_cast %581 : vector<2x128xf32> to vector<2x1x128xf32>
    tpu.vector_store %arg12[%c0_140, %c7, %c0_141], %584 {strides = array<i32>} : memref<2x8x128xf32, #tpu.memory_space<vmem>>, vector<2x1x128xf32>,
    return
  }
}

</mosaic_0001>

<llo_original>
// kernel: tpu_custom_call.1
$region0: #{tpu_custom_call.1}
  #allocation0 [shape = 'u32[]', space=smem, size = 0x4, offset = 0x4, fixed_abs, tag = 'smem constant byte address 0x4 - core index']
  #allocation1 [shape = 'u32[144,128]{1,0:T(1,128)}', space=vmem, size = 0x12000, scoped, tag = 'internal scratch']
  %s0 = inlined_call_operand.hbm [shape: f32[8,2,32], index: 0, kind: input, shape index: {}]
  %s1 = inlined_call_operand.vmem [shape: f32[32,2], index: 1, kind: input, shape index: {}]
  %s2 = inlined_call_operand.hbm [shape: f32[2,32], index: 2, kind: input, shape index: {}]
  %s3 = inlined_call_operand.hbm [shape: bf16[3,32,32], index: 3, kind: input, shape index: {}]
  %s4 = inlined_call_operand.hbm [shape: f32[1,32], index: 4, kind: input, shape index: {}]
  %s5 = inlined_call_operand.vmem [shape: bf16[3,32,32], index: 5, kind: input, shape index: {}]
  %s6 = inlined_call_operand.hbm [shape: f32[1,32], index: 6, kind: input, shape index: {}]
  %s7 = inlined_call_operand.hbm [shape: bf16[32,512], index: 7, kind: input, shape index: {}]
  %s8 = inlined_call_operand.hbm [shape: bf16[128,512], index: 8, kind: input, shape index: {}]
  %s9 = inlined_call_operand.vmem [shape: f32[1,512], index: 9, kind: input, shape index: {}]
  %s10 = inlined_call_operand.hbm [shape: bf16[256,512], index: 10, kind: input, shape index: {}]
  %s11 = inlined_call_operand.vmem [shape: f32[1,512], index: 11, kind: input, shape index: {}]
  %s12 = inlined_call_operand.hbm [shape: f32[2,8,128], index: 12, kind: output, shape index: {}]
  %s13 = sld [smem:[#allocation0]]
  $region90: #{tpu_custom_call.1} parent=0
    _
  %s15 = ssub.s32 1, %s13
  %s16 = scalar_select 0, %s15, %s13
  $region1: #{tpu_custom_call.1} parent=0
    #allocation2 [shape = 'u8[8192]{0}', space=vmem, size = 0x2000, scoped, tag = 'input window, operand 0, single buffered']
    #allocation3 [shape = 's32[1]{0}', space=sflag, size = 0x4, scoped, tag = 'scoped memory for tpu_custom_call.1']
    #allocation4 [shape = 's32[1]{0}', space=sflag, size = 0x4, scoped, tag = 'scoped memory for tpu_custom_call.1']
    #allocation5 [shape = 'u8[1024]{0}', space=vmem, size = 0x400, scoped, tag = 'input window, operand 2, single buffered']
    #allocation6 [shape = 's32[1]{0}', space=sflag, size = 0x4, scoped, tag = 'scoped memory for tpu_custom_call.1']
    #allocation7 [shape = 'u8[24576]{0}', space=vmem, size = 0x6000, scoped, tag = 'input window, operand 3, single buffered']
    #allocation8 [shape = 'u8[512]{0}', space=vmem, size = 0x400, scoped, tag = 'input window, operand 4, single buffered']
    #allocation9 [shape = 's32[1]{0}', space=sflag, size = 0x4, scoped, tag = 'scoped memory for tpu_custom_call.1']
    #allocation10 [shape = 'u8[512]{0}', space=vmem, size = 0x400, scoped, tag = 'input window, operand 6, single buffered']
    #allocation11 [shape = 'u8[32768]{0}', space=vmem, size = 0x8000, scoped, tag = 'input window, operand 7, single buffered']
    #allocation12 [shape = 's32[1]{0}', space=sflag, size = 0x4, scoped, tag = 'scoped memory for tpu_custom_call.1']
    #allocation13 [shape = 'u8[131072]{0}', space=vmem, size = 0x20000, scoped, tag = 'input window, operand 8, single buffered']
    #allocation14 [shape = 'u8[262144]{0}', space=vmem, size = 0x40000, scoped, tag = 'input window, operand 10, single buffered']
    #allocation15 [shape = 's32[1]{0}', space=sflag, size = 0x4, scoped, tag = 'scoped memory for tpu_custom_call.1']
    #allocation16 [shape = 'u8[8192]{0}', space=vmem, size = 0x2000, scoped, tag = 'output window, operand 0, single buffered']
    %17 = vsyncpa [#allocation3], 0
    %18 = vsyncpa [#allocation6], 0
    %19 = vsyncpa [#allocation9], 0
    %20 = vsyncpa [#allocation12], 0
    %21 = vsyncpa [#allocation15], 0
    %22 = vsyncpa [#allocation4], 0
    // Predicated region
    $region2: #{tpu_custom_call.1} parent=1 // pred_check
      _
    $region3: #{tpu_custom_call.1} parent=1 // pred_check_branch
      %24 = sbr.rel (0) target = $region5
    $region4: #{tpu_custom_call.1} parent=1 // pred_region
      %s26 = ssub.s32 256, 256
      %27 = vsyncadd [#allocation3], %s26
      %s28 = sshll.u32 [#allocation2], 4
      %s29 = int_to_ptr.vmem [resolvable:$true] %s28
      %34 = dma.hbm_to_vmem [thread:$0]  %s0, 256, %s29, [#allocation3], 32, 32, 2
    $region5: #{tpu_custom_call.1} parent=1 // pred_fallthru
      _
    // Predicated region
    $region6: #{tpu_custom_call.1} parent=1 // pred_check
      _
    $region7: #{tpu_custom_call.1} parent=1 // pred_check_branch
      %36 = sbr.rel (0) target = $region9
    $region8: #{tpu_custom_call.1} parent=1 // pred_region
      _
    $region9: #{tpu_custom_call.1} parent=1 // pred_fallthru
      _
    // Predicated region
    $region10: #{tpu_custom_call.1} parent=1 // pred_check
      _
    $region11: #{tpu_custom_call.1} parent=1 // pred_check_branch
      %38 = sbr.rel (0) target = $region13
    $region12: #{tpu_custom_call.1} parent=1 // pred_region
      %s40 = ssub.s32 32, 32
      %41 = vsyncadd [#allocation6], %s40
      %s43 = sshll.u32 [#allocation5], 4
      %s44 = int_to_ptr.vmem [resolvable:$true] %s43
      %46 = dma.hbm_to_vmem [thread:$0]  %s2, 32, %s44, [#allocation6]
    $region13: #{tpu_custom_call.1} parent=1 // pred_fallthru
      _
    // Predicated region
    $region14: #{tpu_custom_call.1} parent=1 // pred_check
      _
    $region15: #{tpu_custom_call.1} parent=1 // pred_check_branch
      %48 = sbr.rel (0) target = $region17
    $region16: #{tpu_custom_call.1} parent=1 // pred_region
      %s50 = ssub.s32 768, 768
      %51 = vsyncadd [#allocation6], %s50
      %s52 = sshll.u32 [#allocation7], 4
      %s53 = int_to_ptr.vmem [resolvable:$true] %s52
      %58 = dma.hbm_to_vmem [thread:$0]  %s3, 768, %s53, [#allocation6], 64, 64, 4
    $region17: #{tpu_custom_call.1} parent=1 // pred_fallthru
      _
    // Predicated region
    $region18: #{tpu_custom_call.1} parent=1 // pred_check
      _
    $region19: #{tpu_custom_call.1} parent=1 // pred_check_branch
      %60 = sbr.rel (0) target = $region21
    $region20: #{tpu_custom_call.1} parent=1 // pred_region
      %s62 = ssub.s32 16, 16
      %63 = vsyncadd [#allocation9], %s62
      %s65 = sshll.u32 [#allocation8], 4
      %s66 = int_to_ptr.vmem [resolvable:$true] %s65
      %68 = dma.hbm_to_vmem [thread:$0]  %s4, 16, %s66, [#allocation9]
    $region21: #{tpu_custom_call.1} parent=1 // pred_fallthru
      _
    // Predicated region
    $region22: #{tpu_custom_call.1} parent=1 // pred_check
      _
    $region23: #{tpu_custom_call.1} parent=1 // pred_check_branch
      %70 = sbr.rel (0) target = $region25
    $region24: #{tpu_custom_call.1} parent=1 // pred_region
      _
    $region25: #{tpu_custom_call.1} parent=1 // pred_fallthru
      _
    // Predicated region
    $region26: #{tpu_custom_call.1} parent=1 // pred_check
      _
    $region27: #{tpu_custom_call.1} parent=1 // pred_check_branch
      %72 = sbr.rel (0) target = $region29
    $region28: #{tpu_custom_call.1} parent=1 // pred_region
      %s74 = ssub.s32 16, 16
      %75 = vsyncadd [#allocation9], %s74
      %s77 = sshll.u32 [#allocation10], 4
      %s78 = int_to_ptr.vmem [resolvable:$true] %s77
      %80 = dma.hbm_to_vmem [thread:$0]  %s6, 16, %s78, [#allocation9]
    $region29: #{tpu_custom_call.1} parent=1 // pred_fallthru
      _
    // Predicated region
    $region30: #{tpu_custom_call.1} parent=1 // pred_check
      _
    $region31: #{tpu_custom_call.1} parent=1 // pred_check_branch
      %82 = sbr.rel (0) target = $region33
    $region32: #{tpu_custom_call.1} parent=1 // pred_region
      %s84 = ssub.s32 1024, 1024
      %85 = vsyncadd [#allocation12], %s84
      %s86 = sshll.u32 [#allocation11], 4
      %s87 = int_to_ptr.vmem [resolvable:$true] %s86
      %92 = dma.hbm_to_vmem [thread:$0]  %s7, 1024, %s87, [#allocation12], 256, 256, 16
    $region33: #{tpu_custom_call.1} parent=1 // pred_fallthru
      _
    // Predicated region
    $region34: #{tpu_custom_call.1} parent=1 // pred_check
      _
    $region35: #{tpu_custom_call.1} parent=1 // pred_check_branch
      %94 = sbr.rel (0) target = $region37
    $region36: #{tpu_custom_call.1} parent=1 // pred_region
      %s96 = ssub.s32 4096, 4096
      %97 = vsyncadd [#allocation12], %s96
      %s98 = sshll.u32 [#allocation13], 4
      %s99 = int_to_ptr.vmem [resolvable:$true] %s98
      %104 = dma.hbm_to_vmem [thread:$0]  %s8, 4096, %s99, [#allocation12], 256, 256, 16
    $region37: #{tpu_custom_call.1} parent=1 // pred_fallthru
      _
    // Predicated region
    $region38: #{tpu_custom_call.1} parent=1 // pred_check
      _
    $region39: #{tpu_custom_call.1} parent=1 // pred_check_branch
      %106 = sbr.rel (0) target = $region41
    $region40: #{tpu_custom_call.1} parent=1 // pred_region
      _
    $region41: #{tpu_custom_call.1} parent=1 // pred_fallthru
      _
    // Predicated region
    $region42: #{tpu_custom_call.1} parent=1 // pred_check
      _
    $region43: #{tpu_custom_call.1} parent=1 // pred_check_branch
      %108 = sbr.rel (0) target = $region45
    $region44: #{tpu_custom_call.1} parent=1 // pred_region
      %s110 = ssub.s32 8192, 8192
      %111 = vsyncadd [#allocation15], %s110
      %s112 = sshll.u32 [#allocation14], 4
      %s113 = int_to_ptr.vmem [resolvable:$true] %s112
      %118 = dma.hbm_to_vmem [thread:$0]  %s10, 8192, %s113, [#allocation15], 256, 256, 16
    $region45: #{tpu_custom_call.1} parent=1 // pred_fallthru
      _
    // Predicated region
    $region46: #{tpu_custom_call.1} parent=1 // pred_check
      _
    $region47: #{tpu_custom_call.1} parent=1 // pred_check_branch
      %120 = sbr.rel (0) target = $region49
    $region48: #{tpu_custom_call.1} parent=1 // pred_region
      _
    $region49: #{tpu_custom_call.1} parent=1 // pred_fallthru
      _
    // Predicated region
    $region50: #{tpu_custom_call.1} parent=1 // pred_check
      _
    $region51: #{tpu_custom_call.1} parent=1 // pred_check_branch
      %122 = sbr.rel (0) target = $region53
    $region52: #{tpu_custom_call.1} parent=1 // pred_region
      %123 = dma.done [#allocation3], 256
    $region53: #{tpu_custom_call.1} parent=1 // pred_fallthru
      _
    // Predicated region
    $region54: #{tpu_custom_call.1} parent=1 // pred_check
      _
    $region55: #{tpu_custom_call.1} parent=1 // pred_check_branch
      %125 = sbr.rel (0) target = $region57
    $region56: #{tpu_custom_call.1} parent=1 // pred_region
      %126 = dma.done [#allocation6], 32
    $region57: #{tpu_custom_call.1} parent=1 // pred_fallthru
      _
    // Predicated region
    $region58: #{tpu_custom_call.1} parent=1 // pred_check
      _
    $region59: #{tpu_custom_call.1} parent=1 // pred_check_branch
      %128 = sbr.rel (0) target = $region61
    $region60: #{tpu_custom_call.1} parent=1 // pred_region
      %129 = dma.done [#allocation6], 768
    $region61: #{tpu_custom_call.1} parent=1 // pred_fallthru
      _
    // Predicated region
    $region62: #{tpu_custom_call.1} parent=1 // pred_check
      _
    $region63: #{tpu_custom_call.1} parent=1 // pred_check_branch
      %131 = sbr.rel (0) target = $region65
    $region64: #{tpu_custom_call.1} parent=1 // pred_region
      %132 = dma.done [#allocation9], 16
    $region65: #{tpu_custom_call.1} parent=1 // pred_fallthru
      _
    // Predicated region
    $region66: #{tpu_custom_call.1} parent=1 // pred_check
      _
    $region67: #{tpu_custom_call.1} parent=1 // pred_check_branch
      %134 = sbr.rel (0) target = $region69
    $region68: #{tpu_custom_call.1} parent=1 // pred_region
      %135 = dma.done [#allocation9], 16
    $region69: #{tpu_custom_call.1} parent=1 // pred_fallthru
      _
    // Predicated region
    $region70: #{tpu_custom_call.1} parent=1 // pred_check
      _
    $region71: #{tpu_custom_call.1} parent=1 // pred_check_branch
      %137 = sbr.rel (0) target = $region73
    $region72: #{tpu_custom_call.1} parent=1 // pred_region
      %138 = dma.done [#allocation12], 1024
    $region73: #{tpu_custom_call.1} parent=1 // pred_fallthru
      _
    // Predicated region
    $region74: #{tpu_custom_call.1} parent=1 // pred_check
      _
    $region75: #{tpu_custom_call.1} parent=1 // pred_check_branch
      %140 = sbr.rel (0) target = $region77
    $region76: #{tpu_custom_call.1} parent=1 // pred_region
      %141 = dma.done [#allocation12], 4096
    $region77: #{tpu_custom_call.1} parent=1 // pred_fallthru
      _
    // Predicated region
    $region78: #{tpu_custom_call.1} parent=1 // pred_check
      _
    $region79: #{tpu_custom_call.1} parent=1 // pred_check_branch
      %143 = sbr.rel (0) target = $region81
    $region80: #{tpu_custom_call.1} parent=1 // pred_region
      %144 = dma.done [#allocation15], 8192
    $region81: #{tpu_custom_call.1} parent=1 // pred_fallthru
      _
    %v146 = vld [vmem:[#allocation2] sm:$0x3]
    %v147 = vld [vmem:[#allocation2 + $0x2] sm:$0x3]
    %v148 = vld [vmem:[#allocation2 + $0x4] sm:$0x3]
    %v149 = vld [vmem:[#allocation2 + $0x6] sm:$0x3]
    %v150 = vld [vmem:[#allocation2 + $0x8] sm:$0x3]
    %v151 = vld [vmem:[#allocation2 + $0xa] sm:$0x3]
    %v152 = vld [vmem:[#allocation2 + $0xc] sm:$0x3]
    %v153 = vld [vmem:[#allocation2 + $0xe] sm:$0x3]
    %vm154 = vcmask 254976
    %v155 = vsel %vm154, %v146, 0.0
    %v156 = vsel %vm154, %v147, 0.0
    %v157 = vadd.f32 %v155, %v156
    %v158 = vsel %vm154, %v148, 0.0
    %v159 = vadd.f32 %v157, %v158
    %v160 = vsel %vm154, %v149, 0.0
    %v161 = vadd.f32 %v159, %v160
    %v162 = vsel %vm154, %v150, 0.0
    %v163 = vadd.f32 %v161, %v162
    %v164 = vsel %vm154, %v151, 0.0
    %v165 = vadd.f32 %v163, %v164
    %v166 = vsel %vm154, %v152, 0.0
    %v167 = vadd.f32 %v165, %v166
    %v168 = vsel %vm154, %v153, 0.0
    %v169 = vadd.f32 %v167, %v168
    %v170 = vrcp.pop 8.0
    %v171 = vmul.f32 %v169, %v170
    %v172 = vld [vmem:[%s1] sm:$0xff]
    %v173 = vld [vmem:[%s1 + $0x8] sm:$0xff]
    %v174 = vld [vmem:[%s1 + $0x10] sm:$0xff]
    %v175 = vld [vmem:[%s1 + $0x18] sm:$0xff]
    %vm176 = vcmask 261120
    %v178 = vsel %vm176, %v171, 0
    %180 = vmatprep.subr.mxu0 0.0
    %181 = vmatpush1.msra.mxu0 %v172
    %182 = vmatprep.subr.mxu0 0.0
    %183 = vmatpush1.msra.mxu0 %v173
    %184 = vmatprep.subr.mxu0 0.0
    %185 = vmatpush1.msra.mxu0 %v174
    %186 = vmatprep.subr.mxu0 0.0
    %187 = vmatpush1.msra.mxu0 %v175
    %188 = vmatprep.subr.mxu0 0.0
    %189 = vmatpush1.msra.mxu0 0.0
    %190 = vmatprep.subr.mxu0 0.0
    %191 = vmatpush1.msra.mxu0 0.0
    %192 = vmatprep.subr.mxu0 0.0
    %193 = vmatpush1.msra.mxu0 0.0
    %194 = vmatprep.subr.mxu0 0.0
    %195 = vmatpush1.msra.mxu0 0.0
    %196 = vmatprep.subr.mxu0 0.0
    %197 = vmatpush1.msra.mxu0 0.0
    %198 = vmatprep.subr.mxu0 0.0
    %199 = vmatpush1.msra.mxu0 0.0
    %200 = vmatprep.subr.mxu0 0.0
    %201 = vmatpush1.msra.mxu0 0.0
    %202 = vmatprep.subr.mxu0 0.0
    %203 = vmatpush1.msra.mxu0 0.0
    %204 = vmatprep.subr.mxu0 0.0
    %205 = vmatpush1.msra.mxu0 0.0
    %206 = vmatprep.subr.mxu0 0.0
    %207 = vmatpush1.msra.mxu0 0.0
    %208 = vmatprep.subr.mxu0 0.0
    %209 = vmatpush1.msra.mxu0 0.0
    %210 = vmatprep.subr.mxu0 0.0
    %211 = vmatpush1.msra.mxu0 0.0
    %212 = vmatprep.subr.mxu0 0.0
    %213 = vmatpush1.msra.mxu0 0.0
    %214 = vmatprep.subr.mxu0 0.0
    %215 = vmatpush1.msra.mxu0 0.0
    %216 = vmatprep.subr.mxu0 0.0
    %217 = vmatpush1.msra.mxu0 0.0
    %218 = vmatprep.subr.mxu0 0.0
    %219 = vmatpush1.msra.mxu0 0.0
    %220 = vmatprep.subr.mxu0 0.0
    %221 = vmatpush1.msra.mxu0 0.0
    %222 = vmatprep.subr.mxu0 0.0
    %223 = vmatpush1.msra.mxu0 0.0
    %224 = vmatprep.subr.mxu0 0.0
    %225 = vmatpush1.msra.mxu0 0.0
    %226 = vmatprep.subr.mxu0 0.0
    %227 = vmatpush1.msra.mxu0 0.0
    %228 = vmatprep.subr.mxu0 0.0
    %229 = vmatpush1.msra.mxu0 0.0
    %230 = vmatprep.subr.mxu0 0.0
    %231 = vmatpush1.msra.mxu0 0.0
    %232 = vmatprep.subr.mxu0 0.0
    %233 = vmatpush1.msra.mxu0 0.0
    %234 = vmatprep.subr.mxu0 0.0
    %235 = vmatpush1.msra.mxu0 0.0
    %236 = vmatprep.subr.mxu0 0.0
    %237 = vmatpush1.msra.mxu0 0.0
    %238 = vmatprep.subr.mxu0 0.0
    %239 = vmatpush1.msra.mxu0 0.0
    %240 = vmatprep.subr.mxu0 0.0
    %241 = vmatpush1.msra.mxu0 0.0
    %242 = vmatprep.subr.mxu0 0.0
    %243 = vmatpush1.msra.mxu0 0.0
    %244 = vmatprep.mubr.f32.mxu0 0.0
    %245 = vmatmul.mubr.f32.gmra.mrb[0].mxu0 %v178
    %v246 = vpop.f32.mrb[0].mxu0
    %v247 = vadd.f32 0.0, %v246
    %v248 = vpop.f32.mrb[0].mxu0
    %249 = vdwg.mxu0
    %v250 = vmax.f32 %v247, 0.0
    %v251 = vld [vmem:[#allocation5] sm:$0x3]
    %vm252 = vcmask 15360
    %v254 = vsel %vm252, %v250, 0
    %vm256 = vcmask 1041408
    %v258 = vsel %vm256, %v251, 0
    %260 = vmatprep.subr.mxu0 0.0
    %261 = vmatpush1.msra.mxu0 %v258
    %262 = vmatprep.subr.mxu0 0.0
    %263 = vmatpush1.msra.mxu0 0.0
    %264 = vmatprep.subr.mxu0 0.0
    %265 = vmatpush1.msra.mxu0 0.0
    %266 = vmatprep.subr.mxu0 0.0
    %267 = vmatpush1.msra.mxu0 0.0
    %268 = vmatprep.subr.mxu0 0.0
    %269 = vmatpush1.msra.mxu0 0.0
    %270 = vmatprep.subr.mxu0 0.0
    %271 = vmatpush1.msra.mxu0 0.0
    %272 = vmatprep.subr.mxu0 0.0
    %273 = vmatpush1.msra.mxu0 0.0
    %274 = vmatprep.subr.mxu0 0.0
    %275 = vmatpush1.msra.mxu0 0.0
    %276 = vmatprep.subr.mxu0 0.0
    %277 = vmatpush1.msra.mxu0 0.0
    %278 = vmatprep.subr.mxu0 0.0
    %279 = vmatpush1.msra.mxu0 0.0
    %280 = vmatprep.subr.mxu0 0.0
    %281 = vmatpush1.msra.mxu0 0.0
    %282 = vmatprep.subr.mxu0 0.0
    %283 = vmatpush1.msra.mxu0 0.0
    %284 = vmatprep.subr.mxu0 0.0
    %285 = vmatpush1.msra.mxu0 0.0
    %286 = vmatprep.subr.mxu0 0.0
    %287 = vmatpush1.msra.mxu0 0.0
    %288 = vmatprep.subr.mxu0 0.0
    %289 = vmatpush1.msra.mxu0 0.0
    %290 = vmatprep.subr.mxu0 0.0
    %291 = vmatpush1.msra.mxu0 0.0
    %292 = vmatprep.subr.mxu0 0.0
    %293 = vmatpush1.msra.mxu0 0.0
    %294 = vmatprep.subr.mxu0 0.0
    %295 = vmatpush1.msra.mxu0 0.0
    %296 = vmatprep.subr.mxu0 0.0
    %297 = vmatpush1.msra.mxu0 0.0
    %298 = vmatprep.subr.mxu0 0.0
    %299 = vmatpush1.msra.mxu0 0.0
    %300 = vmatprep.subr.mxu0 0.0
    %301 = vmatpush1.msra.mxu0 0.0
    %302 = vmatprep.subr.mxu0 0.0
    %303 = vmatpush1.msra.mxu0 0.0
    %304 = vmatprep.subr.mxu0 0.0
    %305 = vmatpush1.msra.mxu0 0.0
    %306 = vmatprep.subr.mxu0 0.0
    %307 = vmatpush1.msra.mxu0 0.0
    %308 = vmatprep.subr.mxu0 0.0
    %309 = vmatpush1.msra.mxu0 0.0
    %310 = vmatprep.subr.mxu0 0.0
    %311 = vmatpush1.msra.mxu0 0.0
    %312 = vmatprep.subr.mxu0 0.0
    %313 = vmatpush1.msra.mxu0 0.0
    %314 = vmatprep.subr.mxu0 0.0
    %315 = vmatpush1.msra.mxu0 0.0
    %316 = vmatprep.subr.mxu0 0.0
    %317 = vmatpush1.msra.mxu0 0.0
    %318 = vmatprep.subr.mxu0 0.0
    %319 = vmatpush1.msra.mxu0 0.0
    %320 = vmatprep.subr.mxu0 0.0
    %321 = vmatpush1.msra.mxu0 0.0
    %322 = vmatprep.subr.mxu0 0.0
    %323 = vmatpush1.msra.mxu0 0.0
    %324 = vmatprep.mubr.f32.mxu0 0.0
    %325 = vmatmul.mubr.f32.gmra.mrb[0].mxu0 %v254
    %v326 = vpop.f32.mrb[0].mxu0
    %v327 = vadd.f32 0.0, %v326
    %v328 = vpop.f32.mrb[0].mxu0
    %329 = vdwg.mxu0
    %v330 = vxor.u32 %v327, 2147483648
    %v331 = vmul.f32 %v330, 1.442695
    %v332 = vpow.pop %v331
    %v333 = vadd.f32 %v332, 1.0
    %v334 = vrcp.pop %v333
    %v335 = vmul.f32 1.0, %v334
    %v336 = vlaneseq
    %v337 = vshrl.u32 %v336, 7
    %v338 = vadd.s32 %v337, 8
    %vm339 = vcmp.lt.s32.totalorder %v337, 2
    %vm340 = vcmp.lt.s32.totalorder %v338, 2
    %vm341 = vcmp.ge.s32.totalorder %v337, 14
    %vm342 = vcmp.ge.s32.totalorder %v338, 14
    %v351 = vcombine.low %v146, %v147
    %v352 = vcombine.low %v148, %v149
    %v354 = vunpack.c.l.s4 1983009808
    %v355 = vunpack.c.0.s8 %v354
    %v356 = vlaneseq
    %v357 = vshrl.u32 %v356, 7
    %v358 = vsub.s32 %v355, %v357
    %v359 = vrot.slane %v351, %v358
    %v361 = vunpack.c.l.s4 1983009808
    %v362 = vunpack.c.0.s8 %v361
    %v363 = vlaneseq
    %v364 = vshrl.u32 %v363, 7
    %v365 = vsub.s32 %v362, %v364
    %v366 = vrot.slane %v352, %v365
    %v367 = vcombine.low %v359, %v366
    %v368 = vcombine.low %v150, %v151
    %v369 = vcombine.low %v152, %v153
    %v371 = vunpack.c.l.s4 1983009808
    %v372 = vunpack.c.0.s8 %v371
    %v373 = vlaneseq
    %v374 = vshrl.u32 %v373, 7
    %v375 = vsub.s32 %v372, %v374
    %v376 = vrot.slane %v368, %v375
    %v378 = vunpack.c.l.s4 1983009808
    %v379 = vunpack.c.0.s8 %v378
    %v380 = vlaneseq
    %v381 = vshrl.u32 %v380, 7
    %v382 = vsub.s32 %v379, %v381
    %v383 = vrot.slane %v369, %v382
    %v384 = vcombine.low %v376, %v383
    %v387 = vrot.slane %v367, 6
    %v388 = vrot.slane %v384, 6
    %v389 = vsel %vm339, %v387, %v388
    %v390 = vsel %vm339, %v388, %v387
    %v391 = vsel %vm339, 0.0, %v390
    %v392 = vsel %vm340, 0.0, %v389
    %v393 = vrot.slane %v367, 2
    %v394 = vrot.slane %v384, 2
    %vm395 = vcmp.lt.s32.totalorder %v337, 6
    %v396 = vsel %vm395, %v393, %v394
    %v397 = vsel %vm395, %v394, %v393
    %v398 = vsel %vm341, 0.0, %v396
    %v399 = vsel %vm342, 0.0, %v397
    %v400 = vpack.c.bf16 %v392, %v391
    %v401 = vld [vmem:[#allocation7] sm:$0xf]
    %v402 = vld [vmem:[#allocation7 + $0x4] sm:$0xf]
    %v403 = vld [vmem:[#allocation7 + $0x8] sm:$0xf]
    %v404 = vld [vmem:[#allocation7 + $0xc] sm:$0xf]
    %v405 = vpack.c.bf16 %v384, %v367
    %s406 = scalar_lea.vmem [#allocation7], 16
    %v407 = vld [vmem:[%s406] sm:$0xf]
    %v408 = vld [vmem:[%s406 + $0x4] sm:$0xf]
    %v409 = vld [vmem:[%s406 + $0x8] sm:$0xf]
    %v410 = vld [vmem:[%s406 + $0xc] sm:$0xf]
    %v415 = vunpack.c.l.b16 %v407
    %v416 = vunpack.c.l.b16 %v408
    %v417 = vunpack.c.l.b16 %v409
    %v418 = vunpack.c.l.b16 %v410
    %v419 = vpack.c.b16 %v416, %v415
    %v420 = vpack.c.b16 %v418, %v417
    %v424 = vsel %vm176, %v405, 0
    %426 = vmatprep.subr.bf16.mxu0 0
    %427 = vmatpush1.bf16.msra.mxu0 %v419
    %428 = vmatprep.subr.bf16.mxu0 0
    %429 = vmatpush1.bf16.msra.mxu0 %v420
    %430 = vmatprep.subr.bf16.mxu0 0
    %431 = vmatpush1.bf16.msra.mxu0 0
    %432 = vmatprep.subr.bf16.mxu0 0
    %433 = vmatpush1.bf16.msra.mxu0 0
    %434 = vmatprep.subr.bf16.mxu0 0
    %435 = vmatpush1.bf16.msra.mxu0 0
    %436 = vmatprep.subr.bf16.mxu0 0
    %437 = vmatpush1.bf16.msra.mxu0 0
    %438 = vmatprep.subr.bf16.mxu0 0
    %439 = vmatpush1.bf16.msra.mxu0 0
    %440 = vmatprep.subr.bf16.mxu0 0
    %441 = vmatpush1.bf16.msra.mxu0 0
    %442 = vmatprep.subr.bf16.mxu0 0
    %443 = vmatpush1.bf16.msra.mxu0 0
    %444 = vmatprep.subr.bf16.mxu0 0
    %445 = vmatpush1.bf16.msra.mxu0 0
    %446 = vmatprep.subr.bf16.mxu0 0
    %447 = vmatpush1.bf16.msra.mxu0 0
    %448 = vmatprep.subr.bf16.mxu0 0
    %449 = vmatpush1.bf16.msra.mxu0 0
    %450 = vmatprep.subr.bf16.mxu0 0
    %451 = vmatpush1.bf16.msra.mxu0 0
    %452 = vmatprep.subr.bf16.mxu0 0
    %453 = vmatpush1.bf16.msra.mxu0 0
    %454 = vmatprep.subr.bf16.mxu0 0
    %455 = vmatpush1.bf16.msra.mxu0 0
    %456 = vmatprep.subr.bf16.mxu0 0
    %457 = vmatpush1.bf16.msra.mxu0 0
    %458 = vmatprep.mubr.bf16.mxu0 0
    %459 = vmatmul.mubr.bf16.gmra.mrb[0].mxu0 %v424
    %v460 = vpop.f32.mrb[0].mxu0
    %v461 = vadd.f32 0.0, %v460
    %v462 = vpop.f32.mrb[0].mxu0
    %v463 = vpop.f32.mrb[0].mxu0
    %v464 = vadd.f32 0.0, %v463
    %v465 = vpop.f32.mrb[0].mxu0
    %466 = vdwg.mxu0
    %v471 = vunpack.c.l.b16 %v401
    %v472 = vunpack.c.l.b16 %v402
    %v473 = vunpack.c.l.b16 %v403
    %v474 = vunpack.c.l.b16 %v404
    %v475 = vpack.c.b16 %v472, %v471
    %v476 = vpack.c.b16 %v474, %v473
    %v480 = vsel %vm176, %v400, 0
    %482 = vmatprep.subr.bf16.mxu0 0
    %483 = vmatpush1.bf16.msra.mxu0 %v475
    %484 = vmatprep.subr.bf16.mxu0 0
    %485 = vmatpush1.bf16.msra.mxu0 %v476
    %486 = vmatprep.subr.bf16.mxu0 0
    %487 = vmatpush1.bf16.msra.mxu0 0
    %488 = vmatprep.subr.bf16.mxu0 0
    %489 = vmatpush1.bf16.msra.mxu0 0
    %490 = vmatprep.subr.bf16.mxu0 0
    %491 = vmatpush1.bf16.msra.mxu0 0
    %492 = vmatprep.subr.bf16.mxu0 0
    %493 = vmatpush1.bf16.msra.mxu0 0
    %494 = vmatprep.subr.bf16.mxu0 0
    %495 = vmatpush1.bf16.msra.mxu0 0
    %496 = vmatprep.subr.bf16.mxu0 0
    %497 = vmatpush1.bf16.msra.mxu0 0
    %498 = vmatprep.subr.bf16.mxu0 0
    %499 = vmatpush1.bf16.msra.mxu0 0
    %500 = vmatprep.subr.bf16.mxu0 0
    %501 = vmatpush1.bf16.msra.mxu0 0
    %502 = vmatprep.subr.bf16.mxu0 0
    %503 = vmatpush1.bf16.msra.mxu0 0
    %504 = vmatprep.subr.bf16.mxu0 0
    %505 = vmatpush1.bf16.msra.mxu0 0
    %506 = vmatprep.subr.bf16.mxu0 0
    %507 = vmatpush1.bf16.msra.mxu0 0
    %508 = vmatprep.subr.bf16.mxu0 0
    %509 = vmatpush1.bf16.msra.mxu0 0
    %510 = vmatprep.subr.bf16.mxu0 0
    %511 = vmatpush1.bf16.msra.mxu0 0
    %512 = vmatprep.subr.bf16.mxu0 0
    %513 = vmatpush1.bf16.msra.mxu0 0
    %514 = vmatprep.mubr.bf16.mxu0 0
    %515 = vmatmul.mubr.bf16.gmra.mrb[0].mxu0 %v480
    %v516 = vpop.f32.mrb[0].mxu0
    %v517 = vadd.f32 %v461, %v516
    %v518 = vpop.f32.mrb[0].mxu0
    %v519 = vpop.f32.mrb[0].mxu0
    %v520 = vadd.f32 %v464, %v519
    %v521 = vpop.f32.mrb[0].mxu0
    %522 = vdwg.mxu0
    %v523 = vpack.c.bf16 %v399, %v398
    %s524 = scalar_lea.vmem [#allocation7], 32
    %v525 = vld [vmem:[%s524] sm:$0xf]
    %v526 = vld [vmem:[%s524 + $0x4] sm:$0xf]
    %v527 = vld [vmem:[%s524 + $0x8] sm:$0xf]
    %v528 = vld [vmem:[%s524 + $0xc] sm:$0xf]
    %v533 = vunpack.c.l.b16 %v525
    %v534 = vunpack.c.l.b16 %v526
    %v535 = vunpack.c.l.b16 %v527
    %v536 = vunpack.c.l.b16 %v528
    %v537 = vpack.c.b16 %v534, %v533
    %v538 = vpack.c.b16 %v536, %v535
    %v542 = vsel %vm176, %v523, 0
    %544 = vmatprep.subr.bf16.mxu0 0
    %545 = vmatpush1.bf16.msra.mxu0 %v537
    %546 = vmatprep.subr.bf16.mxu0 0
    %547 = vmatpush1.bf16.msra.mxu0 %v538
    %548 = vmatprep.subr.bf16.mxu0 0
    %549 = vmatpush1.bf16.msra.mxu0 0
    %550 = vmatprep.subr.bf16.mxu0 0
    %551 = vmatpush1.bf16.msra.mxu0 0
    %552 = vmatprep.subr.bf16.mxu0 0
    %553 = vmatpush1.bf16.msra.mxu0 0
    %554 = vmatprep.subr.bf16.mxu0 0
    %555 = vmatpush1.bf16.msra.mxu0 0
    %556 = vmatprep.subr.bf16.mxu0 0
    %557 = vmatpush1.bf16.msra.mxu0 0
    %558 = vmatprep.subr.bf16.mxu0 0
    %559 = vmatpush1.bf16.msra.mxu0 0
    %560 = vmatprep.subr.bf16.mxu0 0
    %561 = vmatpush1.bf16.msra.mxu0 0
    %562 = vmatprep.subr.bf16.mxu0 0
    %563 = vmatpush1.bf16.msra.mxu0 0
    %564 = vmatprep.subr.bf16.mxu0 0
    %565 = vmatpush1.bf16.msra.mxu0 0
    %566 = vmatprep.subr.bf16.mxu0 0
    %567 = vmatpush1.bf16.msra.mxu0 0
    %568 = vmatprep.subr.bf16.mxu0 0
    %569 = vmatpush1.bf16.msra.mxu0 0
    %570 = vmatprep.subr.bf16.mxu0 0
    %571 = vmatpush1.bf16.msra.mxu0 0
    %572 = vmatprep.subr.bf16.mxu0 0
    %573 = vmatpush1.bf16.msra.mxu0 0
    %574 = vmatprep.subr.bf16.mxu0 0
    %575 = vmatpush1.bf16.msra.mxu0 0
    %576 = vmatprep.mubr.bf16.mxu0 0
    %577 = vmatmul.mubr.bf16.gmra.mrb[0].mxu0 %v542
    %v578 = vpop.f32.mrb[0].mxu0
    %v579 = vadd.f32 0.0, %v578
    %v580 = vpop.f32.mrb[0].mxu0
    %v581 = vpop.f32.mrb[0].mxu0
    %v582 = vadd.f32 0.0, %v581
    %v583 = vpop.f32.mrb[0].mxu0
    %584 = vdwg.mxu0
    %v585 = vadd.f32 %v517, %v579
    %v586 = vadd.f32 %v520, %v582
    %v587 = vld [vmem:[#allocation8] sm:$0x1]
    %v589 = vlaneseq
    %v590 = vshrl.u32 %v589, 7
    %v591 = vsub.s32 0, %v590
    %v592 = vrot.slane %v587, %v591
    %v594 = vadd.f32 %v585, %v592
    %v595 = vadd.f32 %v586, %v592
    %v596 = vmax.f32 %v594, 0.0
    %v597 = vmax.f32 %v595, 0.0
    %v598 = vrot.slane %v596, 6
    %v599 = vrot.slane %v597, 6
    %v600 = vsel %vm339, %v598, %v599
    %v601 = vsel %vm339, %v599, %v598
    %v602 = vsel %vm339, 0.0, %v601
    %v603 = vsel %vm340, 0.0, %v600
    %v604 = vrot.slane %v596, 2
    %v605 = vrot.slane %v597, 2
    %v606 = vsel %vm395, %v604, %v605
    %v607 = vsel %vm395, %v605, %v604
    %v608 = vsel %vm341, 0.0, %v606
    %v609 = vsel %vm342, 0.0, %v607
    %v610 = vpack.c.bf16 %v603, %v602
    %v611 = vld [vmem:[%s5] sm:$0xf]
    %v612 = vld [vmem:[%s5 + $0x4] sm:$0xf]
    %v613 = vld [vmem:[%s5 + $0x8] sm:$0xf]
    %v614 = vld [vmem:[%s5 + $0xc] sm:$0xf]
    %v615 = vpack.c.bf16 %v597, %v596
    %s616 = scalar_lea.vmem %s5, 16
    %v617 = vld [vmem:[%s616] sm:$0xf]
    %v618 = vld [vmem:[%s616 + $0x4] sm:$0xf]
    %v619 = vld [vmem:[%s616 + $0x8] sm:$0xf]
    %v620 = vld [vmem:[%s616 + $0xc] sm:$0xf]
    %v625 = vunpack.c.l.b16 %v617
    %v626 = vunpack.c.l.b16 %v618
    %v627 = vunpack.c.l.b16 %v619
    %v628 = vunpack.c.l.b16 %v620
    %v629 = vpack.c.b16 %v626, %v625
    %v630 = vpack.c.b16 %v628, %v627
    %v634 = vsel %vm176, %v615, 0
    %636 = vmatprep.subr.bf16.mxu0 0
    %637 = vmatpush1.bf16.msra.mxu0 %v629
    %638 = vmatprep.subr.bf16.mxu0 0
    %639 = vmatpush1.bf16.msra.mxu0 %v630
    %640 = vmatprep.subr.bf16.mxu0 0
    %641 = vmatpush1.bf16.msra.mxu0 0
    %642 = vmatprep.subr.bf16.mxu0 0
    %643 = vmatpush1.bf16.msra.mxu0 0
    %644 = vmatprep.subr.bf16.mxu0 0
    %645 = vmatpush1.bf16.msra.mxu0 0
    %646 = vmatprep.subr.bf16.mxu0 0
    %647 = vmatpush1.bf16.msra.mxu0 0
    %648 = vmatprep.subr.bf16.mxu0 0
    %649 = vmatpush1.bf16.msra.mxu0 0
    %650 = vmatprep.subr.bf16.mxu0 0
    %651 = vmatpush1.bf16.msra.mxu0 0
    %652 = vmatprep.subr.bf16.mxu0 0
    %653 = vmatpush1.bf16.msra.mxu0 0
    %654 = vmatprep.subr.bf16.mxu0 0
    %655 = vmatpush1.bf16.msra.mxu0 0
    %656 = vmatprep.subr.bf16.mxu0 0
    %657 = vmatpush1.bf16.msra.mxu0 0
    %658 = vmatprep.subr.bf16.mxu0 0
    %659 = vmatpush1.bf16.msra.mxu0 0
    %660 = vmatprep.subr.bf16.mxu0 0
    %661 = vmatpush1.bf16.msra.mxu0 0
    %662 = vmatprep.subr.bf16.mxu0 0
    %663 = vmatpush1.bf16.msra.mxu0 0
    %664 = vmatprep.subr.bf16.mxu0 0
    %665 = vmatpush1.bf16.msra.mxu0 0
    %666 = vmatprep.subr.bf16.mxu0 0
    %667 = vmatpush1.bf16.msra.mxu0 0
    %668 = vmatprep.mubr.bf16.mxu0 0
    %669 = vmatmul.mubr.bf16.gmra.mrb[0].mxu0 %v634
    %v670 = vpop.f32.mrb[0].mxu0
    %v671 = vadd.f32 0.0, %v670
    %v672 = vpop.f32.mrb[0].mxu0
    %v673 = vpop.f32.mrb[0].mxu0
    %v674 = vadd.f32 0.0, %v673
    %v675 = vpop.f32.mrb[0].mxu0
    %676 = vdwg.mxu0
    %v681 = vunpack.c.l.b16 %v611
    %v682 = vunpack.c.l.b16 %v612
    %v683 = vunpack.c.l.b16 %v613
    %v684 = vunpack.c.l.b16 %v614
    %v685 = vpack.c.b16 %v682, %v681
    %v686 = vpack.c.b16 %v684, %v683
    %v690 = vsel %vm176, %v610, 0
    %692 = vmatprep.subr.bf16.mxu0 0
    %693 = vmatpush1.bf16.msra.mxu0 %v685
    %694 = vmatprep.subr.bf16.mxu0 0
    %695 = vmatpush1.bf16.msra.mxu0 %v686
    %696 = vmatprep.subr.bf16.mxu0 0
    %697 = vmatpush1.bf16.msra.mxu0 0
    %698 = vmatprep.subr.bf16.mxu0 0
    %699 = vmatpush1.bf16.msra.mxu0 0
    %700 = vmatprep.subr.bf16.mxu0 0
    %701 = vmatpush1.bf16.msra.mxu0 0
    %702 = vmatprep.subr.bf16.mxu0 0
    %703 = vmatpush1.bf16.msra.mxu0 0
    %704 = vmatprep.subr.bf16.mxu0 0
    %705 = vmatpush1.bf16.msra.mxu0 0
    %706 = vmatprep.subr.bf16.mxu0 0
    %707 = vmatpush1.bf16.msra.mxu0 0
    %708 = vmatprep.subr.bf16.mxu0 0
    %709 = vmatpush1.bf16.msra.mxu0 0
    %710 = vmatprep.subr.bf16.mxu0 0
    %711 = vmatpush1.bf16.msra.mxu0 0
    %712 = vmatprep.subr.bf16.mxu0 0
    %713 = vmatpush1.bf16.msra.mxu0 0
    %714 = vmatprep.subr.bf16.mxu0 0
    %715 = vmatpush1.bf16.msra.mxu0 0
    %716 = vmatprep.subr.bf16.mxu0 0
    %717 = vmatpush1.bf16.msra.mxu0 0
    %718 = vmatprep.subr.bf16.mxu0 0
    %719 = vmatpush1.bf16.msra.mxu0 0
    %720 = vmatprep.subr.bf16.mxu0 0
    %721 = vmatpush1.bf16.msra.mxu0 0
    %722 = vmatprep.subr.bf16.mxu0 0
    %723 = vmatpush1.bf16.msra.mxu0 0
    %724 = vmatprep.mubr.bf16.mxu0 0
    %725 = vmatmul.mubr.bf16.gmra.mrb[0].mxu0 %v690
    %v726 = vpop.f32.mrb[0].mxu0
    %v727 = vadd.f32 %v671, %v726
    %v728 = vpop.f32.mrb[0].mxu0
    %v729 = vpop.f32.mrb[0].mxu0
    %v730 = vadd.f32 %v674, %v729
    %v731 = vpop.f32.mrb[0].mxu0
    %732 = vdwg.mxu0
    %v733 = vpack.c.bf16 %v609, %v608
    %s734 = scalar_lea.vmem %s5, 32
    %v735 = vld [vmem:[%s734] sm:$0xf]
    %v736 = vld [vmem:[%s734 + $0x4] sm:$0xf]
    %v737 = vld [vmem:[%s734 + $0x8] sm:$0xf]
    %v738 = vld [vmem:[%s734 + $0xc] sm:$0xf]
    %v743 = vunpack.c.l.b16 %v735
    %v744 = vunpack.c.l.b16 %v736
    %v745 = vunpack.c.l.b16 %v737
    %v746 = vunpack.c.l.b16 %v738
    %v747 = vpack.c.b16 %v744, %v743
    %v748 = vpack.c.b16 %v746, %v745
    %v752 = vsel %vm176, %v733, 0
    %754 = vmatprep.subr.bf16.mxu0 0
    %755 = vmatpush1.bf16.msra.mxu0 %v747
    %756 = vmatprep.subr.bf16.mxu0 0
    %757 = vmatpush1.bf16.msra.mxu0 %v748
    %758 = vmatprep.subr.bf16.mxu0 0
    %759 = vmatpush1.bf16.msra.mxu0 0
    %760 = vmatprep.subr.bf16.mxu0 0
    %761 = vmatpush1.bf16.msra.mxu0 0
    %762 = vmatprep.subr.bf16.mxu0 0
    %763 = vmatpush1.bf16.msra.mxu0 0
    %764 = vmatprep.subr.bf16.mxu0 0
    %765 = vmatpush1.bf16.msra.mxu0 0
    %766 = vmatprep.subr.bf16.mxu0 0
    %767 = vmatpush1.bf16.msra.mxu0 0
    %768 = vmatprep.subr.bf16.mxu0 0
    %769 = vmatpush1.bf16.msra.mxu0 0
    %770 = vmatprep.subr.bf16.mxu0 0
    %771 = vmatpush1.bf16.msra.mxu0 0
    %772 = vmatprep.subr.bf16.mxu0 0
    %773 = vmatpush1.bf16.msra.mxu0 0
    %774 = vmatprep.subr.bf16.mxu0 0
    %775 = vmatpush1.bf16.msra.mxu0 0
    %776 = vmatprep.subr.bf16.mxu0 0
    %777 = vmatpush1.bf16.msra.mxu0 0
    %778 = vmatprep.subr.bf16.mxu0 0
    %779 = vmatpush1.bf16.msra.mxu0 0
    %780 = vmatprep.subr.bf16.mxu0 0
    %781 = vmatpush1.bf16.msra.mxu0 0
    %782 = vmatprep.subr.bf16.mxu0 0
    %783 = vmatpush1.bf16.msra.mxu0 0
    %784 = vmatprep.subr.bf16.mxu0 0
    %785 = vmatpush1.bf16.msra.mxu0 0
    %786 = vmatprep.mubr.bf16.mxu0 0
    %787 = vmatmul.mubr.bf16.gmra.mrb[0].mxu0 %v752
    %v788 = vpop.f32.mrb[0].mxu0
    %v789 = vadd.f32 0.0, %v788
    %v790 = vpop.f32.mrb[0].mxu0
    %v791 = vpop.f32.mrb[0].mxu0
    %v792 = vadd.f32 0.0, %v791
    %v793 = vpop.f32.mrb[0].mxu0
    %794 = vdwg.mxu0
    %v795 = vadd.f32 %v727, %v789
    %v796 = vadd.f32 %v730, %v792
    %v797 = vld [vmem:[#allocation10] sm:$0x1]
    %v799 = vlaneseq
    %v800 = vshrl.u32 %v799, 7
    %v801 = vsub.s32 0, %v800
    %v802 = vrot.slane %v797, %v801
    %v804 = vadd.f32 %v795, %v802
    %v805 = vadd.f32 %v796, %v802
    %v806 = vxor.u32 %v804, 2147483648
    %v807 = vxor.u32 %v805, 2147483648
    %v808 = vmul.f32 %v806, 1.442695
    %v809 = vpow.pop %v808
    %v810 = vmul.f32 %v807, 1.442695
    %v811 = vpow.pop %v810
    %v812 = vadd.f32 %v809, 1.0
    %v813 = vadd.f32 %v811, 1.0
    %v814 = vrcp.pop %v812
    %v815 = vmul.f32 1.0, %v814
    %v816 = vrcp.pop %v813
    %v817 = vmul.f32 1.0, %v816
    %v820 = vcombine.high %v815, %v815
    %v822 = vunpack.c.l.s4 1983009808
    %v823 = vunpack.c.0.s8 %v822
    %v824 = vlaneseq
    %v825 = vshrl.u32 %v824, 7
    %v826 = vsub.s32 %v823, %v825
    %v827 = vrot.slane %v815, %v826
    %v829 = vunpack.c.l.s4 1983009808
    %v830 = vunpack.c.0.s8 %v829
    %v831 = vlaneseq
    %v832 = vshrl.u32 %v831, 7
    %v833 = vsub.s32 %v830, %v832
    %v834 = vrot.slane %v820, %v833
    %v835 = vcombine.high %v827, %v827
    %v836 = vcombine.high %v834, %v834
    %v837 = vcombine.high %v817, %v817
    %v839 = vunpack.c.l.s4 1983009808
    %v840 = vunpack.c.0.s8 %v839
    %v841 = vlaneseq
    %v842 = vshrl.u32 %v841, 7
    %v843 = vsub.s32 %v840, %v842
    %v844 = vrot.slane %v817, %v843
    %v846 = vunpack.c.l.s4 1983009808
    %v847 = vunpack.c.0.s8 %v846
    %v848 = vlaneseq
    %v849 = vshrl.u32 %v848, 7
    %v850 = vsub.s32 %v847, %v849
    %v851 = vrot.slane %v837, %v850
    %v852 = vcombine.high %v844, %v844
    %v853 = vcombine.high %v851, %v851
    %v862 = vmul.f32 %v335, %v827
    %v863 = vmul.f32 %v335, %v835
    %v864 = vmul.f32 %v335, %v834
    %v865 = vmul.f32 %v335, %v836
    %v866 = vmul.f32 %v335, %v844
    %v867 = vmul.f32 %v335, %v852
    %v868 = vmul.f32 %v335, %v851
    %v869 = vmul.f32 %v335, %v853
    %v878 = vcombine.low %v862, %v863
    %v879 = vcombine.low %v864, %v865
    %v881 = vunpack.c.l.s4 1983009808
    %v882 = vunpack.c.0.s8 %v881
    %v883 = vlaneseq
    %v884 = vshrl.u32 %v883, 7
    %v885 = vsub.s32 %v882, %v884
    %v886 = vrot.slane %v878, %v885
    %v888 = vunpack.c.l.s4 1983009808
    %v889 = vunpack.c.0.s8 %v888
    %v890 = vlaneseq
    %v891 = vshrl.u32 %v890, 7
    %v892 = vsub.s32 %v889, %v891
    %v893 = vrot.slane %v879, %v892
    %v894 = vcombine.low %v886, %v893
    %v895 = vcombine.low %v866, %v867
    %v896 = vcombine.low %v868, %v869
    %v898 = vunpack.c.l.s4 1983009808
    %v899 = vunpack.c.0.s8 %v898
    %v900 = vlaneseq
    %v901 = vshrl.u32 %v900, 7
    %v902 = vsub.s32 %v899, %v901
    %v903 = vrot.slane %v895, %v902
    %v905 = vunpack.c.l.s4 1983009808
    %v906 = vunpack.c.0.s8 %v905
    %v907 = vlaneseq
    %v908 = vshrl.u32 %v907, 7
    %v909 = vsub.s32 %v906, %v908
    %v910 = vrot.slane %v896, %v909
    %v911 = vcombine.low %v903, %v910
    %v914 = vpack.c.bf16 %v911, %v894
    %v915 = vld [vmem:[#allocation11] sm:$0xff]
    %v916 = vld [vmem:[#allocation11 + $0x8] sm:$0xff]
    %v917 = vld [vmem:[#allocation11 + $0x10] sm:$0xff]
    %v918 = vld [vmem:[#allocation11 + $0x18] sm:$0xff]
    %v919 = vld [vmem:[#allocation11 + $0x20] sm:$0xff]
    %v920 = vld [vmem:[#allocation11 + $0x28] sm:$0xff]
    %v921 = vld [vmem:[#allocation11 + $0x30] sm:$0xff]
    %v922 = vld [vmem:[#allocation11 + $0x38] sm:$0xff]
    %v923 = vld [vmem:[%s9] sm:$0xf]
    %v925 = vlaneseq
    %v926 = vshrl.u32 %v925, 7
    %v927 = vsub.s32 0, %v926
    %v928 = vrot.slane %v923, %v927
    %v929 = vlaneseq
    %v930 = vshrl.u32 %v929, 7
    %v931 = vsub.s32 1, %v930
    %v932 = vrot.slane %v923, %v931
    %v933 = vlaneseq
    %v934 = vshrl.u32 %v933, 7
    %v935 = vsub.s32 2, %v934
    %v936 = vrot.slane %v923, %v935
    %v937 = vlaneseq
    %v938 = vshrl.u32 %v937, 7
    %v939 = vsub.s32 3, %v938
    %v940 = vrot.slane %v923, %v939
    %v953 = vunpack.c.l.b16 %v915
    %v954 = vunpack.c.h.b16 %v915
    %v955 = vunpack.c.l.b16 %v916
    %v956 = vunpack.c.h.b16 %v916
    %v957 = vunpack.c.l.b16 %v917
    %v958 = vunpack.c.h.b16 %v917
    %v959 = vunpack.c.l.b16 %v918
    %v960 = vunpack.c.h.b16 %v918
    %v961 = vunpack.c.l.b16 %v919
    %v962 = vunpack.c.h.b16 %v919
    %v963 = vunpack.c.l.b16 %v920
    %v964 = vunpack.c.h.b16 %v920
    %v965 = vunpack.c.l.b16 %v921
    %v966 = vunpack.c.h.b16 %v921
    %v967 = vunpack.c.l.b16 %v922
    %v968 = vunpack.c.h.b16 %v922
    %v969 = vpack.c.b16 %v957, %v953
    %v970 = vpack.c.b16 %v958, %v954
    %v971 = vpack.c.b16 %v959, %v955
    %v972 = vpack.c.b16 %v960, %v956
    %v973 = vpack.c.b16 %v965, %v961
    %v974 = vpack.c.b16 %v966, %v962
    %v975 = vpack.c.b16 %v967, %v963
    %v976 = vpack.c.b16 %v968, %v964
    %v986 = vsel %vm176, %v914, 0
    %988 = vmatprep.subr.bf16.mxu0 %v970
    %989 = vmatpush1.bf16.msra.mxu0 %v969
    %990 = vmatprep.subr.bf16.mxu0 %v974
    %991 = vmatpush1.bf16.msra.mxu0 %v973
    %992 = vmatprep.subr.bf16.mxu0 0
    %993 = vmatpush1.bf16.msra.mxu0 0
    %994 = vmatprep.subr.bf16.mxu0 0
    %995 = vmatpush1.bf16.msra.mxu0 0
    %996 = vmatprep.subr.bf16.mxu0 0
    %997 = vmatpush1.bf16.msra.mxu0 0
    %998 = vmatprep.subr.bf16.mxu0 0
    %999 = vmatpush1.bf16.msra.mxu0 0
    %1000 = vmatprep.subr.bf16.mxu0 0
    %1001 = vmatpush1.bf16.msra.mxu0 0
    %1002 = vmatprep.subr.bf16.mxu0 0
    %1003 = vmatpush1.bf16.msra.mxu0 0
    %1004 = vmatprep.subr.bf16.mxu0 0
    %1005 = vmatpush1.bf16.msra.mxu0 0
    %1006 = vmatprep.subr.bf16.mxu0 0
    %1007 = vmatpush1.bf16.msra.mxu0 0
    %1008 = vmatprep.subr.bf16.mxu0 0
    %1009 = vmatpush1.bf16.msra.mxu0 0
    %1010 = vmatprep.subr.bf16.mxu0 0
    %1011 = vmatpush1.bf16.msra.mxu0 0
    %1012 = vmatprep.subr.bf16.mxu0 0
    %1013 = vmatpush1.bf16.msra.mxu0 0
    %1014 = vmatprep.subr.bf16.mxu0 0
    %1015 = vmatpush1.bf16.msra.mxu0 0
    %1016 = vmatprep.subr.bf16.mxu0 0
    %1017 = vmatpush1.bf16.msra.mxu0 0
    %1018 = vmatprep.subr.bf16.mxu0 0
    %1019 = vmatpush1.bf16.msra.mxu0 0
    %1020 = vmatprep.mubr.bf16.mxu0 0
    %1021 = vmatmul.mubr.bf16.gmra.mrb[0].mxu0 %v986
    %v1022 = vpop.f32.mrb[0].mxu0
    %v1023 = vadd.f32 %v928, %v1022
    %v1024 = vpop.f32.mrb[0].mxu0
    %v1025 = vadd.f32 %v932, %v1024
    %v1026 = vpop.f32.mrb[0].mxu0
    %v1027 = vadd.f32 %v928, %v1026
    %v1028 = vpop.f32.mrb[0].mxu0
    %v1029 = vadd.f32 %v932, %v1028
    %1030 = vdwg.mxu0
    %1031 = vmatprep.subr.bf16.mxu0 %v972
    %1032 = vmatpush1.bf16.msra.mxu0 %v971
    %1033 = vmatprep.subr.bf16.mxu0 %v976
    %1034 = vmatpush1.bf16.msra.mxu0 %v975
    %1035 = vmatprep.subr.bf16.mxu0 0
    %1036 = vmatpush1.bf16.msra.mxu0 0
    %1037 = vmatprep.subr.bf16.mxu0 0
    %1038 = vmatpush1.bf16.msra.mxu0 0
    %1039 = vmatprep.subr.bf16.mxu0 0
    %1040 = vmatpush1.bf16.msra.mxu0 0
    %1041 = vmatprep.subr.bf16.mxu0 0
    %1042 = vmatpush1.bf16.msra.mxu0 0
    %1043 = vmatprep.subr.bf16.mxu0 0
    %1044 = vmatpush1.bf16.msra.mxu0 0
    %1045 = vmatprep.subr.bf16.mxu0 0
    %1046 = vmatpush1.bf16.msra.mxu0 0
    %1047 = vmatprep.subr.bf16.mxu0 0
    %1048 = vmatpush1.bf16.msra.mxu0 0
    %1049 = vmatprep.subr.bf16.mxu0 0
    %1050 = vmatpush1.bf16.msra.mxu0 0
    %1051 = vmatprep.subr.bf16.mxu0 0
    %1052 = vmatpush1.bf16.msra.mxu0 0
    %1053 = vmatprep.subr.bf16.mxu0 0
    %1054 = vmatpush1.bf16.msra.mxu0 0
    %1055 = vmatprep.subr.bf16.mxu0 0
    %1056 = vmatpush1.bf16.msra.mxu0 0
    %1057 = vmatprep.subr.bf16.mxu0 0
    %1058 = vmatpush1.bf16.msra.mxu0 0
    %1059 = vmatprep.subr.bf16.mxu0 0
    %1060 = vmatpush1.bf16.msra.mxu0 0
    %1061 = vmatprep.subr.bf16.mxu0 0
    %1062 = vmatpush1.bf16.msra.mxu0 0
    %1063 = vmatprep.mubr.bf16.mxu0 0
    %1064 = vmatmul.mubr.bf16.gmra.mrb[0].mxu0 %v986
    %v1065 = vpop.f32.mrb[0].mxu0
    %v1066 = vadd.f32 %v936, %v1065
    %v1067 = vpop.f32.mrb[0].mxu0
    %v1068 = vadd.f32 %v940, %v1067
    %v1069 = vpop.f32.mrb[0].mxu0
    %v1070 = vadd.f32 %v936, %v1069
    %v1071 = vpop.f32.mrb[0].mxu0
    %v1072 = vadd.f32 %v940, %v1071
    %1073 = vdwg.mxu0
    %v1074 = vld [vmem:[#allocation13] sm:$0xff]
    %v1075 = vld [vmem:[#allocation13 + $0x8] sm:$0xff]
    %v1076 = vld [vmem:[#allocation13 + $0x10] sm:$0xff]
    %v1077 = vld [vmem:[#allocation13 + $0x18] sm:$0xff]
    %v1078 = vld [vmem:[#allocation13 + $0x20] sm:$0xff]
    %v1079 = vld [vmem:[#allocation13 + $0x28] sm:$0xff]
    %v1080 = vld [vmem:[#allocation13 + $0x30] sm:$0xff]
    %v1081 = vld [vmem:[#allocation13 + $0x38] sm:$0xff]
    %v1082 = vld [vmem:[#allocation13 + $0x40] sm:$0xff]
    %v1083 = vld [vmem:[#allocation13 + $0x48] sm:$0xff]
    %v1084 = vld [vmem:[#allocation13 + $0x50] sm:$0xff]
    %v1085 = vld [vmem:[#allocation13 + $0x58] sm:$0xff]
    %v1086 = vld [vmem:[#allocation13 + $0x60] sm:$0xff]
    %v1087 = vld [vmem:[#allocation13 + $0x68] sm:$0xff]
    %v1088 = vld [vmem:[#allocation13 + $0x70] sm:$0xff]
    %v1089 = vld [vmem:[#allocation13 + $0x78] sm:$0xff]
    %v1090 = vld [vmem:[#allocation13 + $0x80] sm:$0xff]
    %v1091 = vld [vmem:[#allocation13 + $0x88] sm:$0xff]
    %v1092 = vld [vmem:[#allocation13 + $0x90] sm:$0xff]
    %v1093 = vld [vmem:[#allocation13 + $0x98] sm:$0xff]
    %v1094 = vld [vmem:[#allocation13 + $0xa0] sm:$0xff]
    %v1095 = vld [vmem:[#allocation13 + $0xa8] sm:$0xff]
    %v1096 = vld [vmem:[#allocation13 + $0xb0] sm:$0xff]
    %v1097 = vld [vmem:[#allocation13 + $0xb8] sm:$0xff]
    %v1098 = vld [vmem:[#allocation13 + $0xc0] sm:$0xff]
    %v1099 = vld [vmem:[#allocation13 + $0xc8] sm:$0xff]
    %v1100 = vld [vmem:[#allocation13 + $0xd0] sm:$0xff]
    %v1101 = vld [vmem:[#allocation13 + $0xd8] sm:$0xff]
    %v1102 = vld [vmem:[#allocation13 + $0xe0] sm:$0xff]
    %v1103 = vld [vmem:[#allocation13 + $0xe8] sm:$0xff]
    %v1104 = vld [vmem:[#allocation13 + $0xf0] sm:$0xff]
    %v1105 = vld [vmem:[#allocation13 + $0xf8] sm:$0xff]
    %v1106 = vld [vmem:[#allocation14] sm:$0xff]
    %v1107 = vld [vmem:[#allocation14 + $0x8] sm:$0xff]
    %v1108 = vld [vmem:[#allocation14 + $0x10] sm:$0xff]
    %v1109 = vld [vmem:[#allocation14 + $0x18] sm:$0xff]
    %v1110 = vld [vmem:[#allocation14 + $0x20] sm:$0xff]
    %v1111 = vld [vmem:[#allocation14 + $0x28] sm:$0xff]
    %v1112 = vld [vmem:[#allocation14 + $0x30] sm:$0xff]
    %v1113 = vld [vmem:[#allocation14 + $0x38] sm:$0xff]
    %v1114 = vld [vmem:[#allocation14 + $0x40] sm:$0xff]
    %v1115 = vld [vmem:[#allocation14 + $0x48] sm:$0xff]
    %v1116 = vld [vmem:[#allocation14 + $0x50] sm:$0xff]
    %v1117 = vld [vmem:[#allocation14 + $0x58] sm:$0xff]
    %v1118 = vld [vmem:[#allocation14 + $0x60] sm:$0xff]
    %v1119 = vld [vmem:[#allocation14 + $0x68] sm:$0xff]
    %v1120 = vld [vmem:[#allocation14 + $0x70] sm:$0xff]
    %v1121 = vld [vmem:[#allocation14 + $0x78] sm:$0xff]
    %v1122 = vld [vmem:[#allocation14 + $0x80] sm:$0xff]
    %v1123 = vld [vmem:[#allocation14 + $0x88] sm:$0xff]
    %v1124 = vld [vmem:[#allocation14 + $0x90] sm:$0xff]
    %v1125 = vld [vmem:[#allocation14 + $0x98] sm:$0xff]
    %v1126 = vld [vmem:[#allocation14 + $0xa0] sm:$0xff]
    %v1127 = vld [vmem:[#allocation14 + $0xa8] sm:$0xff]
    %v1128 = vld [vmem:[#allocation14 + $0xb0] sm:$0xff]
    %v1129 = vld [vmem:[#allocation14 + $0xb8] sm:$0xff]
    %v1130 = vld [vmem:[#allocation14 + $0xc0] sm:$0xff]
    %v1131 = vld [vmem:[#allocation14 + $0xc8] sm:$0xff]
    %v1132 = vld [vmem:[#allocation14 + $0xd0] sm:$0xff]
    %v1133 = vld [vmem:[#allocation14 + $0xd8] sm:$0xff]
    %v1134 = vld [vmem:[#allocation14 + $0xe0] sm:$0xff]
    %v1135 = vld [vmem:[#allocation14 + $0xe8] sm:$0xff]
    %v1136 = vld [vmem:[#allocation14 + $0xf0] sm:$0xff]
    %v1137 = vld [vmem:[#allocation14 + $0xf8] sm:$0xff]
    %v1138 = vld [vmem:[#allocation14 + $0x100] sm:$0xff]
    %v1139 = vld [vmem:[#allocation14 + $0x108] sm:$0xff]
    %v1140 = vld [vmem:[#allocation14 + $0x110] sm:$0xff]
    %v1141 = vld [vmem:[#allocation14 + $0x118] sm:$0xff]
    %v1142 = vld [vmem:[#allocation14 + $0x120] sm:$0xff]
    %v1143 = vld [vmem:[#allocation14 + $0x128] sm:$0xff]
    %v1144 = vld [vmem:[#allocation14 + $0x130] sm:$0xff]
    %v1145 = vld [vmem:[#allocation14 + $0x138] sm:$0xff]
    %v1146 = vld [vmem:[#allocation14 + $0x140] sm:$0xff]
    %v1147 = vld [vmem:[#allocation14 + $0x148] sm:$0xff]
    %v1148 = vld [vmem:[#allocation14 + $0x150] sm:$0xff]
    %v1149 = vld [vmem:[#allocation14 + $0x158] sm:$0xff]
    %v1150 = vld [vmem:[#allocation14 + $0x160] sm:$0xff]
    %v1151 = vld [vmem:[#allocation14 + $0x168] sm:$0xff]
    %v1152 = vld [vmem:[#allocation14 + $0x170] sm:$0xff]
    %v1153 = vld [vmem:[#allocation14 + $0x178] sm:$0xff]
    %v1154 = vld [vmem:[#allocation14 + $0x180] sm:$0xff]
    %v1155 = vld [vmem:[#allocation14 + $0x188] sm:$0xff]
    %v1156 = vld [vmem:[#allocation14 + $0x190] sm:$0xff]
    %v1157 = vld [vmem:[#allocation14 + $0x198] sm:$0xff]
    %v1158 = vld [vmem:[#allocation14 + $0x1a0] sm:$0xff]
    %v1159 = vld [vmem:[#allocation14 + $0x1a8] sm:$0xff]
    %v1160 = vld [vmem:[#allocation14 + $0x1b0] sm:$0xff]
    %v1161 = vld [vmem:[#allocation14 + $0x1b8] sm:$0xff]
    %v1162 = vld [vmem:[#allocation14 + $0x1c0] sm:$0xff]
    %v1163 = vld [vmem:[#allocation14 + $0x1c8] sm:$0xff]
    %v1164 = vld [vmem:[#allocation14 + $0x1d0] sm:$0xff]
    %v1165 = vld [vmem:[#allocation14 + $0x1d8] sm:$0xff]
    %v1166 = vld [vmem:[#allocation14 + $0x1e0] sm:$0xff]
    %v1167 = vld [vmem:[#allocation14 + $0x1e8] sm:$0xff]
    %v1168 = vld [vmem:[#allocation14 + $0x1f0] sm:$0xff]
    %v1169 = vld [vmem:[#allocation14 + $0x1f8] sm:$0xff]
    %v1170 = vld [vmem:[%s11] sm:$0xf]
    %v1203 = vunpack.c.l.b16 %v1074
    %v1204 = vunpack.c.h.b16 %v1074
    %v1205 = vunpack.c.l.b16 %v1075
    %v1206 = vunpack.c.h.b16 %v1075
    %v1207 = vunpack.c.l.b16 %v1076
    %v1208 = vunpack.c.h.b16 %v1076
    %v1209 = vunpack.c.l.b16 %v1077
    %v1210 = vunpack.c.h.b16 %v1077
    %v1211 = vunpack.c.l.b16 %v1078
    %v1212 = vunpack.c.h.b16 %v1078
    %v1213 = vunpack.c.l.b16 %v1079
    %v1214 = vunpack.c.h.b16 %v1079
    %v1215 = vunpack.c.l.b16 %v1080
    %v1216 = vunpack.c.h.b16 %v1080
    %v1217 = vunpack.c.l.b16 %v1081
    %v1218 = vunpack.c.h.b16 %v1081
    %v1219 = vunpack.c.l.b16 %v1082
    %v1220 = vunpack.c.h.b16 %v1082
    %v1221 = vunpack.c.l.b16 %v1083
    %v1222 = vunpack.c.h.b16 %v1083
    %v1223 = vunpack.c.l.b16 %v1084
    %v1224 = vunpack.c.h.b16 %v1084
    %v1225 = vunpack.c.l.b16 %v1085
    %v1226 = vunpack.c.h.b16 %v1085
    %v1227 = vunpack.c.l.b16 %v1086
    %v1228 = vunpack.c.h.b16 %v1086
    %v1229 = vunpack.c.l.b16 %v1087
    %v1230 = vunpack.c.h.b16 %v1087
    %v1231 = vunpack.c.l.b16 %v1088
    %v1232 = vunpack.c.h.b16 %v1088
    %v1233 = vunpack.c.l.b16 %v1089
    %v1234 = vunpack.c.h.b16 %v1089
    %v1235 = vunpack.c.l.b16 %v1090
    %v1236 = vunpack.c.h.b16 %v1090
    %v1237 = vunpack.c.l.b16 %v1091
    %v1238 = vunpack.c.h.b16 %v1091
    %v1239 = vunpack.c.l.b16 %v1092
    %v1240 = vunpack.c.h.b16 %v1092
    %v1241 = vunpack.c.l.b16 %v1093
    %v1242 = vunpack.c.h.b16 %v1093
    %v1243 = vunpack.c.l.b16 %v1094
    %v1244 = vunpack.c.h.b16 %v1094
    %v1245 = vunpack.c.l.b16 %v1095
    %v1246 = vunpack.c.h.b16 %v1095
    %v1247 = vunpack.c.l.b16 %v1096
    %v1248 = vunpack.c.h.b16 %v1096
    %v1249 = vunpack.c.l.b16 %v1097
    %v1250 = vunpack.c.h.b16 %v1097
    %v1251 = vunpack.c.l.b16 %v1098
    %v1252 = vunpack.c.h.b16 %v1098
    %v1253 = vunpack.c.l.b16 %v1099
    %v1254 = vunpack.c.h.b16 %v1099
    %v1255 = vunpack.c.l.b16 %v1100
    %v1256 = vunpack.c.h.b16 %v1100
    %v1257 = vunpack.c.l.b16 %v1101
    %v1258 = vunpack.c.h.b16 %v1101
    %v1259 = vunpack.c.l.b16 %v1102
    %v1260 = vunpack.c.h.b16 %v1102
    %v1261 = vunpack.c.l.b16 %v1103
    %v1262 = vunpack.c.h.b16 %v1103
    %v1263 = vunpack.c.l.b16 %v1104
    %v1264 = vunpack.c.h.b16 %v1104
    %v1265 = vunpack.c.l.b16 %v1105
    %v1266 = vunpack.c.h.b16 %v1105
    %v1267 = vpack.c.b16 %v1207, %v1203
    %v1268 = vpack.c.b16 %v1208, %v1204
    %v1269 = vpack.c.b16 %v1209, %v1205
    %v1270 = vpack.c.b16 %v1210, %v1206
    %v1271 = vpack.c.b16 %v1215, %v1211
    %v1272 = vpack.c.b16 %v1216, %v1212
    %v1273 = vpack.c.b16 %v1217, %v1213
    %v1274 = vpack.c.b16 %v1218, %v1214
    %v1275 = vpack.c.b16 %v1223, %v1219
    %v1276 = vpack.c.b16 %v1224, %v1220
    %v1277 = vpack.c.b16 %v1225, %v1221
    %v1278 = vpack.c.b16 %v1226, %v1222
    %v1279 = vpack.c.b16 %v1231, %v1227
    %v1280 = vpack.c.b16 %v1232, %v1228
    %v1281 = vpack.c.b16 %v1233, %v1229
    %v1282 = vpack.c.b16 %v1234, %v1230
    %v1283 = vpack.c.b16 %v1239, %v1235
    %v1284 = vpack.c.b16 %v1240, %v1236
    %v1285 = vpack.c.b16 %v1241, %v1237
    %v1286 = vpack.c.b16 %v1242, %v1238
    %v1287 = vpack.c.b16 %v1247, %v1243
    %v1288 = vpack.c.b16 %v1248, %v1244
    %v1289 = vpack.c.b16 %v1249, %v1245
    %v1290 = vpack.c.b16 %v1250, %v1246
    %v1291 = vpack.c.b16 %v1255, %v1251
    %v1292 = vpack.c.b16 %v1256, %v1252
    %v1293 = vpack.c.b16 %v1257, %v1253
    %v1294 = vpack.c.b16 %v1258, %v1254
    %v1295 = vpack.c.b16 %v1263, %v1259
    %v1296 = vpack.c.b16 %v1264, %v1260
    %v1297 = vpack.c.b16 %v1265, %v1261
    %v1298 = vpack.c.b16 %v1266, %v1262
    %1331 = vmatprep.subr.bf16.mxu0 %v1268
    %1332 = vmatpush1.bf16.msra.mxu0 %v1267
    %1333 = vmatprep.subr.bf16.mxu0 %v1272
    %1334 = vmatpush1.bf16.msra.mxu0 %v1271
    %1335 = vmatprep.subr.bf16.mxu0 %v1276
    %1336 = vmatpush1.bf16.msra.mxu0 %v1275
    %1337 = vmatprep.subr.bf16.mxu0 %v1280
    %1338 = vmatpush1.bf16.msra.mxu0 %v1279
    %1339 = vmatprep.subr.bf16.mxu0 %v1284
    %1340 = vmatpush1.bf16.msra.mxu0 %v1283
    %1341 = vmatprep.subr.bf16.mxu0 %v1288
    %1342 = vmatpush1.bf16.msra.mxu0 %v1287
    %1343 = vmatprep.subr.bf16.mxu0 %v1292
    %1344 = vmatpush1.bf16.msra.mxu0 %v1291
    %1345 = vmatprep.subr.bf16.mxu0 %v1296
    %1346 = vmatpush1.bf16.msra.mxu0 %v1295
    %1347 = vmatprep.subr.bf16.mxu0 0
    %1348 = vmatpush1.bf16.msra.mxu0 0
    %1349 = vmatprep.subr.bf16.mxu0 0
    %1350 = vmatpush1.bf16.msra.mxu0 0
    %1351 = vmatprep.subr.bf16.mxu0 0
    %1352 = vmatpush1.bf16.msra.mxu0 0
    %1353 = vmatprep.subr.bf16.mxu0 0
    %1354 = vmatpush1.bf16.msra.mxu0 0
    %1355 = vmatprep.subr.bf16.mxu0 0
    %1356 = vmatpush1.bf16.msra.mxu0 0
    %1357 = vmatprep.subr.bf16.mxu0 0
    %1358 = vmatpush1.bf16.msra.mxu0 0
    %1359 = vmatprep.subr.bf16.mxu0 0
    %1360 = vmatpush1.bf16.msra.mxu0 0
    %1361 = vmatprep.subr.bf16.mxu0 0
    %1362 = vmatpush1.bf16.msra.mxu0 0
    %1363 = vmatprep.mubr.bf16.mxu0 0
    %1364 = vmatmul.mubr.bf16.gmra.mrb[0].mxu0 0
    %v1365 = vpop.f32.mrb[0].mxu0
    %v1366 = vadd.f32 0.0, %v1365
    %v1367 = vpop.f32.mrb[0].mxu0
    %v1368 = vadd.f32 0.0, %v1367
    %v1369 = vpop.f32.mrb[0].mxu0
    %v1370 = vpop.f32.mrb[0].mxu0
    %1371 = vdwg.mxu0
    %1372 = vmatprep.subr.bf16.mxu0 %v1270
    %1373 = vmatpush1.bf16.msra.mxu0 %v1269
    %1374 = vmatprep.subr.bf16.mxu0 %v1274
    %1375 = vmatpush1.bf16.msra.mxu0 %v1273
    %1376 = vmatprep.subr.bf16.mxu0 %v1278
    %1377 = vmatpush1.bf16.msra.mxu0 %v1277
    %1378 = vmatprep.subr.bf16.mxu0 %v1282
    %1379 = vmatpush1.bf16.msra.mxu0 %v1281
    %1380 = vmatprep.subr.bf16.mxu0 %v1286
    %1381 = vmatpush1.bf16.msra.mxu0 %v1285
    %1382 = vmatprep.subr.bf16.mxu0 %v1290
    %1383 = vmatpush1.bf16.msra.mxu0 %v1289
    %1384 = vmatprep.subr.bf16.mxu0 %v1294
    %1385 = vmatpush1.bf16.msra.mxu0 %v1293
    %1386 = vmatprep.subr.bf16.mxu0 %v1298
    %1387 = vmatpush1.bf16.msra.mxu0 %v1297
    %1388 = vmatprep.subr.bf16.mxu0 0
    %1389 = vmatpush1.bf16.msra.mxu0 0
    %1390 = vmatprep.subr.bf16.mxu0 0
    %1391 = vmatpush1.bf16.msra.mxu0 0
    %1392 = vmatprep.subr.bf16.mxu0 0
    %1393 = vmatpush1.bf16.msra.mxu0 0
    %1394 = vmatprep.subr.bf16.mxu0 0
    %1395 = vmatpush1.bf16.msra.mxu0 0
    %1396 = vmatprep.subr.bf16.mxu0 0
    %1397 = vmatpush1.bf16.msra.mxu0 0
    %1398 = vmatprep.subr.bf16.mxu0 0
    %1399 = vmatpush1.bf16.msra.mxu0 0
    %1400 = vmatprep.subr.bf16.mxu0 0
    %1401 = vmatpush1.bf16.msra.mxu0 0
    %1402 = vmatprep.subr.bf16.mxu0 0
    %1403 = vmatpush1.bf16.msra.mxu0 0
    %1404 = vmatprep.mubr.bf16.mxu0 0
    %1405 = vmatmul.mubr.bf16.gmra.mrb[0].mxu0 0
    %v1406 = vpop.f32.mrb[0].mxu0
    %v1407 = vadd.f32 0.0, %v1406
    %v1408 = vpop.f32.mrb[0].mxu0
    %v1409 = vadd.f32 0.0, %v1408
    %v1410 = vpop.f32.mrb[0].mxu0
    %v1411 = vpop.f32.mrb[0].mxu0
    %1412 = vdwg.mxu0
    %v1413 = vadd.f32 %v1023, %v1366
    %v1414 = vadd.f32 %v1025, %v1368
    %v1415 = vadd.f32 %v1066, %v1407
    %v1416 = vadd.f32 %v1068, %v1409
    %v1417 = vxor.u32 %v1413, 2147483648
    %v1418 = vmul.f32 %v1417, 1.442695
    %v1419 = vpow.pop %v1418
    %v1420 = vadd.f32 %v1419, 1.0
    %v1421 = vrcp.pop %v1420
    %v1422 = vmul.f32 1.0, %v1421
    %v1423 = vxor.u32 %v1414, 2147483648
    %v1424 = vmul.f32 %v1423, 1.442695
    %v1425 = vpow.pop %v1424
    %v1426 = vadd.f32 %v1425, 1.0
    %v1427 = vrcp.pop %v1426
    %v1428 = vmul.f32 1.0, %v1427
    %v1429 = vtanh.pop %v1415
    %v1430 = vxor.u32 %v1416, 2147483648
    %v1431 = vmul.f32 %v1430, 1.442695
    %v1432 = vpow.pop %v1431
    %v1433 = vadd.f32 %v1432, 1.0
    %v1434 = vrcp.pop %v1433
    %v1435 = vmul.f32 1.0, %v1434
    %v1436 = vmul.f32 %v1428, 0.0
    %v1437 = vmul.f32 %v1422, %v1429
    %v1438 = vadd.f32 %v1436, %v1437
    %v1439 = vtanh.pop %v1438
    %v1440 = vmul.f32 %v1435, %v1439
    %v1441 = vpack.c.bf16 %v1440, %v1440
    %v1442 = vpack.c.bf16 0.0, 0.0
    %v1444 = vlaneseq
    %v1445 = vshrl.u32 %v1444, 7
    %v1446 = vsub.s32 0, %v1445
    %v1447 = vrot.slane %v1170, %v1446
    %v1448 = vlaneseq
    %v1449 = vshrl.u32 %v1448, 7
    %v1450 = vsub.s32 1, %v1449
    %v1451 = vrot.slane %v1170, %v1450
    %v1452 = vlaneseq
    %v1453 = vshrl.u32 %v1452, 7
    %v1454 = vsub.s32 2, %v1453
    %v1455 = vrot.slane %v1170, %v1454
    %v1456 = vlaneseq
    %v1457 = vshrl.u32 %v1456, 7
    %v1458 = vsub.s32 3, %v1457
    %v1459 = vrot.slane %v1170, %v1458
    %v1528 = vunpack.c.l.b16 %v1106
    %v1529 = vunpack.c.h.b16 %v1106
    %v1530 = vunpack.c.l.b16 %v1107
    %v1531 = vunpack.c.h.b16 %v1107
    %v1532 = vunpack.c.l.b16 %v1108
    %v1533 = vunpack.c.h.b16 %v1108
    %v1534 = vunpack.c.l.b16 %v1109
    %v1535 = vunpack.c.h.b16 %v1109
    %v1536 = vunpack.c.l.b16 %v1110
    %v1537 = vunpack.c.h.b16 %v1110
    %v1538 = vunpack.c.l.b16 %v1111
    %v1539 = vunpack.c.h.b16 %v1111
    %v1540 = vunpack.c.l.b16 %v1112
    %v1541 = vunpack.c.h.b16 %v1112
    %v1542 = vunpack.c.l.b16 %v1113
    %v1543 = vunpack.c.h.b16 %v1113
    %v1544 = vunpack.c.l.b16 %v1114
    %v1545 = vunpack.c.h.b16 %v1114
    %v1546 = vunpack.c.l.b16 %v1115
    %v1547 = vunpack.c.h.b16 %v1115
    %v1548 = vunpack.c.l.b16 %v1116
    %v1549 = vunpack.c.h.b16 %v1116
    %v1550 = vunpack.c.l.b16 %v1117
    %v1551 = vunpack.c.h.b16 %v1117
    %v1552 = vunpack.c.l.b16 %v1118
    %v1553 = vunpack.c.h.b16 %v1118
    %v1554 = vunpack.c.l.b16 %v1119
    %v1555 = vunpack.c.h.b16 %v1119
    %v1556 = vunpack.c.l.b16 %v1120
    %v1557 = vunpack.c.h.b16 %v1120
    %v1558 = vunpack.c.l.b16 %v1121
    %v1559 = vunpack.c.h.b16 %v1121
    %v1560 = vunpack.c.l.b16 %v1122
    %v1561 = vunpack.c.h.b16 %v1122
    %v1562 = vunpack.c.l.b16 %v1123
    %v1563 = vunpack.c.h.b16 %v1123
    %v1564 = vunpack.c.l.b16 %v1124
    %v1565 = vunpack.c.h.b16 %v1124
    %v1566 = vunpack.c.l.b16 %v1125
    %v1567 = vunpack.c.h.b16 %v1125
    %v1568 = vunpack.c.l.b16 %v1126
    %v1569 = vunpack.c.h.b16 %v1126
    %v1570 = vunpack.c.l.b16 %v1127
    %v1571 = vunpack.c.h.b16 %v1127
    %v1572 = vunpack.c.l.b16 %v1128
    %v1573 = vunpack.c.h.b16 %v1128
    %v1574 = vunpack.c.l.b16 %v1129
    %v1575 = vunpack.c.h.b16 %v1129
    %v1576 = vunpack.c.l.b16 %v1130
    %v1577 = vunpack.c.h.b16 %v1130
    %v1578 = vunpack.c.l.b16 %v1131
    %v1579 = vunpack.c.h.b16 %v1131
    %v1580 = vunpack.c.l.b16 %v1132
    %v1581 = vunpack.c.h.b16 %v1132
    %v1582 = vunpack.c.l.b16 %v1133
    %v1583 = vunpack.c.h.b16 %v1133
    %v1584 = vunpack.c.l.b16 %v1134
    %v1585 = vunpack.c.h.b16 %v1134
    %v1586 = vunpack.c.l.b16 %v1135
    %v1587 = vunpack.c.h.b16 %v1135
    %v1588 = vunpack.c.l.b16 %v1136
    %v1589 = vunpack.c.h.b16 %v1136
    %v1590 = vunpack.c.l.b16 %v1137
    %v1591 = vunpack.c.h.b16 %v1137
    %v1592 = vunpack.c.l.b16 %v1138
    %v1593 = vunpack.c.h.b16 %v1138
    %v1594 = vunpack.c.l.b16 %v1139
    %v1595 = vunpack.c.h.b16 %v1139
    %v1596 = vunpack.c.l.b16 %v1140
    %v1597 = vunpack.c.h.b16 %v1140
    %v1598 = vunpack.c.l.b16 %v1141
    %v1599 = vunpack.c.h.b16 %v1141
    %v1600 = vunpack.c.l.b16 %v1142
    %v1601 = vunpack.c.h.b16 %v1142
    %v1602 = vunpack.c.l.b16 %v1143
    %v1603 = vunpack.c.h.b16 %v1143
    %v1604 = vunpack.c.l.b16 %v1144
    %v1605 = vunpack.c.h.b16 %v1144
    %v1606 = vunpack.c.l.b16 %v1145
    %v1607 = vunpack.c.h.b16 %v1145
    %v1608 = vunpack.c.l.b16 %v1146
    %v1609 = vunpack.c.h.b16 %v1146
    %v1610 = vunpack.c.l.b16 %v1147
    %v1611 = vunpack.c.h.b16 %v1147
    %v1612 = vunpack.c.l.b16 %v1148
    %v1613 = vunpack.c.h.b16 %v1148
    %v1614 = vunpack.c.l.b16 %v1149
    %v1615 = vunpack.c.h.b16 %v1149
    %v1616 = vunpack.c.l.b16 %v1150
    %v1617 = vunpack.c.h.b16 %v1150
    %v1618 = vunpack.c.l.b16 %v1151
    %v1619 = vunpack.c.h.b16 %v1151
    %v1620 = vunpack.c.l.b16 %v1152
    %v1621 = vunpack.c.h.b16 %v1152
    %v1622 = vunpack.c.l.b16 %v1153
    %v1623 = vunpack.c.h.b16 %v1153
    %v1624 = vunpack.c.l.b16 %v1154
    %v1625 = vunpack.c.h.b16 %v1154
    %v1626 = vunpack.c.l.b16 %v1155
    %v1627 = vunpack.c.h.b16 %v1155
    %v1628 = vunpack.c.l.b16 %v1156
    %v1629 = vunpack.c.h.b16 %v1156
    %v1630 = vunpack.c.l.b16 %v1157
    %v1631 = vunpack.c.h.b16 %v1157
    %v1632 = vunpack.c.l.b16 %v1158
    %v1633 = vunpack.c.h.b16 %v1158
    %v1634 = vunpack.c.l.b16 %v1159
    %v1635 = vunpack.c.h.b16 %v1159
    %v1636 = vunpack.c.l.b16 %v1160
    %v1637 = vunpack.c.h.b16 %v1160
    %v1638 = vunpack.c.l.b16 %v1161
    %v1639 = vunpack.c.h.b16 %v1161
    %v1640 = vunpack.c.l.b16 %v1162
    %v1641 = vunpack.c.h.b16 %v1162
    %v1642 = vunpack.c.l.b16 %v1163
    %v1643 = vunpack.c.h.b16 %v1163
    %v1644 = vunpack.c.l.b16 %v1164
    %v1645 = vunpack.c.h.b16 %v1164
    %v1646 = vunpack.c.l.b16 %v1165
    %v1647 = vunpack.c.h.b16 %v1165
    %v1648 = vunpack.c.l.b16 %v1166
    %v1649 = vunpack.c.h.b16 %v1166
    %v1650 = vunpack.c.l.b16 %v1167
    %v1651 = vunpack.c.h.b16 %v1167
    %v1652 = vunpack.c.l.b16 %v1168
    %v1653 = vunpack.c.h.b16 %v1168
    %v1654 = vunpack.c.l.b16 %v1169
    %v1655 = vunpack.c.h.b16 %v1169
    %v1656 = vpack.c.b16 %v1532, %v1528
    %v1657 = vpack.c.b16 %v1533, %v1529
    %v1658 = vpack.c.b16 %v1534, %v1530
    %v1659 = vpack.c.b16 %v1535, %v1531
    %v1660 = vpack.c.b16 %v1540, %v1536
    %v1661 = vpack.c.b16 %v1541, %v1537
    %v1662 = vpack.c.b16 %v1542, %v1538
    %v1663 = vpack.c.b16 %v1543, %v1539
    %v1664 = vpack.c.b16 %v1548, %v1544
    %v1665 = vpack.c.b16 %v1549, %v1545
    %v1666 = vpack.c.b16 %v1550, %v1546
    %v1667 = vpack.c.b16 %v1551, %v1547
    %v1668 = vpack.c.b16 %v1556, %v1552
    %v1669 = vpack.c.b16 %v1557, %v1553
    %v1670 = vpack.c.b16 %v1558, %v1554
    %v1671 = vpack.c.b16 %v1559, %v1555
    %v1672 = vpack.c.b16 %v1564, %v1560
    %v1673 = vpack.c.b16 %v1565, %v1561
    %v1674 = vpack.c.b16 %v1566, %v1562
    %v1675 = vpack.c.b16 %v1567, %v1563
    %v1676 = vpack.c.b16 %v1572, %v1568
    %v1677 = vpack.c.b16 %v1573, %v1569
    %v1678 = vpack.c.b16 %v1574, %v1570
    %v1679 = vpack.c.b16 %v1575, %v1571
    %v1680 = vpack.c.b16 %v1580, %v1576
    %v1681 = vpack.c.b16 %v1581, %v1577
    %v1682 = vpack.c.b16 %v1582, %v1578
    %v1683 = vpack.c.b16 %v1583, %v1579
    %v1684 = vpack.c.b16 %v1588, %v1584
    %v1685 = vpack.c.b16 %v1589, %v1585
    %v1686 = vpack.c.b16 %v1590, %v1586
    %v1687 = vpack.c.b16 %v1591, %v1587
    %v1688 = vpack.c.b16 %v1596, %v1592
    %v1689 = vpack.c.b16 %v1597, %v1593
    %v1690 = vpack.c.b16 %v1598, %v1594
    %v1691 = vpack.c.b16 %v1599, %v1595
    %v1692 = vpack.c.b16 %v1604, %v1600
    %v1693 = vpack.c.b16 %v1605, %v1601
    %v1694 = vpack.c.b16 %v1606, %v1602
    %v1695 = vpack.c.b16 %v1607, %v1603
    %v1696 = vpack.c.b16 %v1612, %v1608
    %v1697 = vpack.c.b16 %v1613, %v1609
    %v1698 = vpack.c.b16 %v1614, %v1610
    %v1699 = vpack.c.b16 %v1615, %v1611
    %v1700 = vpack.c.b16 %v1620, %v1616
    %v1701 = vpack.c.b16 %v1621, %v1617
    %v1702 = vpack.c.b16 %v1622, %v1618
    %v1703 = vpack.c.b16 %v1623, %v1619
    %v1704 = vpack.c.b16 %v1628, %v1624
    %v1705 = vpack.c.b16 %v1629, %v1625
    %v1706 = vpack.c.b16 %v1630, %v1626
    %v1707 = vpack.c.b16 %v1631, %v1627
    %v1708 = vpack.c.b16 %v1636, %v1632
    %v1709 = vpack.c.b16 %v1637, %v1633
    %v1710 = vpack.c.b16 %v1638, %v1634
    %v1711 = vpack.c.b16 %v1639, %v1635
    %v1712 = vpack.c.b16 %v1644, %v1640
    %v1713 = vpack.c.b16 %v1645, %v1641
    %v1714 = vpack.c.b16 %v1646, %v1642
    %v1715 = vpack.c.b16 %v1647, %v1643
    %v1716 = vpack.c.b16 %v1652, %v1648
    %v1717 = vpack.c.b16 %v1653, %v1649
    %v1718 = vpack.c.b16 %v1654, %v1650
    %v1719 = vpack.c.b16 %v1655, %v1651
    %1784 = vmatprep.subr.bf16.mxu0 %v1657
    %1785 = vmatpush1.bf16.msra.mxu0 %v1656
    %1786 = vmatprep.subr.bf16.mxu0 %v1661
    %1787 = vmatpush1.bf16.msra.mxu0 %v1660
    %1788 = vmatprep.subr.bf16.mxu0 %v1665
    %1789 = vmatpush1.bf16.msra.mxu0 %v1664
    %1790 = vmatprep.subr.bf16.mxu0 %v1669
    %1791 = vmatpush1.bf16.msra.mxu0 %v1668
    %1792 = vmatprep.subr.bf16.mxu0 %v1673
    %1793 = vmatpush1.bf16.msra.mxu0 %v1672
    %1794 = vmatprep.subr.bf16.mxu0 %v1677
    %1795 = vmatpush1.bf16.msra.mxu0 %v1676
    %1796 = vmatprep.subr.bf16.mxu0 %v1681
    %1797 = vmatpush1.bf16.msra.mxu0 %v1680
    %1798 = vmatprep.subr.bf16.mxu0 %v1685
    %1799 = vmatpush1.bf16.msra.mxu0 %v1684
    %1800 = vmatprep.subr.bf16.mxu0 %v1689
    %1801 = vmatpush1.bf16.msra.mxu0 %v1688
    %1802 = vmatprep.subr.bf16.mxu0 %v1693
    %1803 = vmatpush1.bf16.msra.mxu0 %v1692
    %1804 = vmatprep.subr.bf16.mxu0 %v1697
    %1805 = vmatpush1.bf16.msra.mxu0 %v1696
    %1806 = vmatprep.subr.bf16.mxu0 %v1701
    %1807 = vmatpush1.bf16.msra.mxu0 %v1700
    %1808 = vmatprep.subr.bf16.mxu0 %v1705
    %1809 = vmatpush1.bf16.msra.mxu0 %v1704
    %1810 = vmatprep.subr.bf16.mxu0 %v1709
    %1811 = vmatpush1.bf16.msra.mxu0 %v1708
    %1812 = vmatprep.subr.bf16.mxu0 %v1713
    %1813 = vmatpush1.bf16.msra.mxu0 %v1712
    %1814 = vmatprep.subr.bf16.mxu0 %v1717
    %1815 = vmatpush1.bf16.msra.mxu0 %v1716
    %1816 = vmatprep.mubr.bf16.mxu0 %v1442
    %1817 = vmatmul.mubr.bf16.gmra.mrb[0].mxu0 %v1441
    %v1818 = vpop.f32.mrb[0].mxu0
    %v1819 = vadd.f32 %v1447, %v1818
    %v1820 = vpop.f32.mrb[0].mxu0
    %v1821 = vadd.f32 %v1451, %v1820
    %v1822 = vpop.f32.mrb[0].mxu0
    %v1823 = vpop.f32.mrb[0].mxu0
    %1824 = vdwg.mxu0
    %1825 = vmatprep.subr.bf16.mxu0 %v1659
    %1826 = vmatpush1.bf16.msra.mxu0 %v1658
    %1827 = vmatprep.subr.bf16.mxu0 %v1663
    %1828 = vmatpush1.bf16.msra.mxu0 %v1662
    %1829 = vmatprep.subr.bf16.mxu0 %v1667
    %1830 = vmatpush1.bf16.msra.mxu0 %v1666
    %1831 = vmatprep.subr.bf16.mxu0 %v1671
    %1832 = vmatpush1.bf16.msra.mxu0 %v1670
    %1833 = vmatprep.subr.bf16.mxu0 %v1675
    %1834 = vmatpush1.bf16.msra.mxu0 %v1674
    %1835 = vmatprep.subr.bf16.mxu0 %v1679
    %1836 = vmatpush1.bf16.msra.mxu0 %v1678
    %1837 = vmatprep.subr.bf16.mxu0 %v1683
    %1838 = vmatpush1.bf16.msra.mxu0 %v1682
    %1839 = vmatprep.subr.bf16.mxu0 %v1687
    %1840 = vmatpush1.bf16.msra.mxu0 %v1686
    %1841 = vmatprep.subr.bf16.mxu0 %v1691
    %1842 = vmatpush1.bf16.msra.mxu0 %v1690
    %1843 = vmatprep.subr.bf16.mxu0 %v1695
    %1844 = vmatpush1.bf16.msra.mxu0 %v1694
    %1845 = vmatprep.subr.bf16.mxu0 %v1699
    %1846 = vmatpush1.bf16.msra.mxu0 %v1698
    %1847 = vmatprep.subr.bf16.mxu0 %v1703
    %1848 = vmatpush1.bf16.msra.mxu0 %v1702
    %1849 = vmatprep.subr.bf16.mxu0 %v1707
    %1850 = vmatpush1.bf16.msra.mxu0 %v1706
    %1851 = vmatprep.subr.bf16.mxu0 %v1711
    %1852 = vmatpush1.bf16.msra.mxu0 %v1710
    %1853 = vmatprep.subr.bf16.mxu0 %v1715
    %1854 = vmatpush1.bf16.msra.mxu0 %v1714
    %1855 = vmatprep.subr.bf16.mxu0 %v1719
    %1856 = vmatpush1.bf16.msra.mxu0 %v1718
    %1857 = vmatprep.mubr.bf16.mxu0 %v1442
    %1858 = vmatmul.mubr.bf16.gmra.mrb[0].mxu0 %v1441
    %v1859 = vpop.f32.mrb[0].mxu0
    %v1860 = vadd.f32 %v1455, %v1859
    %v1861 = vpop.f32.mrb[0].mxu0
    %v1862 = vadd.f32 %v1459, %v1861
    %v1863 = vpop.f32.mrb[0].mxu0
    %v1864 = vpop.f32.mrb[0].mxu0
    %1865 = vdwg.mxu0
    %v1866 = vxor.u32 %v1819, 2147483648
    %v1867 = vmul.f32 %v1866, 1.442695
    %v1868 = vpow.pop %v1867
    %v1869 = vadd.f32 %v1868, 1.0
    %v1870 = vrcp.pop %v1869
    %v1871 = vmul.f32 1.0, %v1870
    %v1872 = vxor.u32 %v1821, 2147483648
    %v1873 = vmul.f32 %v1872, 1.442695
    %v1874 = vpow.pop %v1873
    %v1875 = vadd.f32 %v1874, 1.0
    %v1876 = vrcp.pop %v1875
    %v1877 = vmul.f32 1.0, %v1876
    %v1878 = vtanh.pop %v1860
    %v1879 = vxor.u32 %v1862, 2147483648
    %v1880 = vmul.f32 %v1879, 1.442695
    %v1881 = vpow.pop %v1880
    %v1882 = vadd.f32 %v1881, 1.0
    %v1883 = vrcp.pop %v1882
    %v1884 = vmul.f32 1.0, %v1883
    %v1885 = vmul.f32 %v1877, 0.0
    %v1886 = vmul.f32 %v1871, %v1878
    %v1887 = vadd.f32 %v1885, %v1886
    %v1888 = vtanh.pop %v1887
    %v1889 = vmul.f32 %v1884, %v1888
    %v1892 = vunpack.c.l.s4 1966171168
    %v1893 = vunpack.c.0.s8 %v1892
    %v1894 = vlaneseq
    %v1895 = vshrl.u32 %v1894, 7
    %v1896 = vsub.s32 %v1893, %v1895
    %v1897 = vrot.slane %v1889, %v1896
    %v1898 = vcombine.high %v1897, %v1897
    %v1900 = vunpack.c.l.s4 1966171168
    %v1901 = vunpack.c.0.s8 %v1900
    %v1902 = vlaneseq
    %v1903 = vshrl.u32 %v1902, 7
    %v1904 = vsub.s32 %v1901, %v1903
    %v1905 = vrot.slane %v1897, %v1904
    %v1907 = vunpack.c.l.s4 1966171168
    %v1908 = vunpack.c.0.s8 %v1907
    %v1909 = vlaneseq
    %v1910 = vshrl.u32 %v1909, 7
    %v1911 = vsub.s32 %v1908, %v1910
    %v1912 = vrot.slane %v1898, %v1911
    %1915 = vst [vmem:[#allocation16] sm:$0x1] %v1905
    %1916 = vst [vmem:[#allocation16 + $0x8] sm:$0x1] %v1912
    %1917 = vmatprep.subr.bf16.mxu0 %v1268
    %1918 = vmatpush1.bf16.msra.mxu0 %v1267
    %1919 = vmatprep.subr.bf16.mxu0 %v1272
    %1920 = vmatpush1.bf16.msra.mxu0 %v1271
    %1921 = vmatprep.subr.bf16.mxu0 %v1276
    %1922 = vmatpush1.bf16.msra.mxu0 %v1275
    %1923 = vmatprep.subr.bf16.mxu0 %v1280
    %1924 = vmatpush1.bf16.msra.mxu0 %v1279
    %1925 = vmatprep.subr.bf16.mxu0 %v1284
    %1926 = vmatpush1.bf16.msra.mxu0 %v1283
    %1927 = vmatprep.subr.bf16.mxu0 %v1288
    %1928 = vmatpush1.bf16.msra.mxu0 %v1287
    %1929 = vmatprep.subr.bf16.mxu0 %v1292
    %1930 = vmatpush1.bf16.msra.mxu0 %v1291
    %1931 = vmatprep.subr.bf16.mxu0 %v1296
    %1932 = vmatpush1.bf16.msra.mxu0 %v1295
    %1933 = vmatprep.subr.bf16.mxu0 0
    %1934 = vmatpush1.bf16.msra.mxu0 0
    %1935 = vmatprep.subr.bf16.mxu0 0
    %1936 = vmatpush1.bf16.msra.mxu0 0
    %1937 = vmatprep.subr.bf16.mxu0 0
    %1938 = vmatpush1.bf16.msra.mxu0 0
    %1939 = vmatprep.subr.bf16.mxu0 0
    %1940 = vmatpush1.bf16.msra.mxu0 0
    %1941 = vmatprep.subr.bf16.mxu0 0
    %1942 = vmatpush1.bf16.msra.mxu0 0
    %1943 = vmatprep.subr.bf16.mxu0 0
    %1944 = vmatpush1.bf16.msra.mxu0 0
    %1945 = vmatprep.subr.bf16.mxu0 0
    %1946 = vmatpush1.bf16.msra.mxu0 0
    %1947 = vmatprep.subr.bf16.mxu0 0
    %1948 = vmatpush1.bf16.msra.mxu0 0
    %1949 = vmatprep.mubr.bf16.mxu0 0
    %1950 = vmatmul.mubr.bf16.gmra.mrb[0].mxu0 %v1441
    %v1951 = vpop.f32.mrb[0].mxu0
    %v1952 = vadd.f32 0.0, %v1951
    %v1953 = vpop.f32.mrb[0].mxu0
    %v1954 = vadd.f32 0.0, %v1953
    %v1955 = vpop.f32.mrb[0].mxu0
    %v1956 = vpop.f32.mrb[0].mxu0
    %1957 = vdwg.mxu0
    %1958 = vmatprep.subr.bf16.mxu0 %v1270
    %1959 = vmatpush1.bf16.msra.mxu0 %v1269
    %1960 = vmatprep.subr.bf16.mxu0 %v1274
    %1961 = vmatpush1.bf16.msra.mxu0 %v1273
    %1962 = vmatprep.subr.bf16.mxu0 %v1278
    %1963 = vmatpush1.bf16.msra.mxu0 %v1277
    %1964 = vmatprep.subr.bf16.mxu0 %v1282
    %1965 = vmatpush1.bf16.msra.mxu0 %v1281
    %1966 = vmatprep.subr.bf16.mxu0 %v1286
    %1967 = vmatpush1.bf16.msra.mxu0 %v1285
    %1968 = vmatprep.subr.bf16.mxu0 %v1290
    %1969 = vmatpush1.bf16.msra.mxu0 %v1289
    %1970 = vmatprep.subr.bf16.mxu0 %v1294
    %1971 = vmatpush1.bf16.msra.mxu0 %v1293
    %1972 = vmatprep.subr.bf16.mxu0 %v1298
    %1973 = vmatpush1.bf16.msra.mxu0 %v1297
    %1974 = vmatprep.subr.bf16.mxu0 0
    %1975 = vmatpush1.bf16.msra.mxu0 0
    %1976 = vmatprep.subr.bf16.mxu0 0
    %1977 = vmatpush1.bf16.msra.mxu0 0
    %1978 = vmatprep.subr.bf16.mxu0 0
    %1979 = vmatpush1.bf16.msra.mxu0 0
    %1980 = vmatprep.subr.bf16.mxu0 0
    %1981 = vmatpush1.bf16.msra.mxu0 0
    %1982 = vmatprep.subr.bf16.mxu0 0
    %1983 = vmatpush1.bf16.msra.mxu0 0
    %1984 = vmatprep.subr.bf16.mxu0 0
    %1985 = vmatpush1.bf16.msra.mxu0 0
    %1986 = vmatprep.subr.bf16.mxu0 0
    %1987 = vmatpush1.bf16.msra.mxu0 0
    %1988 = vmatprep.subr.bf16.mxu0 0
    %1989 = vmatpush1.bf16.msra.mxu0 0
    %1990 = vmatprep.mubr.bf16.mxu0 0
    %1991 = vmatmul.mubr.bf16.gmra.mrb[0].mxu0 %v1441
    %v1992 = vpop.f32.mrb[0].mxu0
    %v1993 = vadd.f32 0.0, %v1992
    %v1994 = vpop.f32.mrb[0].mxu0
    %v1995 = vadd.f32 0.0, %v1994
    %v1996 = vpop.f32.mrb[0].mxu0
    %v1997 = vpop.f32.mrb[0].mxu0
    %1998 = vdwg.mxu0
    %v2003 = vrot.slane %v1952, 6
    %v2004 = vrot.slane %v1954, 6
    %v2005 = vrot.slane %v1993, 6
    %v2006 = vrot.slane %v1995, 6
    %v2011 = vadd.f32 %v1023, %v2003
    %v2012 = vadd.f32 %v1025, %v2004
    %v2013 = vadd.f32 %v1066, %v2005
    %v2014 = vadd.f32 %v1068, %v2006
    %v2015 = vxor.u32 %v2011, 2147483648
    %v2016 = vmul.f32 %v2015, 1.442695
    %v2017 = vpow.pop %v2016
    %v2018 = vadd.f32 %v2017, 1.0
    %v2019 = vrcp.pop %v2018
    %v2020 = vmul.f32 1.0, %v2019
    %v2021 = vxor.u32 %v2012, 2147483648
    %v2022 = vmul.f32 %v2021, 1.442695
    %v2023 = vpow.pop %v2022
    %v2024 = vadd.f32 %v2023, 1.0
    %v2025 = vrcp.pop %v2024
    %v2026 = vmul.f32 1.0, %v2025
    %v2027 = vtanh.pop %v2013
    %v2028 = vxor.u32 %v2014, 2147483648
    %v2029 = vmul.f32 %v2028, 1.442695
    %v2030 = vpow.pop %v2029
    %v2031 = vadd.f32 %v2030, 1.0
    %v2032 = vrcp.pop %v2031
    %v2033 = vmul.f32 1.0, %v2032
    %v2035 = vrot.slane %v1438, 6
    %v2037 = vmul.f32 %v2026, %v2035
    %v2038 = vmul.f32 %v2020, %v2027
    %v2039 = vadd.f32 %v2037, %v2038
    %v2040 = vtanh.pop %v2039
    %v2041 = vmul.f32 %v2033, %v2040
    %v2042 = vrot.slane %v1889, 6
    %v2044 = vpack.c.bf16 %v2041, %v2041
    %v2045 = vpack.c.bf16 %v2042, %v2042
    %v2048 = vrot.slane %v2044, 1
    %v2049 = vrot.slane %v2045, 1
    %2052 = vmatprep.subr.bf16.mxu0 %v1657
    %2053 = vmatpush1.bf16.msra.mxu0 %v1656
    %2054 = vmatprep.subr.bf16.mxu0 %v1661
    %2055 = vmatpush1.bf16.msra.mxu0 %v1660
    %2056 = vmatprep.subr.bf16.mxu0 %v1665
    %2057 = vmatpush1.bf16.msra.mxu0 %v1664
    %2058 = vmatprep.subr.bf16.mxu0 %v1669
    %2059 = vmatpush1.bf16.msra.mxu0 %v1668
    %2060 = vmatprep.subr.bf16.mxu0 %v1673
    %2061 = vmatpush1.bf16.msra.mxu0 %v1672
    %2062 = vmatprep.subr.bf16.mxu0 %v1677
    %2063 = vmatpush1.bf16.msra.mxu0 %v1676
    %2064 = vmatprep.subr.bf16.mxu0 %v1681
    %2065 = vmatpush1.bf16.msra.mxu0 %v1680
    %2066 = vmatprep.subr.bf16.mxu0 %v1685
    %2067 = vmatpush1.bf16.msra.mxu0 %v1684
    %2068 = vmatprep.subr.bf16.mxu0 %v1689
    %2069 = vmatpush1.bf16.msra.mxu0 %v1688
    %2070 = vmatprep.subr.bf16.mxu0 %v1693
    %2071 = vmatpush1.bf16.msra.mxu0 %v1692
    %2072 = vmatprep.subr.bf16.mxu0 %v1697
    %2073 = vmatpush1.bf16.msra.mxu0 %v1696
    %2074 = vmatprep.subr.bf16.mxu0 %v1701
    %2075 = vmatpush1.bf16.msra.mxu0 %v1700
    %2076 = vmatprep.subr.bf16.mxu0 %v1705
    %2077 = vmatpush1.bf16.msra.mxu0 %v1704
    %2078 = vmatprep.subr.bf16.mxu0 %v1709
    %2079 = vmatpush1.bf16.msra.mxu0 %v1708
    %2080 = vmatprep.subr.bf16.mxu0 %v1713
    %2081 = vmatpush1.bf16.msra.mxu0 %v1712
    %2082 = vmatprep.subr.bf16.mxu0 %v1717
    %2083 = vmatpush1.bf16.msra.mxu0 %v1716
    %2084 = vmatprep.mubr.bf16.mxu0 %v2049
    %2085 = vmatmul.mubr.bf16.gmra.mrb[0].mxu0 %v2048
    %v2086 = vpop.f32.mrb[0].mxu0
    %v2087 = vadd.f32 %v1447, %v2086
    %v2088 = vpop.f32.mrb[0].mxu0
    %v2089 = vadd.f32 %v1451, %v2088
    %v2090 = vpop.f32.mrb[0].mxu0
    %v2091 = vpop.f32.mrb[0].mxu0
    %2092 = vdwg.mxu0
    %2093 = vmatprep.subr.bf16.mxu0 %v1659
    %2094 = vmatpush1.bf16.msra.mxu0 %v1658
    %2095 = vmatprep.subr.bf16.mxu0 %v1663
    %2096 = vmatpush1.bf16.msra.mxu0 %v1662
    %2097 = vmatprep.subr.bf16.mxu0 %v1667
    %2098 = vmatpush1.bf16.msra.mxu0 %v1666
    %2099 = vmatprep.subr.bf16.mxu0 %v1671
    %2100 = vmatpush1.bf16.msra.mxu0 %v1670
    %2101 = vmatprep.subr.bf16.mxu0 %v1675
    %2102 = vmatpush1.bf16.msra.mxu0 %v1674
    %2103 = vmatprep.subr.bf16.mxu0 %v1679
    %2104 = vmatpush1.bf16.msra.mxu0 %v1678
    %2105 = vmatprep.subr.bf16.mxu0 %v1683
    %2106 = vmatpush1.bf16.msra.mxu0 %v1682
    %2107 = vmatprep.subr.bf16.mxu0 %v1687
    %2108 = vmatpush1.bf16.msra.mxu0 %v1686
    %2109 = vmatprep.subr.bf16.mxu0 %v1691
    %2110 = vmatpush1.bf16.msra.mxu0 %v1690
    %2111 = vmatprep.subr.bf16.mxu0 %v1695
    %2112 = vmatpush1.bf16.msra.mxu0 %v1694
    %2113 = vmatprep.subr.bf16.mxu0 %v1699
    %2114 = vmatpush1.bf16.msra.mxu0 %v1698
    %2115 = vmatprep.subr.bf16.mxu0 %v1703
    %2116 = vmatpush1.bf16.msra.mxu0 %v1702
    %2117 = vmatprep.subr.bf16.mxu0 %v1707
    %2118 = vmatpush1.bf16.msra.mxu0 %v1706
    %2119 = vmatprep.subr.bf16.mxu0 %v1711
    %2120 = vmatpush1.bf16.msra.mxu0 %v1710
    %2121 = vmatprep.subr.bf16.mxu0 %v1715
    %2122 = vmatpush1.bf16.msra.mxu0 %v1714
    %2123 = vmatprep.subr.bf16.mxu0 %v1719
    %2124 = vmatpush1.bf16.msra.mxu0 %v1718
    %2125 = vmatprep.mubr.bf16.mxu0 %v2049
    %2126 = vmatmul.mubr.bf16.gmra.mrb[0].mxu0 %v2048
    %v2127 = vpop.f32.mrb[0].mxu0
    %v2128 = vadd.f32 %v1455, %v2127
    %v2129 = vpop.f32.mrb[0].mxu0
    %v2130 = vadd.f32 %v1459, %v2129
    %v2131 = vpop.f32.mrb[0].mxu0
    %v2132 = vpop.f32.mrb[0].mxu0
    %2133 = vdwg.mxu0
    %v2134 = vxor.u32 %v2087, 2147483648
    %v2135 = vmul.f32 %v2134, 1.442695
    %v2136 = vpow.pop %v2135
    %v2137 = vadd.f32 %v2136, 1.0
    %v2138 = vrcp.pop %v2137
    %v2139 = vmul.f32 1.0, %v2138
    %v2140 = vxor.u32 %v2089, 2147483648
    %v2141 = vmul.f32 %v2140, 1.442695
    %v2142 = vpow.pop %v2141
    %v2143 = vadd.f32 %v2142, 1.0
    %v2144 = vrcp.pop %v2143
    %v2145 = vmul.f32 1.0, %v2144
    %v2146 = vtanh.pop %v2128
    %v2147 = vxor.u32 %v2130, 2147483648
    %v2148 = vmul.f32 %v2147, 1.442695
    %v2149 = vpow.pop %v2148
    %v2150 = vadd.f32 %v2149, 1.0
    %v2151 = vrcp.pop %v2150
    %v2152 = vmul.f32 1.0, %v2151
    %v2153 = vmul.f32 %v2145, %v1887
    %v2154 = vmul.f32 %v2139, %v2146
    %v2155 = vadd.f32 %v2153, %v2154
    %v2156 = vtanh.pop %v2155
    %v2157 = vmul.f32 %v2152, %v2156
    %v2160 = vunpack.c.l.s4 1966171168
    %v2161 = vunpack.c.0.s8 %v2160
    %v2162 = vlaneseq
    %v2163 = vshrl.u32 %v2162, 7
    %v2164 = vsub.s32 %v2161, %v2163
    %v2165 = vrot.slane %v2157, %v2164
    %v2166 = vcombine.high %v2165, %v2165
    %v2168 = vunpack.c.l.s4 1966171168
    %v2169 = vunpack.c.0.s8 %v2168
    %v2170 = vlaneseq
    %v2171 = vshrl.u32 %v2170, 7
    %v2172 = vsub.s32 %v2169, %v2171
    %v2173 = vrot.slane %v2165, %v2172
    %v2175 = vunpack.c.l.s4 1966171168
    %v2176 = vunpack.c.0.s8 %v2175
    %v2177 = vlaneseq
    %v2178 = vshrl.u32 %v2177, 7
    %v2179 = vsub.s32 %v2176, %v2178
    %v2180 = vrot.slane %v2166, %v2179
    %2183 = vst [vmem:[#allocation16 + $0x1] sm:$0x1] %v2173
    %2184 = vst [vmem:[#allocation16 + $0x9] sm:$0x1] %v2180
    %2185 = vmatprep.subr.bf16.mxu0 %v1268
    %2186 = vmatpush1.bf16.msra.mxu0 %v1267
    %2187 = vmatprep.subr.bf16.mxu0 %v1272
    %2188 = vmatpush1.bf16.msra.mxu0 %v1271
    %2189 = vmatprep.subr.bf16.mxu0 %v1276
    %2190 = vmatpush1.bf16.msra.mxu0 %v1275
    %2191 = vmatprep.subr.bf16.mxu0 %v1280
    %2192 = vmatpush1.bf16.msra.mxu0 %v1279
    %2193 = vmatprep.subr.bf16.mxu0 %v1284
    %2194 = vmatpush1.bf16.msra.mxu0 %v1283
    %2195 = vmatprep.subr.bf16.mxu0 %v1288
    %2196 = vmatpush1.bf16.msra.mxu0 %v1287
    %2197 = vmatprep.subr.bf16.mxu0 %v1292
    %2198 = vmatpush1.bf16.msra.mxu0 %v1291
    %2199 = vmatprep.subr.bf16.mxu0 %v1296
    %2200 = vmatpush1.bf16.msra.mxu0 %v1295
    %2201 = vmatprep.subr.bf16.mxu0 0
    %2202 = vmatpush1.bf16.msra.mxu0 0
    %2203 = vmatprep.subr.bf16.mxu0 0
    %2204 = vmatpush1.bf16.msra.mxu0 0
    %2205 = vmatprep.subr.bf16.mxu0 0
    %2206 = vmatpush1.bf16.msra.mxu0 0
    %2207 = vmatprep.subr.bf16.mxu0 0
    %2208 = vmatpush1.bf16.msra.mxu0 0
    %2209 = vmatprep.subr.bf16.mxu0 0
    %2210 = vmatpush1.bf16.msra.mxu0 0
    %2211 = vmatprep.subr.bf16.mxu0 0
    %2212 = vmatpush1.bf16.msra.mxu0 0
    %2213 = vmatprep.subr.bf16.mxu0 0
    %2214 = vmatpush1.bf16.msra.mxu0 0
    %2215 = vmatprep.subr.bf16.mxu0 0
    %2216 = vmatpush1.bf16.msra.mxu0 0
    %2217 = vmatprep.mubr.bf16.mxu0 0
    %2218 = vmatmul.mubr.bf16.gmra.mrb[0].mxu0 %v2048
    %v2219 = vpop.f32.mrb[0].mxu0
    %v2220 = vadd.f32 0.0, %v2219
    %v2221 = vpop.f32.mrb[0].mxu0
    %v2222 = vadd.f32 0.0, %v2221
    %v2223 = vpop.f32.mrb[0].mxu0
    %v2224 = vpop.f32.mrb[0].mxu0
    %2225 = vdwg.mxu0
    %2226 = vmatprep.subr.bf16.mxu0 %v1270
    %2227 = vmatpush1.bf16.msra.mxu0 %v1269
    %2228 = vmatprep.subr.bf16.mxu0 %v1274
    %2229 = vmatpush1.bf16.msra.mxu0 %v1273
    %2230 = vmatprep.subr.bf16.mxu0 %v1278
    %2231 = vmatpush1.bf16.msra.mxu0 %v1277
    %2232 = vmatprep.subr.bf16.mxu0 %v1282
    %2233 = vmatpush1.bf16.msra.mxu0 %v1281
    %2234 = vmatprep.subr.bf16.mxu0 %v1286
    %2235 = vmatpush1.bf16.msra.mxu0 %v1285
    %2236 = vmatprep.subr.bf16.mxu0 %v1290
    %2237 = vmatpush1.bf16.msra.mxu0 %v1289
    %2238 = vmatprep.subr.bf16.mxu0 %v1294
    %2239 = vmatpush1.bf16.msra.mxu0 %v1293
    %2240 = vmatprep.subr.bf16.mxu0 %v1298
    %2241 = vmatpush1.bf16.msra.mxu0 %v1297
    %2242 = vmatprep.subr.bf16.mxu0 0
    %2243 = vmatpush1.bf16.msra.mxu0 0
    %2244 = vmatprep.subr.bf16.mxu0 0
    %2245 = vmatpush1.bf16.msra.mxu0 0
    %2246 = vmatprep.subr.bf16.mxu0 0
    %2247 = vmatpush1.bf16.msra.mxu0 0
    %2248 = vmatprep.subr.bf16.mxu0 0
    %2249 = vmatpush1.bf16.msra.mxu0 0
    %2250 = vmatprep.subr.bf16.mxu0 0
    %2251 = vmatpush1.bf16.msra.mxu0 0
    %2252 = vmatprep.subr.bf16.mxu0 0
    %2253 = vmatpush1.bf16.msra.mxu0 0
    %2254 = vmatprep.subr.bf16.mxu0 0
    %2255 = vmatpush1.bf16.msra.mxu0 0
    %2256 = vmatprep.subr.bf16.mxu0 0
    %2257 = vmatpush1.bf16.msra.mxu0 0
    %2258 = vmatprep.mubr.bf16.mxu0 0
    %2259 = vmatmul.mubr.bf16.gmra.mrb[0].mxu0 %v2048
    %v2260 = vpop.f32.mrb[0].mxu0
    %v2261 = vadd.f32 0.0, %v2260
    %v2262 = vpop.f32.mrb[0].mxu0
    %v2263 = vadd.f32 0.0, %v2262
    %v2264 = vpop.f32.mrb[0].mxu0
    %v2265 = vpop.f32.mrb[0].mxu0
    %2266 = vdwg.mxu0
    %v2271 = vrot.slane %v2220, 4
    %v2272 = vrot.slane %v2222, 4
    %v2273 = vrot.slane %v2261, 4
    %v2274 = vrot.slane %v2263, 4
    %v2279 = vadd.f32 %v1023, %v2271
    %v2280 = vadd.f32 %v1025, %v2272
    %v2281 = vadd.f32 %v1066, %v2273
    %v2282 = vadd.f32 %v1068, %v2274
    %v2283 = vxor.u32 %v2279, 2147483648
    %v2284 = vmul.f32 %v2283, 1.442695
    %v2285 = vpow.pop %v2284
    %v2286 = vadd.f32 %v2285, 1.0
    %v2287 = vrcp.pop %v2286
    %v2288 = vmul.f32 1.0, %v2287
    %v2289 = vxor.u32 %v2280, 2147483648
    %v2290 = vmul.f32 %v2289, 1.442695
    %v2291 = vpow.pop %v2290
    %v2292 = vadd.f32 %v2291, 1.0
    %v2293 = vrcp.pop %v2292
    %v2294 = vmul.f32 1.0, %v2293
    %v2295 = vtanh.pop %v2281
    %v2296 = vxor.u32 %v2282, 2147483648
    %v2297 = vmul.f32 %v2296, 1.442695
    %v2298 = vpow.pop %v2297
    %v2299 = vadd.f32 %v2298, 1.0
    %v2300 = vrcp.pop %v2299
    %v2301 = vmul.f32 1.0, %v2300
    %v2303 = vrot.slane %v2039, 6
    %v2305 = vmul.f32 %v2294, %v2303
    %v2306 = vmul.f32 %v2288, %v2295
    %v2307 = vadd.f32 %v2305, %v2306
    %v2308 = vtanh.pop %v2307
    %v2309 = vmul.f32 %v2301, %v2308
    %v2310 = vrot.slane %v2157, 4
    %v2312 = vpack.c.bf16 %v2309, %v2309
    %v2313 = vpack.c.bf16 %v2310, %v2310
    %v2316 = vrot.slane %v2312, 2
    %v2317 = vrot.slane %v2313, 2
    %2320 = vmatprep.subr.bf16.mxu0 %v1657
    %2321 = vmatpush1.bf16.msra.mxu0 %v1656
    %2322 = vmatprep.subr.bf16.mxu0 %v1661
    %2323 = vmatpush1.bf16.msra.mxu0 %v1660
    %2324 = vmatprep.subr.bf16.mxu0 %v1665
    %2325 = vmatpush1.bf16.msra.mxu0 %v1664
    %2326 = vmatprep.subr.bf16.mxu0 %v1669
    %2327 = vmatpush1.bf16.msra.mxu0 %v1668
    %2328 = vmatprep.subr.bf16.mxu0 %v1673
    %2329 = vmatpush1.bf16.msra.mxu0 %v1672
    %2330 = vmatprep.subr.bf16.mxu0 %v1677
    %2331 = vmatpush1.bf16.msra.mxu0 %v1676
    %2332 = vmatprep.subr.bf16.mxu0 %v1681
    %2333 = vmatpush1.bf16.msra.mxu0 %v1680
    %2334 = vmatprep.subr.bf16.mxu0 %v1685
    %2335 = vmatpush1.bf16.msra.mxu0 %v1684
    %2336 = vmatprep.subr.bf16.mxu0 %v1689
    %2337 = vmatpush1.bf16.msra.mxu0 %v1688
    %2338 = vmatprep.subr.bf16.mxu0 %v1693
    %2339 = vmatpush1.bf16.msra.mxu0 %v1692
    %2340 = vmatprep.subr.bf16.mxu0 %v1697
    %2341 = vmatpush1.bf16.msra.mxu0 %v1696
    %2342 = vmatprep.subr.bf16.mxu0 %v1701
    %2343 = vmatpush1.bf16.msra.mxu0 %v1700
    %2344 = vmatprep.subr.bf16.mxu0 %v1705
    %2345 = vmatpush1.bf16.msra.mxu0 %v1704
    %2346 = vmatprep.subr.bf16.mxu0 %v1709
    %2347 = vmatpush1.bf16.msra.mxu0 %v1708
    %2348 = vmatprep.subr.bf16.mxu0 %v1713
    %2349 = vmatpush1.bf16.msra.mxu0 %v1712
    %2350 = vmatprep.subr.bf16.mxu0 %v1717
    %2351 = vmatpush1.bf16.msra.mxu0 %v1716
    %2352 = vmatprep.mubr.bf16.mxu0 %v2317
    %2353 = vmatmul.mubr.bf16.gmra.mrb[0].mxu0 %v2316
    %v2354 = vpop.f32.mrb[0].mxu0
    %v2355 = vadd.f32 %v1447, %v2354
    %v2356 = vpop.f32.mrb[0].mxu0
    %v2357 = vadd.f32 %v1451, %v2356
    %v2358 = vpop.f32.mrb[0].mxu0
    %v2359 = vpop.f32.mrb[0].mxu0
    %2360 = vdwg.mxu0
    %2361 = vmatprep.subr.bf16.mxu0 %v1659
    %2362 = vmatpush1.bf16.msra.mxu0 %v1658
    %2363 = vmatprep.subr.bf16.mxu0 %v1663
    %2364 = vmatpush1.bf16.msra.mxu0 %v1662
    %2365 = vmatprep.subr.bf16.mxu0 %v1667
    %2366 = vmatpush1.bf16.msra.mxu0 %v1666
    %2367 = vmatprep.subr.bf16.mxu0 %v1671
    %2368 = vmatpush1.bf16.msra.mxu0 %v1670
    %2369 = vmatprep.subr.bf16.mxu0 %v1675
    %2370 = vmatpush1.bf16.msra.mxu0 %v1674
    %2371 = vmatprep.subr.bf16.mxu0 %v1679
    %2372 = vmatpush1.bf16.msra.mxu0 %v1678
    %2373 = vmatprep.subr.bf16.mxu0 %v1683
    %2374 = vmatpush1.bf16.msra.mxu0 %v1682
    %2375 = vmatprep.subr.bf16.mxu0 %v1687
    %2376 = vmatpush1.bf16.msra.mxu0 %v1686
    %2377 = vmatprep.subr.bf16.mxu0 %v1691
    %2378 = vmatpush1.bf16.msra.mxu0 %v1690
    %2379 = vmatprep.subr.bf16.mxu0 %v1695
    %2380 = vmatpush1.bf16.msra.mxu0 %v1694
    %2381 = vmatprep.subr.bf16.mxu0 %v1699
    %2382 = vmatpush1.bf16.msra.mxu0 %v1698
    %2383 = vmatprep.subr.bf16.mxu0 %v1703
    %2384 = vmatpush1.bf16.msra.mxu0 %v1702
    %2385 = vmatprep.subr.bf16.mxu0 %v1707
    %2386 = vmatpush1.bf16.msra.mxu0 %v1706
    %2387 = vmatprep.subr.bf16.mxu0 %v1711
    %2388 = vmatpush1.bf16.msra.mxu0 %v1710
    %2389 = vmatprep.subr.bf16.mxu0 %v1715
    %2390 = vmatpush1.bf16.msra.mxu0 %v1714
    %2391 = vmatprep.subr.bf16.mxu0 %v1719
    %2392 = vmatpush1.bf16.msra.mxu0 %v1718
    %2393 = vmatprep.mubr.bf16.mxu0 %v2317
    %2394 = vmatmul.mubr.bf16.gmra.mrb[0].mxu0 %v2316
    %v2395 = vpop.f32.mrb[0].mxu0
    %v2396 = vadd.f32 %v1455, %v2395
    %v2397 = vpop.f32.mrb[0].mxu0
    %v2398 = vadd.f32 %v1459, %v2397
    %v2399 = vpop.f32.mrb[0].mxu0
    %v2400 = vpop.f32.mrb[0].mxu0
    %2401 = vdwg.mxu0
    %v2402 = vxor.u32 %v2355, 2147483648
    %v2403 = vmul.f32 %v2402, 1.442695
    %v2404 = vpow.pop %v2403
    %v2405 = vadd.f32 %v2404, 1.0
    %v2406 = vrcp.pop %v2405
    %v2407 = vmul.f32 1.0, %v2406
    %v2408 = vxor.u32 %v2357, 2147483648
    %v2409 = vmul.f32 %v2408, 1.442695
    %v2410 = vpow.pop %v2409
    %v2411 = vadd.f32 %v2410, 1.0
    %v2412 = vrcp.pop %v2411
    %v2413 = vmul.f32 1.0, %v2412
    %v2414 = vtanh.pop %v2396
    %v2415 = vxor.u32 %v2398, 2147483648
    %v2416 = vmul.f32 %v2415, 1.442695
    %v2417 = vpow.pop %v2416
    %v2418 = vadd.f32 %v2417, 1.0
    %v2419 = vrcp.pop %v2418
    %v2420 = vmul.f32 1.0, %v2419
    %v2421 = vmul.f32 %v2413, %v2155
    %v2422 = vmul.f32 %v2407, %v2414
    %v2423 = vadd.f32 %v2421, %v2422
    %v2424 = vtanh.pop %v2423
    %v2425 = vmul.f32 %v2420, %v2424
    %v2428 = vunpack.c.l.s4 1966171168
    %v2429 = vunpack.c.0.s8 %v2428
    %v2430 = vlaneseq
    %v2431 = vshrl.u32 %v2430, 7
    %v2432 = vsub.s32 %v2429, %v2431
    %v2433 = vrot.slane %v2425, %v2432
    %v2434 = vcombine.high %v2433, %v2433
    %v2436 = vunpack.c.l.s4 1966171168
    %v2437 = vunpack.c.0.s8 %v2436
    %v2438 = vlaneseq
    %v2439 = vshrl.u32 %v2438, 7
    %v2440 = vsub.s32 %v2437, %v2439
    %v2441 = vrot.slane %v2433, %v2440
    %v2443 = vunpack.c.l.s4 1966171168
    %v2444 = vunpack.c.0.s8 %v2443
    %v2445 = vlaneseq
    %v2446 = vshrl.u32 %v2445, 7
    %v2447 = vsub.s32 %v2444, %v2446
    %v2448 = vrot.slane %v2434, %v2447
    %2451 = vst [vmem:[#allocation16 + $0x2] sm:$0x1] %v2441
    %2452 = vst [vmem:[#allocation16 + $0xa] sm:$0x1] %v2448
    %2453 = vmatprep.subr.bf16.mxu0 %v1268
    %2454 = vmatpush1.bf16.msra.mxu0 %v1267
    %2455 = vmatprep.subr.bf16.mxu0 %v1272
    %2456 = vmatpush1.bf16.msra.mxu0 %v1271
    %2457 = vmatprep.subr.bf16.mxu0 %v1276
    %2458 = vmatpush1.bf16.msra.mxu0 %v1275
    %2459 = vmatprep.subr.bf16.mxu0 %v1280
    %2460 = vmatpush1.bf16.msra.mxu0 %v1279
    %2461 = vmatprep.subr.bf16.mxu0 %v1284
    %2462 = vmatpush1.bf16.msra.mxu0 %v1283
    %2463 = vmatprep.subr.bf16.mxu0 %v1288
    %2464 = vmatpush1.bf16.msra.mxu0 %v1287
    %2465 = vmatprep.subr.bf16.mxu0 %v1292
    %2466 = vmatpush1.bf16.msra.mxu0 %v1291
    %2467 = vmatprep.subr.bf16.mxu0 %v1296
    %2468 = vmatpush1.bf16.msra.mxu0 %v1295
    %2469 = vmatprep.subr.bf16.mxu0 0
    %2470 = vmatpush1.bf16.msra.mxu0 0
    %2471 = vmatprep.subr.bf16.mxu0 0
    %2472 = vmatpush1.bf16.msra.mxu0 0
    %2473 = vmatprep.subr.bf16.mxu0 0
    %2474 = vmatpush1.bf16.msra.mxu0 0
    %2475 = vmatprep.subr.bf16.mxu0 0
    %2476 = vmatpush1.bf16.msra.mxu0 0
    %2477 = vmatprep.subr.bf16.mxu0 0
    %2478 = vmatpush1.bf16.msra.mxu0 0
    %2479 = vmatprep.subr.bf16.mxu0 0
    %2480 = vmatpush1.bf16.msra.mxu0 0
    %2481 = vmatprep.subr.bf16.mxu0 0
    %2482 = vmatpush1.bf16.msra.mxu0 0
    %2483 = vmatprep.subr.bf16.mxu0 0
    %2484 = vmatpush1.bf16.msra.mxu0 0
    %2485 = vmatprep.mubr.bf16.mxu0 0
    %2486 = vmatmul.mubr.bf16.gmra.mrb[0].mxu0 %v2316
    %v2487 = vpop.f32.mrb[0].mxu0
    %v2488 = vadd.f32 0.0, %v2487
    %v2489 = vpop.f32.mrb[0].mxu0
    %v2490 = vadd.f32 0.0, %v2489
    %v2491 = vpop.f32.mrb[0].mxu0
    %v2492 = vpop.f32.mrb[0].mxu0
    %2493 = vdwg.mxu0
    %2494 = vmatprep.subr.bf16.mxu0 %v1270
    %2495 = vmatpush1.bf16.msra.mxu0 %v1269
    %2496 = vmatprep.subr.bf16.mxu0 %v1274
    %2497 = vmatpush1.bf16.msra.mxu0 %v1273
    %2498 = vmatprep.subr.bf16.mxu0 %v1278
    %2499 = vmatpush1.bf16.msra.mxu0 %v1277
    %2500 = vmatprep.subr.bf16.mxu0 %v1282
    %2501 = vmatpush1.bf16.msra.mxu0 %v1281
    %2502 = vmatprep.subr.bf16.mxu0 %v1286
    %2503 = vmatpush1.bf16.msra.mxu0 %v1285
    %2504 = vmatprep.subr.bf16.mxu0 %v1290
    %2505 = vmatpush1.bf16.msra.mxu0 %v1289
    %2506 = vmatprep.subr.bf16.mxu0 %v1294
    %2507 = vmatpush1.bf16.msra.mxu0 %v1293
    %2508 = vmatprep.subr.bf16.mxu0 %v1298
    %2509 = vmatpush1.bf16.msra.mxu0 %v1297
    %2510 = vmatprep.subr.bf16.mxu0 0
    %2511 = vmatpush1.bf16.msra.mxu0 0
    %2512 = vmatprep.subr.bf16.mxu0 0
    %2513 = vmatpush1.bf16.msra.mxu0 0
    %2514 = vmatprep.subr.bf16.mxu0 0
    %2515 = vmatpush1.bf16.msra.mxu0 0
    %2516 = vmatprep.subr.bf16.mxu0 0
    %2517 = vmatpush1.bf16.msra.mxu0 0
    %2518 = vmatprep.subr.bf16.mxu0 0
    %2519 = vmatpush1.bf16.msra.mxu0 0
    %2520 = vmatprep.subr.bf16.mxu0 0
    %2521 = vmatpush1.bf16.msra.mxu0 0
    %2522 = vmatprep.subr.bf16.mxu0 0
    %2523 = vmatpush1.bf16.msra.mxu0 0
    %2524 = vmatprep.subr.bf16.mxu0 0
    %2525 = vmatpush1.bf16.msra.mxu0 0
    %2526 = vmatprep.mubr.bf16.mxu0 0
    %2527 = vmatmul.mubr.bf16.gmra.mrb[0].mxu0 %v2316
    %v2528 = vpop.f32.mrb[0].mxu0
    %v2529 = vadd.f32 0.0, %v2528
    %v2530 = vpop.f32.mrb[0].mxu0
    %v2531 = vadd.f32 0.0, %v2530
    %v2532 = vpop.f32.mrb[0].mxu0
    %v2533 = vpop.f32.mrb[0].mxu0
    %2534 = vdwg.mxu0
    %v2539 = vrot.slane %v2488, 2
    %v2540 = vrot.slane %v2490, 2
    %v2541 = vrot.slane %v2529, 2
    %v2542 = vrot.slane %v2531, 2
    %v2547 = vadd.f32 %v1023, %v2539
    %v2548 = vadd.f32 %v1025, %v2540
    %v2549 = vadd.f32 %v1066, %v2541
    %v2550 = vadd.f32 %v1068, %v2542
    %v2551 = vxor.u32 %v2547, 2147483648
    %v2552 = vmul.f32 %v2551, 1.442695
    %v2553 = vpow.pop %v2552
    %v2554 = vadd.f32 %v2553, 1.0
    %v2555 = vrcp.pop %v2554
    %v2556 = vmul.f32 1.0, %v2555
    %v2557 = vxor.u32 %v2548, 2147483648
    %v2558 = vmul.f32 %v2557, 1.442695
    %v2559 = vpow.pop %v2558
    %v2560 = vadd.f32 %v2559, 1.0
    %v2561 = vrcp.pop %v2560
    %v2562 = vmul.f32 1.0, %v2561
    %v2563 = vtanh.pop %v2549
    %v2564 = vxor.u32 %v2550, 2147483648
    %v2565 = vmul.f32 %v2564, 1.442695
    %v2566 = vpow.pop %v2565
    %v2567 = vadd.f32 %v2566, 1.0
    %v2568 = vrcp.pop %v2567
    %v2569 = vmul.f32 1.0, %v2568
    %v2571 = vrot.slane %v2307, 6
    %v2573 = vmul.f32 %v2562, %v2571
    %v2574 = vmul.f32 %v2556, %v2563
    %v2575 = vadd.f32 %v2573, %v2574
    %v2576 = vtanh.pop %v2575
    %v2577 = vmul.f32 %v2569, %v2576
    %v2578 = vrot.slane %v2425, 2
    %v2580 = vpack.c.bf16 %v2577, %v2577
    %v2581 = vpack.c.bf16 %v2578, %v2578
    %v2584 = vrot.slane %v2580, 3
    %v2585 = vrot.slane %v2581, 3
    %2588 = vmatprep.subr.bf16.mxu0 %v1657
    %2589 = vmatpush1.bf16.msra.mxu0 %v1656
    %2590 = vmatprep.subr.bf16.mxu0 %v1661
    %2591 = vmatpush1.bf16.msra.mxu0 %v1660
    %2592 = vmatprep.subr.bf16.mxu0 %v1665
    %2593 = vmatpush1.bf16.msra.mxu0 %v1664
    %2594 = vmatprep.subr.bf16.mxu0 %v1669
    %2595 = vmatpush1.bf16.msra.mxu0 %v1668
    %2596 = vmatprep.subr.bf16.mxu0 %v1673
    %2597 = vmatpush1.bf16.msra.mxu0 %v1672
    %2598 = vmatprep.subr.bf16.mxu0 %v1677
    %2599 = vmatpush1.bf16.msra.mxu0 %v1676
    %2600 = vmatprep.subr.bf16.mxu0 %v1681
    %2601 = vmatpush1.bf16.msra.mxu0 %v1680
    %2602 = vmatprep.subr.bf16.mxu0 %v1685
    %2603 = vmatpush1.bf16.msra.mxu0 %v1684
    %2604 = vmatprep.subr.bf16.mxu0 %v1689
    %2605 = vmatpush1.bf16.msra.mxu0 %v1688
    %2606 = vmatprep.subr.bf16.mxu0 %v1693
    %2607 = vmatpush1.bf16.msra.mxu0 %v1692
    %2608 = vmatprep.subr.bf16.mxu0 %v1697
    %2609 = vmatpush1.bf16.msra.mxu0 %v1696
    %2610 = vmatprep.subr.bf16.mxu0 %v1701
    %2611 = vmatpush1.bf16.msra.mxu0 %v1700
    %2612 = vmatprep.subr.bf16.mxu0 %v1705
    %2613 = vmatpush1.bf16.msra.mxu0 %v1704
    %2614 = vmatprep.subr.bf16.mxu0 %v1709
    %2615 = vmatpush1.bf16.msra.mxu0 %v1708
    %2616 = vmatprep.subr.bf16.mxu0 %v1713
    %2617 = vmatpush1.bf16.msra.mxu0 %v1712
    %2618 = vmatprep.subr.bf16.mxu0 %v1717
    %2619 = vmatpush1.bf16.msra.mxu0 %v1716
    %2620 = vmatprep.mubr.bf16.mxu0 %v2585
    %2621 = vmatmul.mubr.bf16.gmra.mrb[0].mxu0 %v2584
    %v2622 = vpop.f32.mrb[0].mxu0
    %v2623 = vadd.f32 %v1447, %v2622
    %v2624 = vpop.f32.mrb[0].mxu0
    %v2625 = vadd.f32 %v1451, %v2624
    %v2626 = vpop.f32.mrb[0].mxu0
    %v2627 = vpop.f32.mrb[0].mxu0
    %2628 = vdwg.mxu0
    %2629 = vmatprep.subr.bf16.mxu0 %v1659
    %2630 = vmatpush1.bf16.msra.mxu0 %v1658
    %2631 = vmatprep.subr.bf16.mxu0 %v1663
    %2632 = vmatpush1.bf16.msra.mxu0 %v1662
    %2633 = vmatprep.subr.bf16.mxu0 %v1667
    %2634 = vmatpush1.bf16.msra.mxu0 %v1666
    %2635 = vmatprep.subr.bf16.mxu0 %v1671
    %2636 = vmatpush1.bf16.msra.mxu0 %v1670
    %2637 = vmatprep.subr.bf16.mxu0 %v1675
    %2638 = vmatpush1.bf16.msra.mxu0 %v1674
    %2639 = vmatprep.subr.bf16.mxu0 %v1679
    %2640 = vmatpush1.bf16.msra.mxu0 %v1678
    %2641 = vmatprep.subr.bf16.mxu0 %v1683
    %2642 = vmatpush1.bf16.msra.mxu0 %v1682
    %2643 = vmatprep.subr.bf16.mxu0 %v1687
    %2644 = vmatpush1.bf16.msra.mxu0 %v1686
    %2645 = vmatprep.subr.bf16.mxu0 %v1691
    %2646 = vmatpush1.bf16.msra.mxu0 %v1690
    %2647 = vmatprep.subr.bf16.mxu0 %v1695
    %2648 = vmatpush1.bf16.msra.mxu0 %v1694
    %2649 = vmatprep.subr.bf16.mxu0 %v1699
    %2650 = vmatpush1.bf16.msra.mxu0 %v1698
    %2651 = vmatprep.subr.bf16.mxu0 %v1703
    %2652 = vmatpush1.bf16.msra.mxu0 %v1702
    %2653 = vmatprep.subr.bf16.mxu0 %v1707
    %2654 = vmatpush1.bf16.msra.mxu0 %v1706
    %2655 = vmatprep.subr.bf16.mxu0 %v1711
    %2656 = vmatpush1.bf16.msra.mxu0 %v1710
    %2657 = vmatprep.subr.bf16.mxu0 %v1715
    %2658 = vmatpush1.bf16.msra.mxu0 %v1714
    %2659 = vmatprep.subr.bf16.mxu0 %v1719
    %2660 = vmatpush1.bf16.msra.mxu0 %v1718
    %2661 = vmatprep.mubr.bf16.mxu0 %v2585
    %2662 = vmatmul.mubr.bf16.gmra.mrb[0].mxu0 %v2584
    %v2663 = vpop.f32.mrb[0].mxu0
    %v2664 = vadd.f32 %v1455, %v2663
    %v2665 = vpop.f32.mrb[0].mxu0
    %v2666 = vadd.f32 %v1459, %v2665
    %v2667 = vpop.f32.mrb[0].mxu0
    %v2668 = vpop.f32.mrb[0].mxu0
    %2669 = vdwg.mxu0
    %v2670 = vxor.u32 %v2623, 2147483648
    %v2671 = vmul.f32 %v2670, 1.442695
    %v2672 = vpow.pop %v2671
    %v2673 = vadd.f32 %v2672, 1.0
    %v2674 = vrcp.pop %v2673
    %v2675 = vmul.f32 1.0, %v2674
    %v2676 = vxor.u32 %v2625, 2147483648
    %v2677 = vmul.f32 %v2676, 1.442695
    %v2678 = vpow.pop %v2677
    %v2679 = vadd.f32 %v2678, 1.0
    %v2680 = vrcp.pop %v2679
    %v2681 = vmul.f32 1.0, %v2680
    %v2682 = vtanh.pop %v2664
    %v2683 = vxor.u32 %v2666, 2147483648
    %v2684 = vmul.f32 %v2683, 1.442695
    %v2685 = vpow.pop %v2684
    %v2686 = vadd.f32 %v2685, 1.0
    %v2687 = vrcp.pop %v2686
    %v2688 = vmul.f32 1.0, %v2687
    %v2689 = vmul.f32 %v2681, %v2423
    %v2690 = vmul.f32 %v2675, %v2682
    %v2691 = vadd.f32 %v2689, %v2690
    %v2692 = vtanh.pop %v2691
    %v2693 = vmul.f32 %v2688, %v2692
    %v2696 = vunpack.c.l.s4 1966171168
    %v2697 = vunpack.c.0.s8 %v2696
    %v2698 = vlaneseq
    %v2699 = vshrl.u32 %v2698, 7
    %v2700 = vsub.s32 %v2697, %v2699
    %v2701 = vrot.slane %v2693, %v2700
    %v2702 = vcombine.high %v2701, %v2701
    %v2704 = vunpack.c.l.s4 1966171168
    %v2705 = vunpack.c.0.s8 %v2704
    %v2706 = vlaneseq
    %v2707 = vshrl.u32 %v2706, 7
    %v2708 = vsub.s32 %v2705, %v2707
    %v2709 = vrot.slane %v2701, %v2708
    %v2711 = vunpack.c.l.s4 1966171168
    %v2712 = vunpack.c.0.s8 %v2711
    %v2713 = vlaneseq
    %v2714 = vshrl.u32 %v2713, 7
    %v2715 = vsub.s32 %v2712, %v2714
    %v2716 = vrot.slane %v2702, %v2715
    %2719 = vst [vmem:[#allocation16 + $0x3] sm:$0x1] %v2709
    %2720 = vst [vmem:[#allocation16 + $0xb] sm:$0x1] %v2716
    %2721 = vmatprep.subr.bf16.mxu0 %v1268
    %2722 = vmatpush1.bf16.msra.mxu0 %v1267
    %2723 = vmatprep.subr.bf16.mxu0 %v1272
    %2724 = vmatpush1.bf16.msra.mxu0 %v1271
    %2725 = vmatprep.subr.bf16.mxu0 %v1276
    %2726 = vmatpush1.bf16.msra.mxu0 %v1275
    %2727 = vmatprep.subr.bf16.mxu0 %v1280
    %2728 = vmatpush1.bf16.msra.mxu0 %v1279
    %2729 = vmatprep.subr.bf16.mxu0 %v1284
    %2730 = vmatpush1.bf16.msra.mxu0 %v1283
    %2731 = vmatprep.subr.bf16.mxu0 %v1288
    %2732 = vmatpush1.bf16.msra.mxu0 %v1287
    %2733 = vmatprep.subr.bf16.mxu0 %v1292
    %2734 = vmatpush1.bf16.msra.mxu0 %v1291
    %2735 = vmatprep.subr.bf16.mxu0 %v1296
    %2736 = vmatpush1.bf16.msra.mxu0 %v1295
    %2737 = vmatprep.subr.bf16.mxu0 0
    %2738 = vmatpush1.bf16.msra.mxu0 0
    %2739 = vmatprep.subr.bf16.mxu0 0
    %2740 = vmatpush1.bf16.msra.mxu0 0
    %2741 = vmatprep.subr.bf16.mxu0 0
    %2742 = vmatpush1.bf16.msra.mxu0 0
    %2743 = vmatprep.subr.bf16.mxu0 0
    %2744 = vmatpush1.bf16.msra.mxu0 0
    %2745 = vmatprep.subr.bf16.mxu0 0
    %2746 = vmatpush1.bf16.msra.mxu0 0
    %2747 = vmatprep.subr.bf16.mxu0 0
    %2748 = vmatpush1.bf16.msra.mxu0 0
    %2749 = vmatprep.subr.bf16.mxu0 0
    %2750 = vmatpush1.bf16.msra.mxu0 0
    %2751 = vmatprep.subr.bf16.mxu0 0
    %2752 = vmatpush1.bf16.msra.mxu0 0
    %2753 = vmatprep.mubr.bf16.mxu0 0
    %2754 = vmatmul.mubr.bf16.gmra.mrb[0].mxu0 %v2584
    %v2755 = vpop.f32.mrb[0].mxu0
    %v2756 = vadd.f32 0.0, %v2755
    %v2757 = vpop.f32.mrb[0].mxu0
    %v2758 = vadd.f32 0.0, %v2757
    %v2759 = vpop.f32.mrb[0].mxu0
    %v2760 = vpop.f32.mrb[0].mxu0
    %2761 = vdwg.mxu0
    %2762 = vmatprep.subr.bf16.mxu0 %v1270
    %2763 = vmatpush1.bf16.msra.mxu0 %v1269
    %2764 = vmatprep.subr.bf16.mxu0 %v1274
    %2765 = vmatpush1.bf16.msra.mxu0 %v1273
    %2766 = vmatprep.subr.bf16.mxu0 %v1278
    %2767 = vmatpush1.bf16.msra.mxu0 %v1277
    %2768 = vmatprep.subr.bf16.mxu0 %v1282
    %2769 = vmatpush1.bf16.msra.mxu0 %v1281
    %2770 = vmatprep.subr.bf16.mxu0 %v1286
    %2771 = vmatpush1.bf16.msra.mxu0 %v1285
    %2772 = vmatprep.subr.bf16.mxu0 %v1290
    %2773 = vmatpush1.bf16.msra.mxu0 %v1289
    %2774 = vmatprep.subr.bf16.mxu0 %v1294
    %2775 = vmatpush1.bf16.msra.mxu0 %v1293
    %2776 = vmatprep.subr.bf16.mxu0 %v1298
    %2777 = vmatpush1.bf16.msra.mxu0 %v1297
    %2778 = vmatprep.subr.bf16.mxu0 0
    %2779 = vmatpush1.bf16.msra.mxu0 0
    %2780 = vmatprep.subr.bf16.mxu0 0
    %2781 = vmatpush1.bf16.msra.mxu0 0
    %2782 = vmatprep.subr.bf16.mxu0 0
    %2783 = vmatpush1.bf16.msra.mxu0 0
    %2784 = vmatprep.subr.bf16.mxu0 0
    %2785 = vmatpush1.bf16.msra.mxu0 0
    %2786 = vmatprep.subr.bf16.mxu0 0
    %2787 = vmatpush1.bf16.msra.mxu0 0
    %2788 = vmatprep.subr.bf16.mxu0 0
    %2789 = vmatpush1.bf16.msra.mxu0 0
    %2790 = vmatprep.subr.bf16.mxu0 0
    %2791 = vmatpush1.bf16.msra.mxu0 0
    %2792 = vmatprep.subr.bf16.mxu0 0
    %2793 = vmatpush1.bf16.msra.mxu0 0
    %2794 = vmatprep.mubr.bf16.mxu0 0
    %2795 = vmatmul.mubr.bf16.gmra.mrb[0].mxu0 %v2584
    %v2796 = vpop.f32.mrb[0].mxu0
    %v2797 = vadd.f32 0.0, %v2796
    %v2798 = vpop.f32.mrb[0].mxu0
    %v2799 = vadd.f32 0.0, %v2798
    %v2800 = vpop.f32.mrb[0].mxu0
    %v2801 = vpop.f32.mrb[0].mxu0
    %2802 = vdwg.mxu0
    %v2803 = vadd.f32 %v1027, %v2756
    %v2804 = vadd.f32 %v1029, %v2758
    %v2805 = vadd.f32 %v1070, %v2797
    %v2806 = vadd.f32 %v1072, %v2799
    %v2807 = vxor.u32 %v2803, 2147483648
    %v2808 = vmul.f32 %v2807, 1.442695
    %v2809 = vpow.pop %v2808
    %v2810 = vadd.f32 %v2809, 1.0
    %v2811 = vrcp.pop %v2810
    %v2812 = vmul.f32 1.0, %v2811
    %v2813 = vxor.u32 %v2804, 2147483648
    %v2814 = vmul.f32 %v2813, 1.442695
    %v2815 = vpow.pop %v2814
    %v2816 = vadd.f32 %v2815, 1.0
    %v2817 = vrcp.pop %v2816
    %v2818 = vmul.f32 1.0, %v2817
    %v2819 = vtanh.pop %v2805
    %v2820 = vxor.u32 %v2806, 2147483648
    %v2821 = vmul.f32 %v2820, 1.442695
    %v2822 = vpow.pop %v2821
    %v2823 = vadd.f32 %v2822, 1.0
    %v2824 = vrcp.pop %v2823
    %v2825 = vmul.f32 1.0, %v2824
    %v2827 = vrot.slane %v2575, 6
    %v2829 = vmul.f32 %v2818, %v2827
    %v2830 = vmul.f32 %v2812, %v2819
    %v2831 = vadd.f32 %v2829, %v2830
    %v2832 = vtanh.pop %v2831
    %v2833 = vmul.f32 %v2825, %v2832
    %v2834 = vpack.c.bf16 %v2833, %v2833
    %v2835 = vpack.c.bf16 %v2693, %v2693
    %2836 = vmatprep.subr.bf16.mxu0 %v1657
    %2837 = vmatpush1.bf16.msra.mxu0 %v1656
    %2838 = vmatprep.subr.bf16.mxu0 %v1661
    %2839 = vmatpush1.bf16.msra.mxu0 %v1660
    %2840 = vmatprep.subr.bf16.mxu0 %v1665
    %2841 = vmatpush1.bf16.msra.mxu0 %v1664
    %2842 = vmatprep.subr.bf16.mxu0 %v1669
    %2843 = vmatpush1.bf16.msra.mxu0 %v1668
    %2844 = vmatprep.subr.bf16.mxu0 %v1673
    %2845 = vmatpush1.bf16.msra.mxu0 %v1672
    %2846 = vmatprep.subr.bf16.mxu0 %v1677
    %2847 = vmatpush1.bf16.msra.mxu0 %v1676
    %2848 = vmatprep.subr.bf16.mxu0 %v1681
    %2849 = vmatpush1.bf16.msra.mxu0 %v1680
    %2850 = vmatprep.subr.bf16.mxu0 %v1685
    %2851 = vmatpush1.bf16.msra.mxu0 %v1684
    %2852 = vmatprep.subr.bf16.mxu0 %v1689
    %2853 = vmatpush1.bf16.msra.mxu0 %v1688
    %2854 = vmatprep.subr.bf16.mxu0 %v1693
    %2855 = vmatpush1.bf16.msra.mxu0 %v1692
    %2856 = vmatprep.subr.bf16.mxu0 %v1697
    %2857 = vmatpush1.bf16.msra.mxu0 %v1696
    %2858 = vmatprep.subr.bf16.mxu0 %v1701
    %2859 = vmatpush1.bf16.msra.mxu0 %v1700
    %2860 = vmatprep.subr.bf16.mxu0 %v1705
    %2861 = vmatpush1.bf16.msra.mxu0 %v1704
    %2862 = vmatprep.subr.bf16.mxu0 %v1709
    %2863 = vmatpush1.bf16.msra.mxu0 %v1708
    %2864 = vmatprep.subr.bf16.mxu0 %v1713
    %2865 = vmatpush1.bf16.msra.mxu0 %v1712
    %2866 = vmatprep.subr.bf16.mxu0 %v1717
    %2867 = vmatpush1.bf16.msra.mxu0 %v1716
    %2868 = vmatprep.mubr.bf16.mxu0 %v2835
    %2869 = vmatmul.mubr.bf16.gmra.mrb[0].mxu0 %v2834
    %v2870 = vpop.f32.mrb[0].mxu0
    %v2871 = vadd.f32 %v1447, %v2870
    %v2872 = vpop.f32.mrb[0].mxu0
    %v2873 = vadd.f32 %v1451, %v2872
    %v2874 = vpop.f32.mrb[0].mxu0
    %v2875 = vpop.f32.mrb[0].mxu0
    %2876 = vdwg.mxu0
    %2877 = vmatprep.subr.bf16.mxu0 %v1659
    %2878 = vmatpush1.bf16.msra.mxu0 %v1658
    %2879 = vmatprep.subr.bf16.mxu0 %v1663
    %2880 = vmatpush1.bf16.msra.mxu0 %v1662
    %2881 = vmatprep.subr.bf16.mxu0 %v1667
    %2882 = vmatpush1.bf16.msra.mxu0 %v1666
    %2883 = vmatprep.subr.bf16.mxu0 %v1671
    %2884 = vmatpush1.bf16.msra.mxu0 %v1670
    %2885 = vmatprep.subr.bf16.mxu0 %v1675
    %2886 = vmatpush1.bf16.msra.mxu0 %v1674
    %2887 = vmatprep.subr.bf16.mxu0 %v1679
    %2888 = vmatpush1.bf16.msra.mxu0 %v1678
    %2889 = vmatprep.subr.bf16.mxu0 %v1683
    %2890 = vmatpush1.bf16.msra.mxu0 %v1682
    %2891 = vmatprep.subr.bf16.mxu0 %v1687
    %2892 = vmatpush1.bf16.msra.mxu0 %v1686
    %2893 = vmatprep.subr.bf16.mxu0 %v1691
    %2894 = vmatpush1.bf16.msra.mxu0 %v1690
    %2895 = vmatprep.subr.bf16.mxu0 %v1695
    %2896 = vmatpush1.bf16.msra.mxu0 %v1694
    %2897 = vmatprep.subr.bf16.mxu0 %v1699
    %2898 = vmatpush1.bf16.msra.mxu0 %v1698
    %2899 = vmatprep.subr.bf16.mxu0 %v1703
    %2900 = vmatpush1.bf16.msra.mxu0 %v1702
    %2901 = vmatprep.subr.bf16.mxu0 %v1707
    %2902 = vmatpush1.bf16.msra.mxu0 %v1706
    %2903 = vmatprep.subr.bf16.mxu0 %v1711
    %2904 = vmatpush1.bf16.msra.mxu0 %v1710
    %2905 = vmatprep.subr.bf16.mxu0 %v1715
    %2906 = vmatpush1.bf16.msra.mxu0 %v1714
    %2907 = vmatprep.subr.bf16.mxu0 %v1719
    %2908 = vmatpush1.bf16.msra.mxu0 %v1718
    %2909 = vmatprep.mubr.bf16.mxu0 %v2835
    %2910 = vmatmul.mubr.bf16.gmra.mrb[0].mxu0 %v2834
    %v2911 = vpop.f32.mrb[0].mxu0
    %v2912 = vadd.f32 %v1455, %v2911
    %v2913 = vpop.f32.mrb[0].mxu0
    %v2914 = vadd.f32 %v1459, %v2913
    %v2915 = vpop.f32.mrb[0].mxu0
    %v2916 = vpop.f32.mrb[0].mxu0
    %2917 = vdwg.mxu0
    %v2918 = vxor.u32 %v2871, 2147483648
    %v2919 = vmul.f32 %v2918, 1.442695
    %v2920 = vpow.pop %v2919
    %v2921 = vadd.f32 %v2920, 1.0
    %v2922 = vrcp.pop %v2921
    %v2923 = vmul.f32 1.0, %v2922
    %v2924 = vxor.u32 %v2873, 2147483648
    %v2925 = vmul.f32 %v2924, 1.442695
    %v2926 = vpow.pop %v2925
    %v2927 = vadd.f32 %v2926, 1.0
    %v2928 = vrcp.pop %v2927
    %v2929 = vmul.f32 1.0, %v2928
    %v2930 = vtanh.pop %v2912
    %v2931 = vxor.u32 %v2914, 2147483648
    %v2932 = vmul.f32 %v2931, 1.442695
    %v2933 = vpow.pop %v2932
    %v2934 = vadd.f32 %v2933, 1.0
    %v2935 = vrcp.pop %v2934
    %v2936 = vmul.f32 1.0, %v2935
    %v2937 = vmul.f32 %v2929, %v2691
    %v2938 = vmul.f32 %v2923, %v2930
    %v2939 = vadd.f32 %v2937, %v2938
    %v2940 = vtanh.pop %v2939
    %v2941 = vmul.f32 %v2936, %v2940
    %v2944 = vunpack.c.l.s4 1966171168
    %v2945 = vunpack.c.0.s8 %v2944
    %v2946 = vlaneseq
    %v2947 = vshrl.u32 %v2946, 7
    %v2948 = vsub.s32 %v2945, %v2947
    %v2949 = vrot.slane %v2941, %v2948
    %v2950 = vcombine.high %v2949, %v2949
    %v2952 = vunpack.c.l.s4 1966171168
    %v2953 = vunpack.c.0.s8 %v2952
    %v2954 = vlaneseq
    %v2955 = vshrl.u32 %v2954, 7
    %v2956 = vsub.s32 %v2953, %v2955
    %v2957 = vrot.slane %v2949, %v2956
    %v2959 = vunpack.c.l.s4 1966171168
    %v2960 = vunpack.c.0.s8 %v2959
    %v2961 = vlaneseq
    %v2962 = vshrl.u32 %v2961, 7
    %v2963 = vsub.s32 %v2960, %v2962
    %v2964 = vrot.slane %v2950, %v2963
    %2967 = vst [vmem:[#allocation16 + $0x4] sm:$0x1] %v2957
    %2968 = vst [vmem:[#allocation16 + $0xc] sm:$0x1] %v2964
    %2969 = vmatprep.subr.bf16.mxu0 %v1268
    %2970 = vmatpush1.bf16.msra.mxu0 %v1267
    %2971 = vmatprep.subr.bf16.mxu0 %v1272
    %2972 = vmatpush1.bf16.msra.mxu0 %v1271
    %2973 = vmatprep.subr.bf16.mxu0 %v1276
    %2974 = vmatpush1.bf16.msra.mxu0 %v1275
    %2975 = vmatprep.subr.bf16.mxu0 %v1280
    %2976 = vmatpush1.bf16.msra.mxu0 %v1279
    %2977 = vmatprep.subr.bf16.mxu0 %v1284
    %2978 = vmatpush1.bf16.msra.mxu0 %v1283
    %2979 = vmatprep.subr.bf16.mxu0 %v1288
    %2980 = vmatpush1.bf16.msra.mxu0 %v1287
    %2981 = vmatprep.subr.bf16.mxu0 %v1292
    %2982 = vmatpush1.bf16.msra.mxu0 %v1291
    %2983 = vmatprep.subr.bf16.mxu0 %v1296
    %2984 = vmatpush1.bf16.msra.mxu0 %v1295
    %2985 = vmatprep.subr.bf16.mxu0 0
    %2986 = vmatpush1.bf16.msra.mxu0 0
    %2987 = vmatprep.subr.bf16.mxu0 0
    %2988 = vmatpush1.bf16.msra.mxu0 0
    %2989 = vmatprep.subr.bf16.mxu0 0
    %2990 = vmatpush1.bf16.msra.mxu0 0
    %2991 = vmatprep.subr.bf16.mxu0 0
    %2992 = vmatpush1.bf16.msra.mxu0 0
    %2993 = vmatprep.subr.bf16.mxu0 0
    %2994 = vmatpush1.bf16.msra.mxu0 0
    %2995 = vmatprep.subr.bf16.mxu0 0
    %2996 = vmatpush1.bf16.msra.mxu0 0
    %2997 = vmatprep.subr.bf16.mxu0 0
    %2998 = vmatpush1.bf16.msra.mxu0 0
    %2999 = vmatprep.subr.bf16.mxu0 0
    %3000 = vmatpush1.bf16.msra.mxu0 0
    %3001 = vmatprep.mubr.bf16.mxu0 0
    %3002 = vmatmul.mubr.bf16.gmra.mrb[0].mxu0 %v2834
    %v3003 = vpop.f32.mrb[0].mxu0
    %v3004 = vadd.f32 0.0, %v3003
    %v3005 = vpop.f32.mrb[0].mxu0
    %v3006 = vadd.f32 0.0, %v3005
    %v3007 = vpop.f32.mrb[0].mxu0
    %v3008 = vpop.f32.mrb[0].mxu0
    %3009 = vdwg.mxu0
    %3010 = vmatprep.subr.bf16.mxu0 %v1270
    %3011 = vmatpush1.bf16.msra.mxu0 %v1269
    %3012 = vmatprep.subr.bf16.mxu0 %v1274
    %3013 = vmatpush1.bf16.msra.mxu0 %v1273
    %3014 = vmatprep.subr.bf16.mxu0 %v1278
    %3015 = vmatpush1.bf16.msra.mxu0 %v1277
    %3016 = vmatprep.subr.bf16.mxu0 %v1282
    %3017 = vmatpush1.bf16.msra.mxu0 %v1281
    %3018 = vmatprep.subr.bf16.mxu0 %v1286
    %3019 = vmatpush1.bf16.msra.mxu0 %v1285
    %3020 = vmatprep.subr.bf16.mxu0 %v1290
    %3021 = vmatpush1.bf16.msra.mxu0 %v1289
    %3022 = vmatprep.subr.bf16.mxu0 %v1294
    %3023 = vmatpush1.bf16.msra.mxu0 %v1293
    %3024 = vmatprep.subr.bf16.mxu0 %v1298
    %3025 = vmatpush1.bf16.msra.mxu0 %v1297
    %3026 = vmatprep.subr.bf16.mxu0 0
    %3027 = vmatpush1.bf16.msra.mxu0 0
    %3028 = vmatprep.subr.bf16.mxu0 0
    %3029 = vmatpush1.bf16.msra.mxu0 0
    %3030 = vmatprep.subr.bf16.mxu0 0
    %3031 = vmatpush1.bf16.msra.mxu0 0
    %3032 = vmatprep.subr.bf16.mxu0 0
    %3033 = vmatpush1.bf16.msra.mxu0 0
    %3034 = vmatprep.subr.bf16.mxu0 0
    %3035 = vmatpush1.bf16.msra.mxu0 0
    %3036 = vmatprep.subr.bf16.mxu0 0
    %3037 = vmatpush1.bf16.msra.mxu0 0
    %3038 = vmatprep.subr.bf16.mxu0 0
    %3039 = vmatpush1.bf16.msra.mxu0 0
    %3040 = vmatprep.subr.bf16.mxu0 0
    %3041 = vmatpush1.bf16.msra.mxu0 0
    %3042 = vmatprep.mubr.bf16.mxu0 0
    %3043 = vmatmul.mubr.bf16.gmra.mrb[0].mxu0 %v2834
    %v3044 = vpop.f32.mrb[0].mxu0
    %v3045 = vadd.f32 0.0, %v3044
    %v3046 = vpop.f32.mrb[0].mxu0
    %v3047 = vadd.f32 0.0, %v3046
    %v3048 = vpop.f32.mrb[0].mxu0
    %v3049 = vpop.f32.mrb[0].mxu0
    %3050 = vdwg.mxu0
    %v3055 = vrot.slane %v3004, 6
    %v3056 = vrot.slane %v3006, 6
    %v3057 = vrot.slane %v3045, 6
    %v3058 = vrot.slane %v3047, 6
    %v3063 = vadd.f32 %v1027, %v3055
    %v3064 = vadd.f32 %v1029, %v3056
    %v3065 = vadd.f32 %v1070, %v3057
    %v3066 = vadd.f32 %v1072, %v3058
    %v3067 = vxor.u32 %v3063, 2147483648
    %v3068 = vmul.f32 %v3067, 1.442695
    %v3069 = vpow.pop %v3068
    %v3070 = vadd.f32 %v3069, 1.0
    %v3071 = vrcp.pop %v3070
    %v3072 = vmul.f32 1.0, %v3071
    %v3073 = vxor.u32 %v3064, 2147483648
    %v3074 = vmul.f32 %v3073, 1.442695
    %v3075 = vpow.pop %v3074
    %v3076 = vadd.f32 %v3075, 1.0
    %v3077 = vrcp.pop %v3076
    %v3078 = vmul.f32 1.0, %v3077
    %v3079 = vtanh.pop %v3065
    %v3080 = vxor.u32 %v3066, 2147483648
    %v3081 = vmul.f32 %v3080, 1.442695
    %v3082 = vpow.pop %v3081
    %v3083 = vadd.f32 %v3082, 1.0
    %v3084 = vrcp.pop %v3083
    %v3085 = vmul.f32 1.0, %v3084
    %v3087 = vrot.slane %v2831, 6
    %v3089 = vmul.f32 %v3078, %v3087
    %v3090 = vmul.f32 %v3072, %v3079
    %v3091 = vadd.f32 %v3089, %v3090
    %v3092 = vtanh.pop %v3091
    %v3093 = vmul.f32 %v3085, %v3092
    %v3094 = vrot.slane %v2941, 6
    %v3096 = vpack.c.bf16 %v3093, %v3093
    %v3097 = vpack.c.bf16 %v3094, %v3094
    %v3100 = vrot.slane %v3096, 1
    %v3101 = vrot.slane %v3097, 1
    %3104 = vmatprep.subr.bf16.mxu0 %v1657
    %3105 = vmatpush1.bf16.msra.mxu0 %v1656
    %3106 = vmatprep.subr.bf16.mxu0 %v1661
    %3107 = vmatpush1.bf16.msra.mxu0 %v1660
    %3108 = vmatprep.subr.bf16.mxu0 %v1665
    %3109 = vmatpush1.bf16.msra.mxu0 %v1664
    %3110 = vmatprep.subr.bf16.mxu0 %v1669
    %3111 = vmatpush1.bf16.msra.mxu0 %v1668
    %3112 = vmatprep.subr.bf16.mxu0 %v1673
    %3113 = vmatpush1.bf16.msra.mxu0 %v1672
    %3114 = vmatprep.subr.bf16.mxu0 %v1677
    %3115 = vmatpush1.bf16.msra.mxu0 %v1676
    %3116 = vmatprep.subr.bf16.mxu0 %v1681
    %3117 = vmatpush1.bf16.msra.mxu0 %v1680
    %3118 = vmatprep.subr.bf16.mxu0 %v1685
    %3119 = vmatpush1.bf16.msra.mxu0 %v1684
    %3120 = vmatprep.subr.bf16.mxu0 %v1689
    %3121 = vmatpush1.bf16.msra.mxu0 %v1688
    %3122 = vmatprep.subr.bf16.mxu0 %v1693
    %3123 = vmatpush1.bf16.msra.mxu0 %v1692
    %3124 = vmatprep.subr.bf16.mxu0 %v1697
    %3125 = vmatpush1.bf16.msra.mxu0 %v1696
    %3126 = vmatprep.subr.bf16.mxu0 %v1701
    %3127 = vmatpush1.bf16.msra.mxu0 %v1700
    %3128 = vmatprep.subr.bf16.mxu0 %v1705
    %3129 = vmatpush1.bf16.msra.mxu0 %v1704
    %3130 = vmatprep.subr.bf16.mxu0 %v1709
    %3131 = vmatpush1.bf16.msra.mxu0 %v1708
    %3132 = vmatprep.subr.bf16.mxu0 %v1713
    %3133 = vmatpush1.bf16.msra.mxu0 %v1712
    %3134 = vmatprep.subr.bf16.mxu0 %v1717
    %3135 = vmatpush1.bf16.msra.mxu0 %v1716
    %3136 = vmatprep.mubr.bf16.mxu0 %v3101
    %3137 = vmatmul.mubr.bf16.gmra.mrb[0].mxu0 %v3100
    %v3138 = vpop.f32.mrb[0].mxu0
    %v3139 = vadd.f32 %v1447, %v3138
    %v3140 = vpop.f32.mrb[0].mxu0
    %v3141 = vadd.f32 %v1451, %v3140
    %v3142 = vpop.f32.mrb[0].mxu0
    %v3143 = vpop.f32.mrb[0].mxu0
    %3144 = vdwg.mxu0
    %3145 = vmatprep.subr.bf16.mxu0 %v1659
    %3146 = vmatpush1.bf16.msra.mxu0 %v1658
    %3147 = vmatprep.subr.bf16.mxu0 %v1663
    %3148 = vmatpush1.bf16.msra.mxu0 %v1662
    %3149 = vmatprep.subr.bf16.mxu0 %v1667
    %3150 = vmatpush1.bf16.msra.mxu0 %v1666
    %3151 = vmatprep.subr.bf16.mxu0 %v1671
    %3152 = vmatpush1.bf16.msra.mxu0 %v1670
    %3153 = vmatprep.subr.bf16.mxu0 %v1675
    %3154 = vmatpush1.bf16.msra.mxu0 %v1674
    %3155 = vmatprep.subr.bf16.mxu0 %v1679
    %3156 = vmatpush1.bf16.msra.mxu0 %v1678
    %3157 = vmatprep.subr.bf16.mxu0 %v1683
    %3158 = vmatpush1.bf16.msra.mxu0 %v1682
    %3159 = vmatprep.subr.bf16.mxu0 %v1687
    %3160 = vmatpush1.bf16.msra.mxu0 %v1686
    %3161 = vmatprep.subr.bf16.mxu0 %v1691
    %3162 = vmatpush1.bf16.msra.mxu0 %v1690
    %3163 = vmatprep.subr.bf16.mxu0 %v1695
    %3164 = vmatpush1.bf16.msra.mxu0 %v1694
    %3165 = vmatprep.subr.bf16.mxu0 %v1699
    %3166 = vmatpush1.bf16.msra.mxu0 %v1698
    %3167 = vmatprep.subr.bf16.mxu0 %v1703
    %3168 = vmatpush1.bf16.msra.mxu0 %v1702
    %3169 = vmatprep.subr.bf16.mxu0 %v1707
    %3170 = vmatpush1.bf16.msra.mxu0 %v1706
    %3171 = vmatprep.subr.bf16.mxu0 %v1711
    %3172 = vmatpush1.bf16.msra.mxu0 %v1710
    %3173 = vmatprep.subr.bf16.mxu0 %v1715
    %3174 = vmatpush1.bf16.msra.mxu0 %v1714
    %3175 = vmatprep.subr.bf16.mxu0 %v1719
    %3176 = vmatpush1.bf16.msra.mxu0 %v1718
    %3177 = vmatprep.mubr.bf16.mxu0 %v3101
    %3178 = vmatmul.mubr.bf16.gmra.mrb[0].mxu0 %v3100
    %v3179 = vpop.f32.mrb[0].mxu0
    %v3180 = vadd.f32 %v1455, %v3179
    %v3181 = vpop.f32.mrb[0].mxu0
    %v3182 = vadd.f32 %v1459, %v3181
    %v3183 = vpop.f32.mrb[0].mxu0
    %v3184 = vpop.f32.mrb[0].mxu0
    %3185 = vdwg.mxu0
    %v3186 = vxor.u32 %v3139, 2147483648
    %v3187 = vmul.f32 %v3186, 1.442695
    %v3188 = vpow.pop %v3187
    %v3189 = vadd.f32 %v3188, 1.0
    %v3190 = vrcp.pop %v3189
    %v3191 = vmul.f32 1.0, %v3190
    %v3192 = vxor.u32 %v3141, 2147483648
    %v3193 = vmul.f32 %v3192, 1.442695
    %v3194 = vpow.pop %v3193
    %v3195 = vadd.f32 %v3194, 1.0
    %v3196 = vrcp.pop %v3195
    %v3197 = vmul.f32 1.0, %v3196
    %v3198 = vtanh.pop %v3180
    %v3199 = vxor.u32 %v3182, 2147483648
    %v3200 = vmul.f32 %v3199, 1.442695
    %v3201 = vpow.pop %v3200
    %v3202 = vadd.f32 %v3201, 1.0
    %v3203 = vrcp.pop %v3202
    %v3204 = vmul.f32 1.0, %v3203
    %v3205 = vmul.f32 %v3197, %v2939
    %v3206 = vmul.f32 %v3191, %v3198
    %v3207 = vadd.f32 %v3205, %v3206
    %v3208 = vtanh.pop %v3207
    %v3209 = vmul.f32 %v3204, %v3208
    %v3212 = vunpack.c.l.s4 1966171168
    %v3213 = vunpack.c.0.s8 %v3212
    %v3214 = vlaneseq
    %v3215 = vshrl.u32 %v3214, 7
    %v3216 = vsub.s32 %v3213, %v3215
    %v3217 = vrot.slane %v3209, %v3216
    %v3218 = vcombine.high %v3217, %v3217
    %v3220 = vunpack.c.l.s4 1966171168
    %v3221 = vunpack.c.0.s8 %v3220
    %v3222 = vlaneseq
    %v3223 = vshrl.u32 %v3222, 7
    %v3224 = vsub.s32 %v3221, %v3223
    %v3225 = vrot.slane %v3217, %v3224
    %v3227 = vunpack.c.l.s4 1966171168
    %v3228 = vunpack.c.0.s8 %v3227
    %v3229 = vlaneseq
    %v3230 = vshrl.u32 %v3229, 7
    %v3231 = vsub.s32 %v3228, %v3230
    %v3232 = vrot.slane %v3218, %v3231
    %3235 = vst [vmem:[#allocation16 + $0x5] sm:$0x1] %v3225
    %3236 = vst [vmem:[#allocation16 + $0xd] sm:$0x1] %v3232
    %3237 = vmatprep.subr.bf16.mxu0 %v1268
    %3238 = vmatpush1.bf16.msra.mxu0 %v1267
    %3239 = vmatprep.subr.bf16.mxu0 %v1272
    %3240 = vmatpush1.bf16.msra.mxu0 %v1271
    %3241 = vmatprep.subr.bf16.mxu0 %v1276
    %3242 = vmatpush1.bf16.msra.mxu0 %v1275
    %3243 = vmatprep.subr.bf16.mxu0 %v1280
    %3244 = vmatpush1.bf16.msra.mxu0 %v1279
    %3245 = vmatprep.subr.bf16.mxu0 %v1284
    %3246 = vmatpush1.bf16.msra.mxu0 %v1283
    %3247 = vmatprep.subr.bf16.mxu0 %v1288
    %3248 = vmatpush1.bf16.msra.mxu0 %v1287
    %3249 = vmatprep.subr.bf16.mxu0 %v1292
    %3250 = vmatpush1.bf16.msra.mxu0 %v1291
    %3251 = vmatprep.subr.bf16.mxu0 %v1296
    %3252 = vmatpush1.bf16.msra.mxu0 %v1295
    %3253 = vmatprep.subr.bf16.mxu0 0
    %3254 = vmatpush1.bf16.msra.mxu0 0
    %3255 = vmatprep.subr.bf16.mxu0 0
    %3256 = vmatpush1.bf16.msra.mxu0 0
    %3257 = vmatprep.subr.bf16.mxu0 0
    %3258 = vmatpush1.bf16.msra.mxu0 0
    %3259 = vmatprep.subr.bf16.mxu0 0
    %3260 = vmatpush1.bf16.msra.mxu0 0
    %3261 = vmatprep.subr.bf16.mxu0 0
    %3262 = vmatpush1.bf16.msra.mxu0 0
    %3263 = vmatprep.subr.bf16.mxu0 0
    %3264 = vmatpush1.bf16.msra.mxu0 0
    %3265 = vmatprep.subr.bf16.mxu0 0
    %3266 = vmatpush1.bf16.msra.mxu0 0
    %3267 = vmatprep.subr.bf16.mxu0 0
    %3268 = vmatpush1.bf16.msra.mxu0 0
    %3269 = vmatprep.mubr.bf16.mxu0 0
    %3270 = vmatmul.mubr.bf16.gmra.mrb[0].mxu0 %v3100
    %v3271 = vpop.f32.mrb[0].mxu0
    %v3272 = vadd.f32 0.0, %v3271
    %v3273 = vpop.f32.mrb[0].mxu0
    %v3274 = vadd.f32 0.0, %v3273
    %v3275 = vpop.f32.mrb[0].mxu0
    %v3276 = vpop.f32.mrb[0].mxu0
    %3277 = vdwg.mxu0
    %3278 = vmatprep.subr.bf16.mxu0 %v1270
    %3279 = vmatpush1.bf16.msra.mxu0 %v1269
    %3280 = vmatprep.subr.bf16.mxu0 %v1274
    %3281 = vmatpush1.bf16.msra.mxu0 %v1273
    %3282 = vmatprep.subr.bf16.mxu0 %v1278
    %3283 = vmatpush1.bf16.msra.mxu0 %v1277
    %3284 = vmatprep.subr.bf16.mxu0 %v1282
    %3285 = vmatpush1.bf16.msra.mxu0 %v1281
    %3286 = vmatprep.subr.bf16.mxu0 %v1286
    %3287 = vmatpush1.bf16.msra.mxu0 %v1285
    %3288 = vmatprep.subr.bf16.mxu0 %v1290
    %3289 = vmatpush1.bf16.msra.mxu0 %v1289
    %3290 = vmatprep.subr.bf16.mxu0 %v1294
    %3291 = vmatpush1.bf16.msra.mxu0 %v1293
    %3292 = vmatprep.subr.bf16.mxu0 %v1298
    %3293 = vmatpush1.bf16.msra.mxu0 %v1297
    %3294 = vmatprep.subr.bf16.mxu0 0
    %3295 = vmatpush1.bf16.msra.mxu0 0
    %3296 = vmatprep.subr.bf16.mxu0 0
    %3297 = vmatpush1.bf16.msra.mxu0 0
    %3298 = vmatprep.subr.bf16.mxu0 0
    %3299 = vmatpush1.bf16.msra.mxu0 0
    %3300 = vmatprep.subr.bf16.mxu0 0
    %3301 = vmatpush1.bf16.msra.mxu0 0
    %3302 = vmatprep.subr.bf16.mxu0 0
    %3303 = vmatpush1.bf16.msra.mxu0 0
    %3304 = vmatprep.subr.bf16.mxu0 0
    %3305 = vmatpush1.bf16.msra.mxu0 0
    %3306 = vmatprep.subr.bf16.mxu0 0
    %3307 = vmatpush1.bf16.msra.mxu0 0
    %3308 = vmatprep.subr.bf16.mxu0 0
    %3309 = vmatpush1.bf16.msra.mxu0 0
    %3310 = vmatprep.mubr.bf16.mxu0 0
    %3311 = vmatmul.mubr.bf16.gmra.mrb[0].mxu0 %v3100
    %v3312 = vpop.f32.mrb[0].mxu0
    %v3313 = vadd.f32 0.0, %v3312
    %v3314 = vpop.f32.mrb[0].mxu0
    %v3315 = vadd.f32 0.0, %v3314
    %v3316 = vpop.f32.mrb[0].mxu0
    %v3317 = vpop.f32.mrb[0].mxu0
    %3318 = vdwg.mxu0
    %v3323 = vrot.slane %v3272, 4
    %v3324 = vrot.slane %v3274, 4
    %v3325 = vrot.slane %v3313, 4
    %v3326 = vrot.slane %v3315, 4
    %v3331 = vadd.f32 %v1027, %v3323
    %v3332 = vadd.f32 %v1029, %v3324
    %v3333 = vadd.f32 %v1070, %v3325
    %v3334 = vadd.f32 %v1072, %v3326
    %v3335 = vxor.u32 %v3331, 2147483648
    %v3336 = vmul.f32 %v3335, 1.442695
    %v3337 = vpow.pop %v3336
    %v3338 = vadd.f32 %v3337, 1.0
    %v3339 = vrcp.pop %v3338
    %v3340 = vmul.f32 1.0, %v3339
    %v3341 = vxor.u32 %v3332, 2147483648
    %v3342 = vmul.f32 %v3341, 1.442695
    %v3343 = vpow.pop %v3342
    %v3344 = vadd.f32 %v3343, 1.0
    %v3345 = vrcp.pop %v3344
    %v3346 = vmul.f32 1.0, %v3345
    %v3347 = vtanh.pop %v3333
    %v3348 = vxor.u32 %v3334, 2147483648
    %v3349 = vmul.f32 %v3348, 1.442695
    %v3350 = vpow.pop %v3349
    %v3351 = vadd.f32 %v3350, 1.0
    %v3352 = vrcp.pop %v3351
    %v3353 = vmul.f32 1.0, %v3352
    %v3355 = vrot.slane %v3091, 6
    %v3357 = vmul.f32 %v3346, %v3355
    %v3358 = vmul.f32 %v3340, %v3347
    %v3359 = vadd.f32 %v3357, %v3358
    %v3360 = vtanh.pop %v3359
    %v3361 = vmul.f32 %v3353, %v3360
    %v3362 = vrot.slane %v3209, 4
    %v3364 = vpack.c.bf16 %v3361, %v3361
    %v3365 = vpack.c.bf16 %v3362, %v3362
    %v3368 = vrot.slane %v3364, 2
    %v3369 = vrot.slane %v3365, 2
    %3372 = vmatprep.subr.bf16.mxu0 %v1657
    %3373 = vmatpush1.bf16.msra.mxu0 %v1656
    %3374 = vmatprep.subr.bf16.mxu0 %v1661
    %3375 = vmatpush1.bf16.msra.mxu0 %v1660
    %3376 = vmatprep.subr.bf16.mxu0 %v1665
    %3377 = vmatpush1.bf16.msra.mxu0 %v1664
    %3378 = vmatprep.subr.bf16.mxu0 %v1669
    %3379 = vmatpush1.bf16.msra.mxu0 %v1668
    %3380 = vmatprep.subr.bf16.mxu0 %v1673
    %3381 = vmatpush1.bf16.msra.mxu0 %v1672
    %3382 = vmatprep.subr.bf16.mxu0 %v1677
    %3383 = vmatpush1.bf16.msra.mxu0 %v1676
    %3384 = vmatprep.subr.bf16.mxu0 %v1681
    %3385 = vmatpush1.bf16.msra.mxu0 %v1680
    %3386 = vmatprep.subr.bf16.mxu0 %v1685
    %3387 = vmatpush1.bf16.msra.mxu0 %v1684
    %3388 = vmatprep.subr.bf16.mxu0 %v1689
    %3389 = vmatpush1.bf16.msra.mxu0 %v1688
    %3390 = vmatprep.subr.bf16.mxu0 %v1693
    %3391 = vmatpush1.bf16.msra.mxu0 %v1692
    %3392 = vmatprep.subr.bf16.mxu0 %v1697
    %3393 = vmatpush1.bf16.msra.mxu0 %v1696
    %3394 = vmatprep.subr.bf16.mxu0 %v1701
    %3395 = vmatpush1.bf16.msra.mxu0 %v1700
    %3396 = vmatprep.subr.bf16.mxu0 %v1705
    %3397 = vmatpush1.bf16.msra.mxu0 %v1704
    %3398 = vmatprep.subr.bf16.mxu0 %v1709
    %3399 = vmatpush1.bf16.msra.mxu0 %v1708
    %3400 = vmatprep.subr.bf16.mxu0 %v1713
    %3401 = vmatpush1.bf16.msra.mxu0 %v1712
    %3402 = vmatprep.subr.bf16.mxu0 %v1717
    %3403 = vmatpush1.bf16.msra.mxu0 %v1716
    %3404 = vmatprep.mubr.bf16.mxu0 %v3369
    %3405 = vmatmul.mubr.bf16.gmra.mrb[0].mxu0 %v3368
    %v3406 = vpop.f32.mrb[0].mxu0
    %v3407 = vadd.f32 %v1447, %v3406
    %v3408 = vpop.f32.mrb[0].mxu0
    %v3409 = vadd.f32 %v1451, %v3408
    %v3410 = vpop.f32.mrb[0].mxu0
    %v3411 = vpop.f32.mrb[0].mxu0
    %3412 = vdwg.mxu0
    %3413 = vmatprep.subr.bf16.mxu0 %v1659
    %3414 = vmatpush1.bf16.msra.mxu0 %v1658
    %3415 = vmatprep.subr.bf16.mxu0 %v1663
    %3416 = vmatpush1.bf16.msra.mxu0 %v1662
    %3417 = vmatprep.subr.bf16.mxu0 %v1667
    %3418 = vmatpush1.bf16.msra.mxu0 %v1666
    %3419 = vmatprep.subr.bf16.mxu0 %v1671
    %3420 = vmatpush1.bf16.msra.mxu0 %v1670
    %3421 = vmatprep.subr.bf16.mxu0 %v1675
    %3422 = vmatpush1.bf16.msra.mxu0 %v1674
    %3423 = vmatprep.subr.bf16.mxu0 %v1679
    %3424 = vmatpush1.bf16.msra.mxu0 %v1678
    %3425 = vmatprep.subr.bf16.mxu0 %v1683
    %3426 = vmatpush1.bf16.msra.mxu0 %v1682
    %3427 = vmatprep.subr.bf16.mxu0 %v1687
    %3428 = vmatpush1.bf16.msra.mxu0 %v1686
    %3429 = vmatprep.subr.bf16.mxu0 %v1691
    %3430 = vmatpush1.bf16.msra.mxu0 %v1690
    %3431 = vmatprep.subr.bf16.mxu0 %v1695
    %3432 = vmatpush1.bf16.msra.mxu0 %v1694
    %3433 = vmatprep.subr.bf16.mxu0 %v1699
    %3434 = vmatpush1.bf16.msra.mxu0 %v1698
    %3435 = vmatprep.subr.bf16.mxu0 %v1703
    %3436 = vmatpush1.bf16.msra.mxu0 %v1702
    %3437 = vmatprep.subr.bf16.mxu0 %v1707
    %3438 = vmatpush1.bf16.msra.mxu0 %v1706
    %3439 = vmatprep.subr.bf16.mxu0 %v1711
    %3440 = vmatpush1.bf16.msra.mxu0 %v1710
    %3441 = vmatprep.subr.bf16.mxu0 %v1715
    %3442 = vmatpush1.bf16.msra.mxu0 %v1714
    %3443 = vmatprep.subr.bf16.mxu0 %v1719
    %3444 = vmatpush1.bf16.msra.mxu0 %v1718
    %3445 = vmatprep.mubr.bf16.mxu0 %v3369
    %3446 = vmatmul.mubr.bf16.gmra.mrb[0].mxu0 %v3368
    %v3447 = vpop.f32.mrb[0].mxu0
    %v3448 = vadd.f32 %v1455, %v3447
    %v3449 = vpop.f32.mrb[0].mxu0
    %v3450 = vadd.f32 %v1459, %v3449
    %v3451 = vpop.f32.mrb[0].mxu0
    %v3452 = vpop.f32.mrb[0].mxu0
    %3453 = vdwg.mxu0
    %v3454 = vxor.u32 %v3407, 2147483648
    %v3455 = vmul.f32 %v3454, 1.442695
    %v3456 = vpow.pop %v3455
    %v3457 = vadd.f32 %v3456, 1.0
    %v3458 = vrcp.pop %v3457
    %v3459 = vmul.f32 1.0, %v3458
    %v3460 = vxor.u32 %v3409, 2147483648
    %v3461 = vmul.f32 %v3460, 1.442695
    %v3462 = vpow.pop %v3461
    %v3463 = vadd.f32 %v3462, 1.0
    %v3464 = vrcp.pop %v3463
    %v3465 = vmul.f32 1.0, %v3464
    %v3466 = vtanh.pop %v3448
    %v3467 = vxor.u32 %v3450, 2147483648
    %v3468 = vmul.f32 %v3467, 1.442695
    %v3469 = vpow.pop %v3468
    %v3470 = vadd.f32 %v3469, 1.0
    %v3471 = vrcp.pop %v3470
    %v3472 = vmul.f32 1.0, %v3471
    %v3473 = vmul.f32 %v3465, %v3207
    %v3474 = vmul.f32 %v3459, %v3466
    %v3475 = vadd.f32 %v3473, %v3474
    %v3476 = vtanh.pop %v3475
    %v3477 = vmul.f32 %v3472, %v3476
    %v3480 = vunpack.c.l.s4 1966171168
    %v3481 = vunpack.c.0.s8 %v3480
    %v3482 = vlaneseq
    %v3483 = vshrl.u32 %v3482, 7
    %v3484 = vsub.s32 %v3481, %v3483
    %v3485 = vrot.slane %v3477, %v3484
    %v3486 = vcombine.high %v3485, %v3485
    %v3488 = vunpack.c.l.s4 1966171168
    %v3489 = vunpack.c.0.s8 %v3488
    %v3490 = vlaneseq
    %v3491 = vshrl.u32 %v3490, 7
    %v3492 = vsub.s32 %v3489, %v3491
    %v3493 = vrot.slane %v3485, %v3492
    %v3495 = vunpack.c.l.s4 1966171168
    %v3496 = vunpack.c.0.s8 %v3495
    %v3497 = vlaneseq
    %v3498 = vshrl.u32 %v3497, 7
    %v3499 = vsub.s32 %v3496, %v3498
    %v3500 = vrot.slane %v3486, %v3499
    %3503 = vst [vmem:[#allocation16 + $0x6] sm:$0x1] %v3493
    %3504 = vst [vmem:[#allocation16 + $0xe] sm:$0x1] %v3500
    %3505 = vmatprep.subr.bf16.mxu0 %v1268
    %3506 = vmatpush1.bf16.msra.mxu0 %v1267
    %3507 = vmatprep.subr.bf16.mxu0 %v1272
    %3508 = vmatpush1.bf16.msra.mxu0 %v1271
    %3509 = vmatprep.subr.bf16.mxu0 %v1276
    %3510 = vmatpush1.bf16.msra.mxu0 %v1275
    %3511 = vmatprep.subr.bf16.mxu0 %v1280
    %3512 = vmatpush1.bf16.msra.mxu0 %v1279
    %3513 = vmatprep.subr.bf16.mxu0 %v1284
    %3514 = vmatpush1.bf16.msra.mxu0 %v1283
    %3515 = vmatprep.subr.bf16.mxu0 %v1288
    %3516 = vmatpush1.bf16.msra.mxu0 %v1287
    %3517 = vmatprep.subr.bf16.mxu0 %v1292
    %3518 = vmatpush1.bf16.msra.mxu0 %v1291
    %3519 = vmatprep.subr.bf16.mxu0 %v1296
    %3520 = vmatpush1.bf16.msra.mxu0 %v1295
    %3521 = vmatprep.subr.bf16.mxu0 0
    %3522 = vmatpush1.bf16.msra.mxu0 0
    %3523 = vmatprep.subr.bf16.mxu0 0
    %3524 = vmatpush1.bf16.msra.mxu0 0
    %3525 = vmatprep.subr.bf16.mxu0 0
    %3526 = vmatpush1.bf16.msra.mxu0 0
    %3527 = vmatprep.subr.bf16.mxu0 0
    %3528 = vmatpush1.bf16.msra.mxu0 0
    %3529 = vmatprep.subr.bf16.mxu0 0
    %3530 = vmatpush1.bf16.msra.mxu0 0
    %3531 = vmatprep.subr.bf16.mxu0 0
    %3532 = vmatpush1.bf16.msra.mxu0 0
    %3533 = vmatprep.subr.bf16.mxu0 0
    %3534 = vmatpush1.bf16.msra.mxu0 0
    %3535 = vmatprep.subr.bf16.mxu0 0
    %3536 = vmatpush1.bf16.msra.mxu0 0
    %3537 = vmatprep.mubr.bf16.mxu0 0
    %3538 = vmatmul.mubr.bf16.gmra.mrb[0].mxu0 %v3368
    %v3539 = vpop.f32.mrb[0].mxu0
    %v3540 = vadd.f32 0.0, %v3539
    %v3541 = vpop.f32.mrb[0].mxu0
    %v3542 = vadd.f32 0.0, %v3541
    %v3543 = vpop.f32.mrb[0].mxu0
    %v3544 = vpop.f32.mrb[0].mxu0
    %3545 = vdwg.mxu0
    %3546 = vmatprep.subr.bf16.mxu0 %v1270
    %3547 = vmatpush1.bf16.msra.mxu0 %v1269
    %3548 = vmatprep.subr.bf16.mxu0 %v1274
    %3549 = vmatpush1.bf16.msra.mxu0 %v1273
    %3550 = vmatprep.subr.bf16.mxu0 %v1278
    %3551 = vmatpush1.bf16.msra.mxu0 %v1277
    %3552 = vmatprep.subr.bf16.mxu0 %v1282
    %3553 = vmatpush1.bf16.msra.mxu0 %v1281
    %3554 = vmatprep.subr.bf16.mxu0 %v1286
    %3555 = vmatpush1.bf16.msra.mxu0 %v1285
    %3556 = vmatprep.subr.bf16.mxu0 %v1290
    %3557 = vmatpush1.bf16.msra.mxu0 %v1289
    %3558 = vmatprep.subr.bf16.mxu0 %v1294
    %3559 = vmatpush1.bf16.msra.mxu0 %v1293
    %3560 = vmatprep.subr.bf16.mxu0 %v1298
    %3561 = vmatpush1.bf16.msra.mxu0 %v1297
    %3562 = vmatprep.subr.bf16.mxu0 0
    %3563 = vmatpush1.bf16.msra.mxu0 0
    %3564 = vmatprep.subr.bf16.mxu0 0
    %3565 = vmatpush1.bf16.msra.mxu0 0
    %3566 = vmatprep.subr.bf16.mxu0 0
    %3567 = vmatpush1.bf16.msra.mxu0 0
    %3568 = vmatprep.subr.bf16.mxu0 0
    %3569 = vmatpush1.bf16.msra.mxu0 0
    %3570 = vmatprep.subr.bf16.mxu0 0
    %3571 = vmatpush1.bf16.msra.mxu0 0
    %3572 = vmatprep.subr.bf16.mxu0 0
    %3573 = vmatpush1.bf16.msra.mxu0 0
    %3574 = vmatprep.subr.bf16.mxu0 0
    %3575 = vmatpush1.bf16.msra.mxu0 0
    %3576 = vmatprep.subr.bf16.mxu0 0
    %3577 = vmatpush1.bf16.msra.mxu0 0
    %3578 = vmatprep.mubr.bf16.mxu0 0
    %3579 = vmatmul.mubr.bf16.gmra.mrb[0].mxu0 %v3368
    %v3580 = vpop.f32.mrb[0].mxu0
    %v3581 = vadd.f32 0.0, %v3580
    %v3582 = vpop.f32.mrb[0].mxu0
    %v3583 = vadd.f32 0.0, %v3582
    %v3584 = vpop.f32.mrb[0].mxu0
    %v3585 = vpop.f32.mrb[0].mxu0
    %3586 = vdwg.mxu0
    %v3591 = vrot.slane %v3540, 2
    %v3592 = vrot.slane %v3542, 2
    %v3593 = vrot.slane %v3581, 2
    %v3594 = vrot.slane %v3583, 2
    %v3599 = vadd.f32 %v1027, %v3591
    %v3600 = vadd.f32 %v1029, %v3592
    %v3601 = vadd.f32 %v1070, %v3593
    %v3602 = vadd.f32 %v1072, %v3594
    %v3603 = vxor.u32 %v3599, 2147483648
    %v3604 = vmul.f32 %v3603, 1.442695
    %v3605 = vpow.pop %v3604
    %v3606 = vadd.f32 %v3605, 1.0
    %v3607 = vrcp.pop %v3606
    %v3608 = vmul.f32 1.0, %v3607
    %v3609 = vxor.u32 %v3600, 2147483648
    %v3610 = vmul.f32 %v3609, 1.442695
    %v3611 = vpow.pop %v3610
    %v3612 = vadd.f32 %v3611, 1.0
    %v3613 = vrcp.pop %v3612
    %v3614 = vmul.f32 1.0, %v3613
    %v3615 = vtanh.pop %v3601
    %v3616 = vxor.u32 %v3602, 2147483648
    %v3617 = vmul.f32 %v3616, 1.442695
    %v3618 = vpow.pop %v3617
    %v3619 = vadd.f32 %v3618, 1.0
    %v3620 = vrcp.pop %v3619
    %v3621 = vmul.f32 1.0, %v3620
    %v3623 = vrot.slane %v3359, 6
    %v3625 = vmul.f32 %v3614, %v3623
    %v3626 = vmul.f32 %v3608, %v3615
    %v3627 = vadd.f32 %v3625, %v3626
    %v3628 = vtanh.pop %v3627
    %v3629 = vmul.f32 %v3621, %v3628
    %v3630 = vrot.slane %v3477, 2
    %v3632 = vpack.c.bf16 %v3629, %v3629
    %v3633 = vpack.c.bf16 %v3630, %v3630
    %v3636 = vrot.slane %v3632, 3
    %v3637 = vrot.slane %v3633, 3
    %3640 = vmatprep.subr.bf16.mxu0 %v1657
    %3641 = vmatpush1.bf16.msra.mxu0 %v1656
    %3642 = vmatprep.subr.bf16.mxu0 %v1661
    %3643 = vmatpush1.bf16.msra.mxu0 %v1660
    %3644 = vmatprep.subr.bf16.mxu0 %v1665
    %3645 = vmatpush1.bf16.msra.mxu0 %v1664
    %3646 = vmatprep.subr.bf16.mxu0 %v1669
    %3647 = vmatpush1.bf16.msra.mxu0 %v1668
    %3648 = vmatprep.subr.bf16.mxu0 %v1673
    %3649 = vmatpush1.bf16.msra.mxu0 %v1672
    %3650 = vmatprep.subr.bf16.mxu0 %v1677
    %3651 = vmatpush1.bf16.msra.mxu0 %v1676
    %3652 = vmatprep.subr.bf16.mxu0 %v1681
    %3653 = vmatpush1.bf16.msra.mxu0 %v1680
    %3654 = vmatprep.subr.bf16.mxu0 %v1685
    %3655 = vmatpush1.bf16.msra.mxu0 %v1684
    %3656 = vmatprep.subr.bf16.mxu0 %v1689
    %3657 = vmatpush1.bf16.msra.mxu0 %v1688
    %3658 = vmatprep.subr.bf16.mxu0 %v1693
    %3659 = vmatpush1.bf16.msra.mxu0 %v1692
    %3660 = vmatprep.subr.bf16.mxu0 %v1697
    %3661 = vmatpush1.bf16.msra.mxu0 %v1696
    %3662 = vmatprep.subr.bf16.mxu0 %v1701
    %3663 = vmatpush1.bf16.msra.mxu0 %v1700
    %3664 = vmatprep.subr.bf16.mxu0 %v1705
    %3665 = vmatpush1.bf16.msra.mxu0 %v1704
    %3666 = vmatprep.subr.bf16.mxu0 %v1709
    %3667 = vmatpush1.bf16.msra.mxu0 %v1708
    %3668 = vmatprep.subr.bf16.mxu0 %v1713
    %3669 = vmatpush1.bf16.msra.mxu0 %v1712
    %3670 = vmatprep.subr.bf16.mxu0 %v1717
    %3671 = vmatpush1.bf16.msra.mxu0 %v1716
    %3672 = vmatprep.mubr.bf16.mxu0 %v3637
    %3673 = vmatmul.mubr.bf16.gmra.mrb[0].mxu0 %v3636
    %v3674 = vpop.f32.mrb[0].mxu0
    %v3675 = vadd.f32 %v1447, %v3674
    %v3676 = vpop.f32.mrb[0].mxu0
    %v3677 = vadd.f32 %v1451, %v3676
    %v3678 = vpop.f32.mrb[0].mxu0
    %v3679 = vpop.f32.mrb[0].mxu0
    %3680 = vdwg.mxu0
    %3681 = vmatprep.subr.bf16.mxu0 %v1659
    %3682 = vmatpush1.bf16.msra.mxu0 %v1658
    %3683 = vmatprep.subr.bf16.mxu0 %v1663
    %3684 = vmatpush1.bf16.msra.mxu0 %v1662
    %3685 = vmatprep.subr.bf16.mxu0 %v1667
    %3686 = vmatpush1.bf16.msra.mxu0 %v1666
    %3687 = vmatprep.subr.bf16.mxu0 %v1671
    %3688 = vmatpush1.bf16.msra.mxu0 %v1670
    %3689 = vmatprep.subr.bf16.mxu0 %v1675
    %3690 = vmatpush1.bf16.msra.mxu0 %v1674
    %3691 = vmatprep.subr.bf16.mxu0 %v1679
    %3692 = vmatpush1.bf16.msra.mxu0 %v1678
    %3693 = vmatprep.subr.bf16.mxu0 %v1683
    %3694 = vmatpush1.bf16.msra.mxu0 %v1682
    %3695 = vmatprep.subr.bf16.mxu0 %v1687
    %3696 = vmatpush1.bf16.msra.mxu0 %v1686
    %3697 = vmatprep.subr.bf16.mxu0 %v1691
    %3698 = vmatpush1.bf16.msra.mxu0 %v1690
    %3699 = vmatprep.subr.bf16.mxu0 %v1695
    %3700 = vmatpush1.bf16.msra.mxu0 %v1694
    %3701 = vmatprep.subr.bf16.mxu0 %v1699
    %3702 = vmatpush1.bf16.msra.mxu0 %v1698
    %3703 = vmatprep.subr.bf16.mxu0 %v1703
    %3704 = vmatpush1.bf16.msra.mxu0 %v1702
    %3705 = vmatprep.subr.bf16.mxu0 %v1707
    %3706 = vmatpush1.bf16.msra.mxu0 %v1706
    %3707 = vmatprep.subr.bf16.mxu0 %v1711
    %3708 = vmatpush1.bf16.msra.mxu0 %v1710
    %3709 = vmatprep.subr.bf16.mxu0 %v1715
    %3710 = vmatpush1.bf16.msra.mxu0 %v1714
    %3711 = vmatprep.subr.bf16.mxu0 %v1719
    %3712 = vmatpush1.bf16.msra.mxu0 %v1718
    %3713 = vmatprep.mubr.bf16.mxu0 %v3637
    %3714 = vmatmul.mubr.bf16.gmra.mrb[0].mxu0 %v3636
    %v3715 = vpop.f32.mrb[0].mxu0
    %v3716 = vadd.f32 %v1455, %v3715
    %v3717 = vpop.f32.mrb[0].mxu0
    %v3718 = vadd.f32 %v1459, %v3717
    %v3719 = vpop.f32.mrb[0].mxu0
    %v3720 = vpop.f32.mrb[0].mxu0
    %3721 = vdwg.mxu0
    %v3722 = vxor.u32 %v3675, 2147483648
    %v3723 = vmul.f32 %v3722, 1.442695
    %v3724 = vpow.pop %v3723
    %v3725 = vadd.f32 %v3724, 1.0
    %v3726 = vrcp.pop %v3725
    %v3727 = vmul.f32 1.0, %v3726
    %v3728 = vxor.u32 %v3677, 2147483648
    %v3729 = vmul.f32 %v3728, 1.442695
    %v3730 = vpow.pop %v3729
    %v3731 = vadd.f32 %v3730, 1.0
    %v3732 = vrcp.pop %v3731
    %v3733 = vmul.f32 1.0, %v3732
    %v3734 = vtanh.pop %v3716
    %v3735 = vxor.u32 %v3718, 2147483648
    %v3736 = vmul.f32 %v3735, 1.442695
    %v3737 = vpow.pop %v3736
    %v3738 = vadd.f32 %v3737, 1.0
    %v3739 = vrcp.pop %v3738
    %v3740 = vmul.f32 1.0, %v3739
    %v3741 = vmul.f32 %v3733, %v3475
    %v3742 = vmul.f32 %v3727, %v3734
    %v3743 = vadd.f32 %v3741, %v3742
    %v3744 = vtanh.pop %v3743
    %v3745 = vmul.f32 %v3740, %v3744
    %v3748 = vunpack.c.l.s4 1966171168
    %v3749 = vunpack.c.0.s8 %v3748
    %v3750 = vlaneseq
    %v3751 = vshrl.u32 %v3750, 7
    %v3752 = vsub.s32 %v3749, %v3751
    %v3753 = vrot.slane %v3745, %v3752
    %v3754 = vcombine.high %v3753, %v3753
    %v3756 = vunpack.c.l.s4 1966171168
    %v3757 = vunpack.c.0.s8 %v3756
    %v3758 = vlaneseq
    %v3759 = vshrl.u32 %v3758, 7
    %v3760 = vsub.s32 %v3757, %v3759
    %v3761 = vrot.slane %v3753, %v3760
    %v3763 = vunpack.c.l.s4 1966171168
    %v3764 = vunpack.c.0.s8 %v3763
    %v3765 = vlaneseq
    %v3766 = vshrl.u32 %v3765, 7
    %v3767 = vsub.s32 %v3764, %v3766
    %v3768 = vrot.slane %v3754, %v3767
    %3771 = vst [vmem:[#allocation16 + $0x7] sm:$0x1] %v3761
    %3772 = vst [vmem:[#allocation16 + $0xf] sm:$0x1] %v3768
    // Predicated region
    $region82: #{tpu_custom_call.1} parent=1 // pred_check
      _
    $region83: #{tpu_custom_call.1} parent=1 // pred_check_branch
      %3774 = sbr.rel (0) target = $region85
    $region84: #{tpu_custom_call.1} parent=1 // pred_region
      %s3776 = ssub.s32 256, 256
      %3777 = vsyncadd [#allocation4], %s3776
      %s3778 = sshll.u32 [#allocation16], 4
      %s3779 = int_to_ptr.vmem [resolvable:$true] %s3778
      %3784 = dma.vmem_to_hbm [thread:$0]  %s3779, 256, %s12, [#allocation4], 128, 128, 8
    $region85: #{tpu_custom_call.1} parent=1 // pred_fallthru
      _
    // Predicated region
    $region86: #{tpu_custom_call.1} parent=1 // pred_check
      _
    $region87: #{tpu_custom_call.1} parent=1 // pred_check_branch
      %3786 = sbr.rel (0) target = $region89
    $region88: #{tpu_custom_call.1} parent=1 // pred_region
      %3787 = dma.done [#allocation4], 256
    $region89: #{tpu_custom_call.1} parent=1 // pred_fallthru
      _
    %3788 = vsyncpa [#allocation3], 1
    %3789 = vsyncpa [#allocation6], 1
    %3790 = vsyncpa [#allocation9], 1
    %3791 = vsyncpa [#allocation12], 1
    %3792 = vsyncpa [#allocation15], 1
    %3793 = vsyncpa [#allocation4], 1

</llo_original>
